<compile_context>
chip_gen: v7x
topology: tpu7x:2x2x1
jax: 0.10.0
libtpu: 0.0.40
codegen_flags: <defaults>
</compile_context>

<pallas_src>
import functools

import jax
import jax.numpy as jnp
from jax.experimental import pallas as pl
from jax.experimental.pallas import tpu as pltpu


# ----------------------------------------------------------------------------
# In-kernel helpers (k_max, H, W, Wp are static Python ints -> fully unrolled).
# ----------------------------------------------------------------------------
def _gather_patches(flat, *, kmax, wp, lb):
    """im2col on a reflect-padded, row-flattened image.

    flat: (C, >= Hp*Wp + kmax - 1), row length Wp.  Row block for offset (dy, dx)
    is the static lane-window flat[:, dy*Wp+dx : dy*Wp+dx+LB].  Result is
    (kmax*kmax*C, LB) with contraction order (dy, dx, c) - c fastest.
    """
    blocks = []
    for dy in range(kmax):
        for dx in range(kmax):
            s = dy * wp + dx
            blocks.append(flat[:, s:s + lb])
    return jnp.concatenate(blocks, axis=0)


def _reflect_pad_flatten(h1b, *, h, w, wp, pmax):
    """Rebuild the reflect-padded, row-flattened activation for the second conv.

    h1b: (C2, LB) bf16 with LB = H*Wp; row y's VALID pixels live at lanes
    [y*Wp, y*Wp+W) (the remaining lanes are garbage and never read here).
    Returns (C2, (Hp+1)*Wp): H+2p reflect-padded rows of width Wp plus one junk
    row so every patch slice stays in bounds.  Pure static lane slices + concats
    (no in-kernel reshapes).
    """
    def padded_row(y):
        row = h1b[:, y * wp: y * wp + w]                              # (C2, W)
        left = [row[:, pmax - i: pmax - i + 1] for i in range(pmax)]  # cols p..1
        right = [row[:, w - 2 - i: w - 1 - i] for i in range(pmax)]   # cols W-2..W-1-p
        return jnp.concatenate(left + [row] + right, axis=1)          # (C2, Wp)

    rows = [padded_row(y) for y in range(h)]
    top = [rows[pmax - i] for i in range(pmax)]          # source rows p, p-1, ..., 1
    bottom = [rows[h - 2 - i] for i in range(pmax)]      # source rows H-2, ..., H-1-p
    junk = [rows[0]]                                     # values never used
    return jnp.concatenate(top + rows + bottom + junk, axis=1)


# ----------------------------------------------------------------------------
# Fused ConvMultiBlock kernel: every branch, both ConvLayers, one batch element.
# ----------------------------------------------------------------------------
def _conv_multi_block_kernel(x_ref, wa_ref, wb_ref, aff_ref, mask_ref, o_ref, *,
                             kmax, c2, h, w, wp, lb, instance_norm, relu,
                             matmul_dtype, eps, neg_slope, inv_count):
    pmax = kmax // 2
    mask = mask_ref[...]                                  # (1, LB) f32, 1 on valid cols
    aff = aff_ref[...]                                    # (C2, 4) IN / (C2, 2) bias

    def norm_act(acc, stage):
        # acc: (C2, LB) f32.  Masked one-pass stats over the H*W valid positions.
        if instance_norm:
            gamma = aff[:, 2 * stage: 2 * stage + 1]
            beta = aff[:, 2 * stage + 1: 2 * stage + 2]
            am = acc * mask
            mean = jnp.sum(am, axis=1, keepdims=True) * inv_count
            var = jnp.sum(am * acc, axis=1, keepdims=True) * inv_count - mean * mean
            var = jnp.maximum(var, 0.0)
            acc = (acc - mean) * jax.lax.rsqrt(var + eps)
            acc = acc * gamma + beta
        else:
            acc = acc + aff[:, stage: stage + 1]           # conv bias
        if relu:
            acc = jnp.where(acc >= 0, acc, neg_slope * acc)  # LeakyReLU(0.2)
        return acc

    # ---- stage A: all branches' conv_a as ONE matmul ------------------------
    x = x_ref[0]                                          # (Cin, (Hp+1)*Wp) bf16
    pa = _gather_patches(x, kmax=kmax, wp=wp, lb=lb)      # (kmax^2*Cin, LB) bf16
    acc_a = jax.lax.dot_general(wa_ref[...], pa, (((1,), (0,)), ((), ())),
                                preferred_element_type=jnp.float32)   # (C2, LB)
    h1 = norm_act(acc_a, 0)

    # ---- re-pad h1 (valid pixels only) for the second conv ------------------
    h1_flat = _reflect_pad_flatten(h1.astype(matmul_dtype),
                                   h=h, w=w, wp=wp, pmax=pmax)

    # ---- stage B: all branches' conv_b as ONE block-diagonal matmul ---------
    pb = _gather_patches(h1_flat, kmax=kmax, wp=wp, lb=lb)  # (kmax^2*C2, LB)
    acc_b = jax.lax.dot_general(wb_ref[...], pb, (((1,), (0,)), ((), ())),
                                preferred_element_type=jnp.float32)   # (C2, LB)
    out = norm_act(acc_b, 1)

    o_ref[0] = out.astype(o_ref.dtype)                    # lane-dense (C2, LB) store


# ----------------------------------------------------------------------------
# Host-side weight packing (zero-embedding into the k_max footprint).
# ----------------------------------------------------------------------------
def _pack_conv_a_weights(params, ks, kmax, cin, cout, dtype):
    c2 = len(ks) * cout
    packed = jnp.zeros((c2, kmax, kmax, cin), jnp.float32)
    for bi, k in enumerate(ks):
        wa = params[k][0][0]                               # (k, k, Cin, Cout) HWIO
        off = (kmax - k) // 2
        packed = packed.at[bi * cout:(bi + 1) * cout, off:off + k, off:off + k, :].set(
            jnp.transpose(wa, (3, 0, 1, 2)))
    return packed.reshape(c2, kmax * kmax * cin).astype(dtype)


def _pack_conv_b_weights(params, ks, kmax, cout, dtype):
    nb = len(ks)
    c2 = nb * cout
    packed = jnp.zeros((c2, kmax, kmax, c2), jnp.float32)
    for bi, k in enumerate(ks):
        wb = params[k][1][0]                               # (k, k, Cout, Cout)
        off = (kmax - k) // 2
        packed = packed.at[bi * cout:(bi + 1) * cout, off:off + k, off:off + k,
                           bi * cout:(bi + 1) * cout].set(jnp.transpose(wb, (3, 0, 1, 2)))
    return packed.reshape(c2, kmax * kmax * c2).astype(dtype)


# ----------------------------------------------------------------------------
# Wrapper: NCHW in / NCHW out, one pallas_call for the whole ConvMultiBlock.
# ----------------------------------------------------------------------------
def conv_multi_block(x_nchw, params, instance_norm, *,
                     matmul_dtype=jnp.bfloat16, relu=True):
    n, cin, h, w = x_nchw.shape
    ks = sorted(params.keys())                             # 3, 5, 7, 9 -> torch.cat order
    nb = len(ks)
    cout = params[ks[0]][0][0].shape[-1]
    c2 = nb * cout
    kmax = max(ks)
    pmax = kmax // 2
    assert h >= pmax + 1 and w >= pmax + 1, "reflection padding needs H, W >= k//2 + 1"
    hp, wp = h + 2 * pmax, w + 2 * pmax
    lb = h * wp                                            # flat columns computed per conv
    la = (hp + 1) * wp                                     # +1 junk row keeps slices in-bounds

    # Lane-dense, reflect-padded, row-flattened bf16 input (layout glue, done once).
    xp = jnp.pad(x_nchw, ((0, 0), (0, 0), (pmax, pmax), (pmax, pmax)), mode="reflect")
    xp = jnp.pad(xp, ((0, 0), (0, 0), (0, 1), (0, 0)))     # junk bottom row (never read
    x_flat = xp.reshape(n, cin, la).astype(matmul_dtype)   #  for valid output positions)

    # Packed weights: conv_a fused over branches, conv_b block-diagonal.
    wa_p = _pack_conv_a_weights(params, ks, kmax, cin, cout, matmul_dtype)  # (C2, kmax^2*Cin)
    wb_p = _pack_conv_b_weights(params, ks, kmax, cout, matmul_dtype)       # (C2, kmax^2*C2)

    # Single per-channel affine/bias table.  Bias is omitted under instance_norm
    # (exactly cancelled by the mean subtraction).
    if instance_norm:
        cols = [jnp.concatenate([params[k][0][2] for k in ks]),   # gamma_a
                jnp.concatenate([params[k][0][3] for k in ks]),   # beta_a
                jnp.concatenate([params[k][1][2] for k in ks]),   # gamma_b
                jnp.concatenate([params[k][1][3] for k in ks])]   # beta_b
    else:
        cols = [jnp.concatenate([params[k][0][1] for k in ks]),   # bias_a
                jnp.concatenate([params[k][1][1] for k in ks])]   # bias_b
    aff = jnp.stack(cols, axis=1).astype(jnp.float32)             # (C2, 4) or (C2, 2)

    # Valid-column mask over the LB flat positions (x coordinate < W).
    mask = jnp.broadcast_to((jnp.arange(wp) < w)[None, :], (h, wp))
    mask = mask.reshape(1, lb).astype(jnp.float32)

    kernel = functools.partial(
        _conv_multi_block_kernel,
        kmax=kmax, c2=c2, h=h, w=w, wp=wp, lb=lb,
        instance_norm=instance_norm, relu=relu, matmul_dtype=matmul_dtype,
        eps=1e-5, neg_slope=0.2, inv_count=1.0 / float(h * w))

    out_flat = pl.pallas_call(
        kernel,
        out_shape=jax.ShapeDtypeStruct((n, c2, lb), x_nchw.dtype),
        grid=(n,),
        in_specs=[
            pl.BlockSpec((1, cin, la), lambda i: (i, 0, 0)),
            pl.BlockSpec(wa_p.shape, lambda i: (0, 0)),
            pl.BlockSpec(wb_p.shape, lambda i: (0, 0)),
            pl.BlockSpec(aff.shape, lambda i: (0, 0)),
            pl.BlockSpec(mask.shape, lambda i: (0, 0)),
        ],
        out_specs=pl.BlockSpec((1, c2, lb), lambda i: (i, 0, 0)),
        compiler_params=pltpu.CompilerParams(dimension_semantics=("parallel",)),
    )(x_flat, wa_p, wb_p, aff, mask)

    # (N, C2, H*Wp) -> (N, C2, H, Wp) -> drop the Wp-W garbage columns -> NCHW.
    return out_flat.reshape(n, c2, h, wp)[:, :, :, :w]


# ----------------------------------------------------------------------------
# Parameter construction (mirrors nn.Conv2d / nn.InstanceNorm2d(affine=True)).
# ----------------------------------------------------------------------------
def _init_conv(key, k, cin, cout):
    kw, kb = jax.random.split(key)
    fan_in = cin * k * k
    bound = 1.0 / (fan_in ** 0.5)
    w = jax.random.uniform(kw, (k, k, cin, cout), jnp.float32, -bound, bound)  # HWIO
    b = jax.random.uniform(kb, (cout,), jnp.float32, -bound, bound)
    gamma = jnp.ones((cout,), jnp.float32)
    beta = jnp.zeros((cout,), jnp.float32)
    return w, b, gamma, beta


def conv_multi_block_params(key, in_channels, out_channels, max_conv_size):
    params = {}
    for k in (3, 5, 7, 9):
        if k > max_conv_size:
            continue
        key, ka, kb = jax.random.split(key, 3)
        params[k] = (_init_conv(ka, k, in_channels, out_channels),
                     _init_conv(kb, k, out_channels, out_channels))
    return params


# ----------------------------------------------------------------------------
# Pure-JAX reference (same bf16 matmul operands, f32 accumulation / norm math).
# ----------------------------------------------------------------------------
def _conv_layer_ref(x, w, b, gamma, beta, *, ksize, instance_norm, relu=True,
                    matmul_dtype=jnp.bfloat16):
    pad = ksize // 2
    xpad = jnp.pad(x, ((0, 0), (pad, pad), (pad, pad), (0, 0)), mode="reflect")
    out = jax.lax.conv_general_dilated(
        xpad.astype(matmul_dtype), w.astype(matmul_dtype),
        window_strides=(1, 1), padding="VALID",
        dimension_numbers=("NHWC", "HWIO", "NHWC"),
        preferred_element_type=jnp.float32)
    out = out + b.reshape(1, 1, 1, -1)
    if instance_norm:
        mean = out.mean(axis=(1, 2), keepdims=True)
        var = ((out - mean) ** 2).mean(axis=(1, 2), keepdims=True)
        out = (out - mean) * jax.lax.rsqrt(var + 1e-5)
        out = out * gamma.reshape(1, 1, 1, -1) + beta.reshape(1, 1, 1, -1)
    if relu:
        out = jnp.where(out >= 0, out, 0.2 * out)
    return out


def conv_multi_block_ref(x_nchw, params, instance_norm, *, matmul_dtype=jnp.bfloat16):
    x = jnp.transpose(x_nchw, (0, 2, 3, 1))
    outs = []
    for k in sorted(params.keys()):
        (wa, ba, ga, bta), (wb, bb, gb, btb) = params[k]
        o = _conv_layer_ref(x, wa, ba, ga, bta, ksize=k, instance_norm=instance_norm,
                            matmul_dtype=matmul_dtype)
        o = _conv_layer_ref(o, wb, bb, gb, btb, ksize=k, instance_norm=instance_norm,
                            matmul_dtype=matmul_dtype)
        outs.append(o)
    out = jnp.concatenate(outs, axis=-1)
    return jnp.transpose(out, (0, 3, 1, 2))


# ----------------------------------------------------------------------------
if __name__ == "__main__":
    key = jax.random.PRNGKey(0)
    kx, kp = jax.random.split(key)

    in_channels, out_channels = 4, 8
    max_conv_size = 7            # branches with kernel sizes 3, 5, 7

    # PyTorch-style NCHW input.
    x = jax.random.normal(kx, (2, in_channels, 16, 16), jnp.float32)
    params = conv_multi_block_params(kp, in_channels, out_channels, max_conv_size)
    n_branches = len(params)

    # instance_norm=True path (typical PyNET setting).
    out_in = jax.block_until_ready(conv_multi_block(x, params, True))
    assert out_in.shape == (2, out_channels * n_branches, 16, 16), out_in.shape
    ref_in = conv_multi_block_ref(x, params, True)
    err_in = float(jnp.max(jnp.abs(out_in - ref_in)))
    assert err_in < 2e-2, f"instance_norm=True max abs err too large: {err_in}"

    # instance_norm=False path (conv bias + LeakyReLU only).
    out_nin = jax.block_until_ready(conv_multi_block(x, params, False))
    ref_nin = conv_multi_block_ref(x, params, False)
    err_nin = float(jnp.max(jnp.abs(out_nin - ref_nin)))
    assert err_nin < 2e-2, f"instance_norm=False max abs err too large: {err_nin}"

    print("KERNEL_OK")
</pallas_src>

<mosaic_0001>
module attributes {stable_mosaic.version = 11 : i64} {
  func.func @_conv_multi_block_kernel(%arg0: i32, %arg1: memref<1x4x506xbf16, #tpu.memory_space<vmem>>, %arg2: memref<24x196xbf16, #tpu.memory_space<vmem>>, %arg3: memref<24x1176xbf16, #tpu.memory_space<vmem>>, %arg4: memref<24x4xf32, #tpu.memory_space<vmem>>, %arg5: memref<1x352xf32, #tpu.memory_space<vmem>>, %arg6: memref<1x24x352xf32, #tpu.memory_space<vmem>>) attributes {dimension_semantics = [#tpu.dimension_semantics<parallel>], iteration_bounds = array<i64: 2>, scalar_prefetch = 0 : i64, scratch_operands = 0 : i64, tpu.core_type = #tpu.core_type<tc>, window_params = [{transform_indices = @transform_0, window_bounds = array<i64: 1, 4, 506>}, {pipeline_mode = #tpu.pipeline_mode<synchronous>, transform_indices = @transform_1, window_bounds = array<i64: 24, 196>}, {pipeline_mode = #tpu.pipeline_mode<synchronous>, transform_indices = @transform_2, window_bounds = array<i64: 24, 1176>}, {pipeline_mode = #tpu.pipeline_mode<synchronous>, transform_indices = @transform_3, window_bounds = array<i64: 24, 4>}, {pipeline_mode = #tpu.pipeline_mode<synchronous>, transform_indices = @transform_4, window_bounds = array<i64: 1, 352>}, {transform_indices = @transform_5, window_bounds = array<i64: 1, 24, 352>}]} {
    %c0 = arith.constant 0 : index
    %c0_0 = arith.constant 0 : index
    %0 = vector.load %arg5[%c0, %c0_0] : memref<1x352xf32, #tpu.memory_space<vmem>>, vector<1x352xf32>
    %c0_1 = arith.constant 0 : index
    %c0_2 = arith.constant 0 : index
    %1 = vector.load %arg4[%c0_1, %c0_2] : memref<24x4xf32, #tpu.memory_space<vmem>>, vector<24x4xf32>
    %c0_3 = arith.constant 0 : index
    %c0_4 = arith.constant 0 : index
    %c0_5 = arith.constant 0 : index
    %2 = vector.load %arg1[%c0_3, %c0_4, %c0_5] : memref<1x4x506xbf16, #tpu.memory_space<vmem>>, vector<1x4x506xbf16>
    %3 = vector.shape_cast %2 : vector<1x4x506xbf16> to vector<4x506xbf16>
    %4 = vector.extract_strided_slice %3 {offsets = [0, 0], sizes = [4, 352], strides = [1, 1]} : vector<4x506xbf16> to vector<4x352xbf16>
    %5 = vector.extract_strided_slice %3 {offsets = [0, 1], sizes = [4, 352], strides = [1, 1]} : vector<4x506xbf16> to vector<4x352xbf16>
    %6 = vector.extract_strided_slice %3 {offsets = [0, 2], sizes = [4, 352], strides = [1, 1]} : vector<4x506xbf16> to vector<4x352xbf16>
    %7 = vector.extract_strided_slice %3 {offsets = [0, 3], sizes = [4, 352], strides = [1, 1]} : vector<4x506xbf16> to vector<4x352xbf16>
    %8 = vector.extract_strided_slice %3 {offsets = [0, 4], sizes = [4, 352], strides = [1, 1]} : vector<4x506xbf16> to vector<4x352xbf16>
    %9 = vector.extract_strided_slice %3 {offsets = [0, 5], sizes = [4, 352], strides = [1, 1]} : vector<4x506xbf16> to vector<4x352xbf16>
    %10 = vector.extract_strided_slice %3 {offsets = [0, 6], sizes = [4, 352], strides = [1, 1]} : vector<4x506xbf16> to vector<4x352xbf16>
    %11 = vector.extract_strided_slice %3 {offsets = [0, 22], sizes = [4, 352], strides = [1, 1]} : vector<4x506xbf16> to vector<4x352xbf16>
    %12 = vector.extract_strided_slice %3 {offsets = [0, 23], sizes = [4, 352], strides = [1, 1]} : vector<4x506xbf16> to vector<4x352xbf16>
    %13 = vector.extract_strided_slice %3 {offsets = [0, 24], sizes = [4, 352], strides = [1, 1]} : vector<4x506xbf16> to vector<4x352xbf16>
    %14 = vector.extract_strided_slice %3 {offsets = [0, 25], sizes = [4, 352], strides = [1, 1]} : vector<4x506xbf16> to vector<4x352xbf16>
    %15 = vector.extract_strided_slice %3 {offsets = [0, 26], sizes = [4, 352], strides = [1, 1]} : vector<4x506xbf16> to vector<4x352xbf16>
    %16 = vector.extract_strided_slice %3 {offsets = [0, 27], sizes = [4, 352], strides = [1, 1]} : vector<4x506xbf16> to vector<4x352xbf16>
    %17 = vector.extract_strided_slice %3 {offsets = [0, 28], sizes = [4, 352], strides = [1, 1]} : vector<4x506xbf16> to vector<4x352xbf16>
    %18 = vector.extract_strided_slice %3 {offsets = [0, 44], sizes = [4, 352], strides = [1, 1]} : vector<4x506xbf16> to vector<4x352xbf16>
    %19 = vector.extract_strided_slice %3 {offsets = [0, 45], sizes = [4, 352], strides = [1, 1]} : vector<4x506xbf16> to vector<4x352xbf16>
    %20 = vector.extract_strided_slice %3 {offsets = [0, 46], sizes = [4, 352], strides = [1, 1]} : vector<4x506xbf16> to vector<4x352xbf16>
    %21 = vector.extract_strided_slice %3 {offsets = [0, 47], sizes = [4, 352], strides = [1, 1]} : vector<4x506xbf16> to vector<4x352xbf16>
    %22 = vector.extract_strided_slice %3 {offsets = [0, 48], sizes = [4, 352], strides = [1, 1]} : vector<4x506xbf16> to vector<4x352xbf16>
    %23 = vector.extract_strided_slice %3 {offsets = [0, 49], sizes = [4, 352], strides = [1, 1]} : vector<4x506xbf16> to vector<4x352xbf16>
    %24 = vector.extract_strided_slice %3 {offsets = [0, 50], sizes = [4, 352], strides = [1, 1]} : vector<4x506xbf16> to vector<4x352xbf16>
    %25 = vector.extract_strided_slice %3 {offsets = [0, 66], sizes = [4, 352], strides = [1, 1]} : vector<4x506xbf16> to vector<4x352xbf16>
    %26 = vector.extract_strided_slice %3 {offsets = [0, 67], sizes = [4, 352], strides = [1, 1]} : vector<4x506xbf16> to vector<4x352xbf16>
    %27 = vector.extract_strided_slice %3 {offsets = [0, 68], sizes = [4, 352], strides = [1, 1]} : vector<4x506xbf16> to vector<4x352xbf16>
    %28 = vector.extract_strided_slice %3 {offsets = [0, 69], sizes = [4, 352], strides = [1, 1]} : vector<4x506xbf16> to vector<4x352xbf16>
    %29 = vector.extract_strided_slice %3 {offsets = [0, 70], sizes = [4, 352], strides = [1, 1]} : vector<4x506xbf16> to vector<4x352xbf16>
    %30 = vector.extract_strided_slice %3 {offsets = [0, 71], sizes = [4, 352], strides = [1, 1]} : vector<4x506xbf16> to vector<4x352xbf16>
    %31 = vector.extract_strided_slice %3 {offsets = [0, 72], sizes = [4, 352], strides = [1, 1]} : vector<4x506xbf16> to vector<4x352xbf16>
    %32 = vector.extract_strided_slice %3 {offsets = [0, 88], sizes = [4, 352], strides = [1, 1]} : vector<4x506xbf16> to vector<4x352xbf16>
    %33 = vector.extract_strided_slice %3 {offsets = [0, 89], sizes = [4, 352], strides = [1, 1]} : vector<4x506xbf16> to vector<4x352xbf16>
    %34 = vector.extract_strided_slice %3 {offsets = [0, 90], sizes = [4, 352], strides = [1, 1]} : vector<4x506xbf16> to vector<4x352xbf16>
    %35 = vector.extract_strided_slice %3 {offsets = [0, 91], sizes = [4, 352], strides = [1, 1]} : vector<4x506xbf16> to vector<4x352xbf16>
    %36 = vector.extract_strided_slice %3 {offsets = [0, 92], sizes = [4, 352], strides = [1, 1]} : vector<4x506xbf16> to vector<4x352xbf16>
    %37 = vector.extract_strided_slice %3 {offsets = [0, 93], sizes = [4, 352], strides = [1, 1]} : vector<4x506xbf16> to vector<4x352xbf16>
    %38 = vector.extract_strided_slice %3 {offsets = [0, 94], sizes = [4, 352], strides = [1, 1]} : vector<4x506xbf16> to vector<4x352xbf16>
    %39 = vector.extract_strided_slice %3 {offsets = [0, 110], sizes = [4, 352], strides = [1, 1]} : vector<4x506xbf16> to vector<4x352xbf16>
    %40 = vector.extract_strided_slice %3 {offsets = [0, 111], sizes = [4, 352], strides = [1, 1]} : vector<4x506xbf16> to vector<4x352xbf16>
    %41 = vector.extract_strided_slice %3 {offsets = [0, 112], sizes = [4, 352], strides = [1, 1]} : vector<4x506xbf16> to vector<4x352xbf16>
    %42 = vector.extract_strided_slice %3 {offsets = [0, 113], sizes = [4, 352], strides = [1, 1]} : vector<4x506xbf16> to vector<4x352xbf16>
    %43 = vector.extract_strided_slice %3 {offsets = [0, 114], sizes = [4, 352], strides = [1, 1]} : vector<4x506xbf16> to vector<4x352xbf16>
    %44 = vector.extract_strided_slice %3 {offsets = [0, 115], sizes = [4, 352], strides = [1, 1]} : vector<4x506xbf16> to vector<4x352xbf16>
    %45 = vector.extract_strided_slice %3 {offsets = [0, 116], sizes = [4, 352], strides = [1, 1]} : vector<4x506xbf16> to vector<4x352xbf16>
    %46 = vector.extract_strided_slice %3 {offsets = [0, 132], sizes = [4, 352], strides = [1, 1]} : vector<4x506xbf16> to vector<4x352xbf16>
    %47 = vector.extract_strided_slice %3 {offsets = [0, 133], sizes = [4, 352], strides = [1, 1]} : vector<4x506xbf16> to vector<4x352xbf16>
    %48 = vector.extract_strided_slice %3 {offsets = [0, 134], sizes = [4, 352], strides = [1, 1]} : vector<4x506xbf16> to vector<4x352xbf16>
    %49 = vector.extract_strided_slice %3 {offsets = [0, 135], sizes = [4, 352], strides = [1, 1]} : vector<4x506xbf16> to vector<4x352xbf16>
    %50 = vector.extract_strided_slice %3 {offsets = [0, 136], sizes = [4, 352], strides = [1, 1]} : vector<4x506xbf16> to vector<4x352xbf16>
    %51 = vector.extract_strided_slice %3 {offsets = [0, 137], sizes = [4, 352], strides = [1, 1]} : vector<4x506xbf16> to vector<4x352xbf16>
    %52 = vector.extract_strided_slice %3 {offsets = [0, 138], sizes = [4, 352], strides = [1, 1]} : vector<4x506xbf16> to vector<4x352xbf16>
    %53 = tpu.concatenate %4, %5, %6, %7, %8, %9, %10, %11, %12, %13, %14, %15, %16, %17, %18, %19 in 0 : vector<4x352xbf16>, vector<4x352xbf16>, vector<4x352xbf16>, vector<4x352xbf16>, vector<4x352xbf16>, vector<4x352xbf16>, vector<4x352xbf16>, vector<4x352xbf16>, vector<4x352xbf16>, vector<4x352xbf16>, vector<4x352xbf16>, vector<4x352xbf16>, vector<4x352xbf16>, vector<4x352xbf16>, vector<4x352xbf16>, vector<4x352xbf16> -> vector<64x352xbf16>
    %54 = tpu.concatenate %20, %21, %22, %23, %24, %25, %26, %27, %28, %29, %30, %31, %32, %33, %34, %35 in 0 : vector<4x352xbf16>, vector<4x352xbf16>, vector<4x352xbf16>, vector<4x352xbf16>, vector<4x352xbf16>, vector<4x352xbf16>, vector<4x352xbf16>, vector<4x352xbf16>, vector<4x352xbf16>, vector<4x352xbf16>, vector<4x352xbf16>, vector<4x352xbf16>, vector<4x352xbf16>, vector<4x352xbf16>, vector<4x352xbf16>, vector<4x352xbf16> -> vector<64x352xbf16>
    %55 = tpu.concatenate %36, %37, %38, %39, %40, %41, %42, %43, %44, %45, %46, %47, %48, %49, %50, %51 in 0 : vector<4x352xbf16>, vector<4x352xbf16>, vector<4x352xbf16>, vector<4x352xbf16>, vector<4x352xbf16>, vector<4x352xbf16>, vector<4x352xbf16>, vector<4x352xbf16>, vector<4x352xbf16>, vector<4x352xbf16>, vector<4x352xbf16>, vector<4x352xbf16>, vector<4x352xbf16>, vector<4x352xbf16>, vector<4x352xbf16>, vector<4x352xbf16> -> vector<64x352xbf16>
    %56 = tpu.concatenate %53, %54, %55, %52 in 0 : vector<64x352xbf16>, vector<64x352xbf16>, vector<64x352xbf16>, vector<4x352xbf16> -> vector<196x352xbf16>
    %c0_6 = arith.constant 0 : index
    %c0_7 = arith.constant 0 : index
    %57 = vector.load %arg2[%c0_6, %c0_7] : memref<24x196xbf16, #tpu.memory_space<vmem>>, vector<24x196xbf16>
    %cst = arith.constant dense<0.000000e+00> : vector<24x352xf32>
    %58 = tpu.matmul %57, %56, %cst {dimension_numbers = #tpu.dot_dimension_numbers<[1], [0], [0], [1], [0, 0, 1, 1], [], []>} : vector<24x196xbf16>, vector<196x352xbf16>, vector<24x352xf32> -> vector<24x352xf32>
    %59 = vector.extract_strided_slice %1 {offsets = [0, 0], sizes = [24, 1], strides = [1, 1]} : vector<24x4xf32> to vector<24x1xf32>
    %60 = vector.extract_strided_slice %1 {offsets = [0, 1], sizes = [24, 1], strides = [1, 1]} : vector<24x4xf32> to vector<24x1xf32>
    %61 = vector.broadcast %0 : vector<1x352xf32> to vector<24x352xf32>
    %62 = arith.mulf %58, %61 : vector<24x352xf32>
    %cst_8 = arith.constant dense<0.000000e+00> : vector<24xf32>
    %63 = vector.multi_reduction <add>, %62, %cst_8 [1] : vector<24x352xf32> to vector<24xf32>
    %64 = vector.shape_cast %63 : vector<24xf32> to vector<24x1xf32>
    %cst_9 = arith.constant 3.906250e-03 : f32
    %65 = vector.broadcast %cst_9 : f32 to vector<24x1xf32>
    %66 = arith.mulf %64, %65 : vector<24x1xf32>
    %67 = arith.mulf %62, %58 : vector<24x352xf32>
    %cst_10 = arith.constant dense<0.000000e+00> : vector<24xf32>
    %68 = vector.multi_reduction <add>, %67, %cst_10 [1] : vector<24x352xf32> to vector<24xf32>
    %69 = vector.shape_cast %68 : vector<24xf32> to vector<24x1xf32>
    %cst_11 = arith.constant 3.906250e-03 : f32
    %70 = vector.broadcast %cst_11 : f32 to vector<24x1xf32>
    %71 = arith.mulf %69, %70 : vector<24x1xf32>
    %72 = arith.mulf %66, %66 : vector<24x1xf32>
    %73 = arith.subf %71, %72 : vector<24x1xf32>
    %cst_12 = arith.constant 0.000000e+00 : f32
    %74 = vector.broadcast %cst_12 : f32 to vector<24x1xf32>
    %75 = arith.maximumf %73, %74 : vector<24x1xf32>
    %76 = vector.broadcast %66 : vector<24x1xf32> to vector<24x352xf32>
    %77 = arith.subf %58, %76 : vector<24x352xf32>
    %cst_13 = arith.constant 9.99999974E-6 : f32
    %78 = vector.broadcast %cst_13 : f32 to vector<24x1xf32>
    %79 = arith.addf %75, %78 : vector<24x1xf32>
    %80 = math.rsqrt %79 : vector<24x1xf32>
    %81 = vector.broadcast %80 : vector<24x1xf32> to vector<24x352xf32>
    %82 = arith.mulf %77, %81 : vector<24x352xf32>
    %83 = vector.broadcast %59 : vector<24x1xf32> to vector<24x352xf32>
    %84 = arith.mulf %82, %83 : vector<24x352xf32>
    %85 = vector.broadcast %60 : vector<24x1xf32> to vector<24x352xf32>
    %86 = arith.addf %84, %85 : vector<24x352xf32>
    %cst_14 = arith.constant 0.000000e+00 : f32
    %87 = vector.broadcast %cst_14 : f32 to vector<24x352xf32>
    %88 = arith.cmpf oge, %86, %87 : vector<24x352xf32>
    %cst_15 = arith.constant 2.000000e-01 : f32
    %89 = vector.broadcast %cst_15 : f32 to vector<24x352xf32>
    %90 = arith.mulf %89, %86 : vector<24x352xf32>
    %91 = arith.select %88, %86, %90 : vector<24x352xi1>, vector<24x352xf32>
    %92 = arith.truncf %91 : vector<24x352xf32> to vector<24x352xbf16>
    %93 = vector.extract_strided_slice %92 {offsets = [0, 0], sizes = [24, 16], strides = [1, 1]} : vector<24x352xbf16> to vector<24x16xbf16>
    %94 = vector.extract_strided_slice %93 {offsets = [0, 3], sizes = [24, 1], strides = [1, 1]} : vector<24x16xbf16> to vector<24x1xbf16>
    %95 = vector.extract_strided_slice %93 {offsets = [0, 2], sizes = [24, 1], strides = [1, 1]} : vector<24x16xbf16> to vector<24x1xbf16>
    %96 = vector.extract_strided_slice %93 {offsets = [0, 1], sizes = [24, 1], strides = [1, 1]} : vector<24x16xbf16> to vector<24x1xbf16>
    %97 = vector.extract_strided_slice %93 {offsets = [0, 14], sizes = [24, 1], strides = [1, 1]} : vector<24x16xbf16> to vector<24x1xbf16>
    %98 = vector.extract_strided_slice %93 {offsets = [0, 13], sizes = [24, 1], strides = [1, 1]} : vector<24x16xbf16> to vector<24x1xbf16>
    %99 = vector.extract_strided_slice %93 {offsets = [0, 12], sizes = [24, 1], strides = [1, 1]} : vector<24x16xbf16> to vector<24x1xbf16>
    %100 = tpu.concatenate %94, %95, %96, %93, %97, %98, %99 in 1 : vector<24x1xbf16>, vector<24x1xbf16>, vector<24x1xbf16>, vector<24x16xbf16>, vector<24x1xbf16>, vector<24x1xbf16>, vector<24x1xbf16> -> vector<24x22xbf16>
    %101 = vector.extract_strided_slice %92 {offsets = [0, 22], sizes = [24, 16], strides = [1, 1]} : vector<24x352xbf16> to vector<24x16xbf16>
    %102 = vector.extract_strided_slice %101 {offsets = [0, 3], sizes = [24, 1], strides = [1, 1]} : vector<24x16xbf16> to vector<24x1xbf16>
    %103 = vector.extract_strided_slice %101 {offsets = [0, 2], sizes = [24, 1], strides = [1, 1]} : vector<24x16xbf16> to vector<24x1xbf16>
    %104 = vector.extract_strided_slice %101 {offsets = [0, 1], sizes = [24, 1], strides = [1, 1]} : vector<24x16xbf16> to vector<24x1xbf16>
    %105 = vector.extract_strided_slice %101 {offsets = [0, 14], sizes = [24, 1], strides = [1, 1]} : vector<24x16xbf16> to vector<24x1xbf16>
    %106 = vector.extract_strided_slice %101 {offsets = [0, 13], sizes = [24, 1], strides = [1, 1]} : vector<24x16xbf16> to vector<24x1xbf16>
    %107 = vector.extract_strided_slice %101 {offsets = [0, 12], sizes = [24, 1], strides = [1, 1]} : vector<24x16xbf16> to vector<24x1xbf16>
    %108 = tpu.concatenate %102, %103, %104, %101, %105, %106, %107 in 1 : vector<24x1xbf16>, vector<24x1xbf16>, vector<24x1xbf16>, vector<24x16xbf16>, vector<24x1xbf16>, vector<24x1xbf16>, vector<24x1xbf16> -> vector<24x22xbf16>
    %109 = vector.extract_strided_slice %92 {offsets = [0, 44], sizes = [24, 16], strides = [1, 1]} : vector<24x352xbf16> to vector<24x16xbf16>
    %110 = vector.extract_strided_slice %109 {offsets = [0, 3], sizes = [24, 1], strides = [1, 1]} : vector<24x16xbf16> to vector<24x1xbf16>
    %111 = vector.extract_strided_slice %109 {offsets = [0, 2], sizes = [24, 1], strides = [1, 1]} : vector<24x16xbf16> to vector<24x1xbf16>
    %112 = vector.extract_strided_slice %109 {offsets = [0, 1], sizes = [24, 1], strides = [1, 1]} : vector<24x16xbf16> to vector<24x1xbf16>
    %113 = vector.extract_strided_slice %109 {offsets = [0, 14], sizes = [24, 1], strides = [1, 1]} : vector<24x16xbf16> to vector<24x1xbf16>
    %114 = vector.extract_strided_slice %109 {offsets = [0, 13], sizes = [24, 1], strides = [1, 1]} : vector<24x16xbf16> to vector<24x1xbf16>
    %115 = vector.extract_strided_slice %109 {offsets = [0, 12], sizes = [24, 1], strides = [1, 1]} : vector<24x16xbf16> to vector<24x1xbf16>
    %116 = tpu.concatenate %110, %111, %112, %109, %113, %114, %115 in 1 : vector<24x1xbf16>, vector<24x1xbf16>, vector<24x1xbf16>, vector<24x16xbf16>, vector<24x1xbf16>, vector<24x1xbf16>, vector<24x1xbf16> -> vector<24x22xbf16>
    %117 = vector.extract_strided_slice %92 {offsets = [0, 66], sizes = [24, 16], strides = [1, 1]} : vector<24x352xbf16> to vector<24x16xbf16>
    %118 = vector.extract_strided_slice %117 {offsets = [0, 3], sizes = [24, 1], strides = [1, 1]} : vector<24x16xbf16> to vector<24x1xbf16>
    %119 = vector.extract_strided_slice %117 {offsets = [0, 2], sizes = [24, 1], strides = [1, 1]} : vector<24x16xbf16> to vector<24x1xbf16>
    %120 = vector.extract_strided_slice %117 {offsets = [0, 1], sizes = [24, 1], strides = [1, 1]} : vector<24x16xbf16> to vector<24x1xbf16>
    %121 = vector.extract_strided_slice %117 {offsets = [0, 14], sizes = [24, 1], strides = [1, 1]} : vector<24x16xbf16> to vector<24x1xbf16>
    %122 = vector.extract_strided_slice %117 {offsets = [0, 13], sizes = [24, 1], strides = [1, 1]} : vector<24x16xbf16> to vector<24x1xbf16>
    %123 = vector.extract_strided_slice %117 {offsets = [0, 12], sizes = [24, 1], strides = [1, 1]} : vector<24x16xbf16> to vector<24x1xbf16>
    %124 = tpu.concatenate %118, %119, %120, %117, %121, %122, %123 in 1 : vector<24x1xbf16>, vector<24x1xbf16>, vector<24x1xbf16>, vector<24x16xbf16>, vector<24x1xbf16>, vector<24x1xbf16>, vector<24x1xbf16> -> vector<24x22xbf16>
    %125 = vector.extract_strided_slice %92 {offsets = [0, 88], sizes = [24, 16], strides = [1, 1]} : vector<24x352xbf16> to vector<24x16xbf16>
    %126 = vector.extract_strided_slice %125 {offsets = [0, 3], sizes = [24, 1], strides = [1, 1]} : vector<24x16xbf16> to vector<24x1xbf16>
    %127 = vector.extract_strided_slice %125 {offsets = [0, 2], sizes = [24, 1], strides = [1, 1]} : vector<24x16xbf16> to vector<24x1xbf16>
    %128 = vector.extract_strided_slice %125 {offsets = [0, 1], sizes = [24, 1], strides = [1, 1]} : vector<24x16xbf16> to vector<24x1xbf16>
    %129 = vector.extract_strided_slice %125 {offsets = [0, 14], sizes = [24, 1], strides = [1, 1]} : vector<24x16xbf16> to vector<24x1xbf16>
    %130 = vector.extract_strided_slice %125 {offsets = [0, 13], sizes = [24, 1], strides = [1, 1]} : vector<24x16xbf16> to vector<24x1xbf16>
    %131 = vector.extract_strided_slice %125 {offsets = [0, 12], sizes = [24, 1], strides = [1, 1]} : vector<24x16xbf16> to vector<24x1xbf16>
    %132 = tpu.concatenate %126, %127, %128, %125, %129, %130, %131 in 1 : vector<24x1xbf16>, vector<24x1xbf16>, vector<24x1xbf16>, vector<24x16xbf16>, vector<24x1xbf16>, vector<24x1xbf16>, vector<24x1xbf16> -> vector<24x22xbf16>
    %133 = vector.extract_strided_slice %92 {offsets = [0, 110], sizes = [24, 16], strides = [1, 1]} : vector<24x352xbf16> to vector<24x16xbf16>
    %134 = vector.extract_strided_slice %133 {offsets = [0, 3], sizes = [24, 1], strides = [1, 1]} : vector<24x16xbf16> to vector<24x1xbf16>
    %135 = vector.extract_strided_slice %133 {offsets = [0, 2], sizes = [24, 1], strides = [1, 1]} : vector<24x16xbf16> to vector<24x1xbf16>
    %136 = vector.extract_strided_slice %133 {offsets = [0, 1], sizes = [24, 1], strides = [1, 1]} : vector<24x16xbf16> to vector<24x1xbf16>
    %137 = vector.extract_strided_slice %133 {offsets = [0, 14], sizes = [24, 1], strides = [1, 1]} : vector<24x16xbf16> to vector<24x1xbf16>
    %138 = vector.extract_strided_slice %133 {offsets = [0, 13], sizes = [24, 1], strides = [1, 1]} : vector<24x16xbf16> to vector<24x1xbf16>
    %139 = vector.extract_strided_slice %133 {offsets = [0, 12], sizes = [24, 1], strides = [1, 1]} : vector<24x16xbf16> to vector<24x1xbf16>
    %140 = tpu.concatenate %134, %135, %136, %133, %137, %138, %139 in 1 : vector<24x1xbf16>, vector<24x1xbf16>, vector<24x1xbf16>, vector<24x16xbf16>, vector<24x1xbf16>, vector<24x1xbf16>, vector<24x1xbf16> -> vector<24x22xbf16>
    %141 = vector.extract_strided_slice %92 {offsets = [0, 132], sizes = [24, 16], strides = [1, 1]} : vector<24x352xbf16> to vector<24x16xbf16>
    %142 = vector.extract_strided_slice %141 {offsets = [0, 3], sizes = [24, 1], strides = [1, 1]} : vector<24x16xbf16> to vector<24x1xbf16>
    %143 = vector.extract_strided_slice %141 {offsets = [0, 2], sizes = [24, 1], strides = [1, 1]} : vector<24x16xbf16> to vector<24x1xbf16>
    %144 = vector.extract_strided_slice %141 {offsets = [0, 1], sizes = [24, 1], strides = [1, 1]} : vector<24x16xbf16> to vector<24x1xbf16>
    %145 = vector.extract_strided_slice %141 {offsets = [0, 14], sizes = [24, 1], strides = [1, 1]} : vector<24x16xbf16> to vector<24x1xbf16>
    %146 = vector.extract_strided_slice %141 {offsets = [0, 13], sizes = [24, 1], strides = [1, 1]} : vector<24x16xbf16> to vector<24x1xbf16>
    %147 = vector.extract_strided_slice %141 {offsets = [0, 12], sizes = [24, 1], strides = [1, 1]} : vector<24x16xbf16> to vector<24x1xbf16>
    %148 = tpu.concatenate %142, %143, %144, %141, %145, %146, %147 in 1 : vector<24x1xbf16>, vector<24x1xbf16>, vector<24x1xbf16>, vector<24x16xbf16>, vector<24x1xbf16>, vector<24x1xbf16>, vector<24x1xbf16> -> vector<24x22xbf16>
    %149 = vector.extract_strided_slice %92 {offsets = [0, 154], sizes = [24, 16], strides = [1, 1]} : vector<24x352xbf16> to vector<24x16xbf16>
    %150 = vector.extract_strided_slice %149 {offsets = [0, 3], sizes = [24, 1], strides = [1, 1]} : vector<24x16xbf16> to vector<24x1xbf16>
    %151 = vector.extract_strided_slice %149 {offsets = [0, 2], sizes = [24, 1], strides = [1, 1]} : vector<24x16xbf16> to vector<24x1xbf16>
    %152 = vector.extract_strided_slice %149 {offsets = [0, 1], sizes = [24, 1], strides = [1, 1]} : vector<24x16xbf16> to vector<24x1xbf16>
    %153 = vector.extract_strided_slice %149 {offsets = [0, 14], sizes = [24, 1], strides = [1, 1]} : vector<24x16xbf16> to vector<24x1xbf16>
    %154 = vector.extract_strided_slice %149 {offsets = [0, 13], sizes = [24, 1], strides = [1, 1]} : vector<24x16xbf16> to vector<24x1xbf16>
    %155 = vector.extract_strided_slice %149 {offsets = [0, 12], sizes = [24, 1], strides = [1, 1]} : vector<24x16xbf16> to vector<24x1xbf16>
    %156 = tpu.concatenate %150, %151, %152, %149, %153, %154, %155 in 1 : vector<24x1xbf16>, vector<24x1xbf16>, vector<24x1xbf16>, vector<24x16xbf16>, vector<24x1xbf16>, vector<24x1xbf16>, vector<24x1xbf16> -> vector<24x22xbf16>
    %157 = vector.extract_strided_slice %92 {offsets = [0, 176], sizes = [24, 16], strides = [1, 1]} : vector<24x352xbf16> to vector<24x16xbf16>
    %158 = vector.extract_strided_slice %157 {offsets = [0, 3], sizes = [24, 1], strides = [1, 1]} : vector<24x16xbf16> to vector<24x1xbf16>
    %159 = vector.extract_strided_slice %157 {offsets = [0, 2], sizes = [24, 1], strides = [1, 1]} : vector<24x16xbf16> to vector<24x1xbf16>
    %160 = vector.extract_strided_slice %157 {offsets = [0, 1], sizes = [24, 1], strides = [1, 1]} : vector<24x16xbf16> to vector<24x1xbf16>
    %161 = vector.extract_strided_slice %157 {offsets = [0, 14], sizes = [24, 1], strides = [1, 1]} : vector<24x16xbf16> to vector<24x1xbf16>
    %162 = vector.extract_strided_slice %157 {offsets = [0, 13], sizes = [24, 1], strides = [1, 1]} : vector<24x16xbf16> to vector<24x1xbf16>
    %163 = vector.extract_strided_slice %157 {offsets = [0, 12], sizes = [24, 1], strides = [1, 1]} : vector<24x16xbf16> to vector<24x1xbf16>
    %164 = tpu.concatenate %158, %159, %160, %157, %161, %162, %163 in 1 : vector<24x1xbf16>, vector<24x1xbf16>, vector<24x1xbf16>, vector<24x16xbf16>, vector<24x1xbf16>, vector<24x1xbf16>, vector<24x1xbf16> -> vector<24x22xbf16>
    %165 = vector.extract_strided_slice %92 {offsets = [0, 198], sizes = [24, 16], strides = [1, 1]} : vector<24x352xbf16> to vector<24x16xbf16>
    %166 = vector.extract_strided_slice %165 {offsets = [0, 3], sizes = [24, 1], strides = [1, 1]} : vector<24x16xbf16> to vector<24x1xbf16>
    %167 = vector.extract_strided_slice %165 {offsets = [0, 2], sizes = [24, 1], strides = [1, 1]} : vector<24x16xbf16> to vector<24x1xbf16>
    %168 = vector.extract_strided_slice %165 {offsets = [0, 1], sizes = [24, 1], strides = [1, 1]} : vector<24x16xbf16> to vector<24x1xbf16>
    %169 = vector.extract_strided_slice %165 {offsets = [0, 14], sizes = [24, 1], strides = [1, 1]} : vector<24x16xbf16> to vector<24x1xbf16>
    %170 = vector.extract_strided_slice %165 {offsets = [0, 13], sizes = [24, 1], strides = [1, 1]} : vector<24x16xbf16> to vector<24x1xbf16>
    %171 = vector.extract_strided_slice %165 {offsets = [0, 12], sizes = [24, 1], strides = [1, 1]} : vector<24x16xbf16> to vector<24x1xbf16>
    %172 = tpu.concatenate %166, %167, %168, %165, %169, %170, %171 in 1 : vector<24x1xbf16>, vector<24x1xbf16>, vector<24x1xbf16>, vector<24x16xbf16>, vector<24x1xbf16>, vector<24x1xbf16>, vector<24x1xbf16> -> vector<24x22xbf16>
    %173 = vector.extract_strided_slice %92 {offsets = [0, 220], sizes = [24, 16], strides = [1, 1]} : vector<24x352xbf16> to vector<24x16xbf16>
    %174 = vector.extract_strided_slice %173 {offsets = [0, 3], sizes = [24, 1], strides = [1, 1]} : vector<24x16xbf16> to vector<24x1xbf16>
    %175 = vector.extract_strided_slice %173 {offsets = [0, 2], sizes = [24, 1], strides = [1, 1]} : vector<24x16xbf16> to vector<24x1xbf16>
    %176 = vector.extract_strided_slice %173 {offsets = [0, 1], sizes = [24, 1], strides = [1, 1]} : vector<24x16xbf16> to vector<24x1xbf16>
    %177 = vector.extract_strided_slice %173 {offsets = [0, 14], sizes = [24, 1], strides = [1, 1]} : vector<24x16xbf16> to vector<24x1xbf16>
    %178 = vector.extract_strided_slice %173 {offsets = [0, 13], sizes = [24, 1], strides = [1, 1]} : vector<24x16xbf16> to vector<24x1xbf16>
    %179 = vector.extract_strided_slice %173 {offsets = [0, 12], sizes = [24, 1], strides = [1, 1]} : vector<24x16xbf16> to vector<24x1xbf16>
    %180 = tpu.concatenate %174, %175, %176, %173, %177, %178, %179 in 1 : vector<24x1xbf16>, vector<24x1xbf16>, vector<24x1xbf16>, vector<24x16xbf16>, vector<24x1xbf16>, vector<24x1xbf16>, vector<24x1xbf16> -> vector<24x22xbf16>
    %181 = vector.extract_strided_slice %92 {offsets = [0, 242], sizes = [24, 16], strides = [1, 1]} : vector<24x352xbf16> to vector<24x16xbf16>
    %182 = vector.extract_strided_slice %181 {offsets = [0, 3], sizes = [24, 1], strides = [1, 1]} : vector<24x16xbf16> to vector<24x1xbf16>
    %183 = vector.extract_strided_slice %181 {offsets = [0, 2], sizes = [24, 1], strides = [1, 1]} : vector<24x16xbf16> to vector<24x1xbf16>
    %184 = vector.extract_strided_slice %181 {offsets = [0, 1], sizes = [24, 1], strides = [1, 1]} : vector<24x16xbf16> to vector<24x1xbf16>
    %185 = vector.extract_strided_slice %181 {offsets = [0, 14], sizes = [24, 1], strides = [1, 1]} : vector<24x16xbf16> to vector<24x1xbf16>
    %186 = vector.extract_strided_slice %181 {offsets = [0, 13], sizes = [24, 1], strides = [1, 1]} : vector<24x16xbf16> to vector<24x1xbf16>
    %187 = vector.extract_strided_slice %181 {offsets = [0, 12], sizes = [24, 1], strides = [1, 1]} : vector<24x16xbf16> to vector<24x1xbf16>
    %188 = tpu.concatenate %182, %183, %184, %181, %185, %186, %187 in 1 : vector<24x1xbf16>, vector<24x1xbf16>, vector<24x1xbf16>, vector<24x16xbf16>, vector<24x1xbf16>, vector<24x1xbf16>, vector<24x1xbf16> -> vector<24x22xbf16>
    %189 = vector.extract_strided_slice %92 {offsets = [0, 264], sizes = [24, 16], strides = [1, 1]} : vector<24x352xbf16> to vector<24x16xbf16>
    %190 = vector.extract_strided_slice %189 {offsets = [0, 3], sizes = [24, 1], strides = [1, 1]} : vector<24x16xbf16> to vector<24x1xbf16>
    %191 = vector.extract_strided_slice %189 {offsets = [0, 2], sizes = [24, 1], strides = [1, 1]} : vector<24x16xbf16> to vector<24x1xbf16>
    %192 = vector.extract_strided_slice %189 {offsets = [0, 1], sizes = [24, 1], strides = [1, 1]} : vector<24x16xbf16> to vector<24x1xbf16>
    %193 = vector.extract_strided_slice %189 {offsets = [0, 14], sizes = [24, 1], strides = [1, 1]} : vector<24x16xbf16> to vector<24x1xbf16>
    %194 = vector.extract_strided_slice %189 {offsets = [0, 13], sizes = [24, 1], strides = [1, 1]} : vector<24x16xbf16> to vector<24x1xbf16>
    %195 = vector.extract_strided_slice %189 {offsets = [0, 12], sizes = [24, 1], strides = [1, 1]} : vector<24x16xbf16> to vector<24x1xbf16>
    %196 = tpu.concatenate %190, %191, %192, %189, %193, %194, %195 in 1 : vector<24x1xbf16>, vector<24x1xbf16>, vector<24x1xbf16>, vector<24x16xbf16>, vector<24x1xbf16>, vector<24x1xbf16>, vector<24x1xbf16> -> vector<24x22xbf16>
    %197 = vector.extract_strided_slice %92 {offsets = [0, 286], sizes = [24, 16], strides = [1, 1]} : vector<24x352xbf16> to vector<24x16xbf16>
    %198 = vector.extract_strided_slice %197 {offsets = [0, 3], sizes = [24, 1], strides = [1, 1]} : vector<24x16xbf16> to vector<24x1xbf16>
    %199 = vector.extract_strided_slice %197 {offsets = [0, 2], sizes = [24, 1], strides = [1, 1]} : vector<24x16xbf16> to vector<24x1xbf16>
    %200 = vector.extract_strided_slice %197 {offsets = [0, 1], sizes = [24, 1], strides = [1, 1]} : vector<24x16xbf16> to vector<24x1xbf16>
    %201 = vector.extract_strided_slice %197 {offsets = [0, 14], sizes = [24, 1], strides = [1, 1]} : vector<24x16xbf16> to vector<24x1xbf16>
    %202 = vector.extract_strided_slice %197 {offsets = [0, 13], sizes = [24, 1], strides = [1, 1]} : vector<24x16xbf16> to vector<24x1xbf16>
    %203 = vector.extract_strided_slice %197 {offsets = [0, 12], sizes = [24, 1], strides = [1, 1]} : vector<24x16xbf16> to vector<24x1xbf16>
    %204 = tpu.concatenate %198, %199, %200, %197, %201, %202, %203 in 1 : vector<24x1xbf16>, vector<24x1xbf16>, vector<24x1xbf16>, vector<24x16xbf16>, vector<24x1xbf16>, vector<24x1xbf16>, vector<24x1xbf16> -> vector<24x22xbf16>
    %205 = vector.extract_strided_slice %92 {offsets = [0, 308], sizes = [24, 16], strides = [1, 1]} : vector<24x352xbf16> to vector<24x16xbf16>
    %206 = vector.extract_strided_slice %205 {offsets = [0, 3], sizes = [24, 1], strides = [1, 1]} : vector<24x16xbf16> to vector<24x1xbf16>
    %207 = vector.extract_strided_slice %205 {offsets = [0, 2], sizes = [24, 1], strides = [1, 1]} : vector<24x16xbf16> to vector<24x1xbf16>
    %208 = vector.extract_strided_slice %205 {offsets = [0, 1], sizes = [24, 1], strides = [1, 1]} : vector<24x16xbf16> to vector<24x1xbf16>
    %209 = vector.extract_strided_slice %205 {offsets = [0, 14], sizes = [24, 1], strides = [1, 1]} : vector<24x16xbf16> to vector<24x1xbf16>
    %210 = vector.extract_strided_slice %205 {offsets = [0, 13], sizes = [24, 1], strides = [1, 1]} : vector<24x16xbf16> to vector<24x1xbf16>
    %211 = vector.extract_strided_slice %205 {offsets = [0, 12], sizes = [24, 1], strides = [1, 1]} : vector<24x16xbf16> to vector<24x1xbf16>
    %212 = tpu.concatenate %206, %207, %208, %205, %209, %210, %211 in 1 : vector<24x1xbf16>, vector<24x1xbf16>, vector<24x1xbf16>, vector<24x16xbf16>, vector<24x1xbf16>, vector<24x1xbf16>, vector<24x1xbf16> -> vector<24x22xbf16>
    %213 = vector.extract_strided_slice %92 {offsets = [0, 330], sizes = [24, 16], strides = [1, 1]} : vector<24x352xbf16> to vector<24x16xbf16>
    %214 = vector.extract_strided_slice %213 {offsets = [0, 3], sizes = [24, 1], strides = [1, 1]} : vector<24x16xbf16> to vector<24x1xbf16>
    %215 = vector.extract_strided_slice %213 {offsets = [0, 2], sizes = [24, 1], strides = [1, 1]} : vector<24x16xbf16> to vector<24x1xbf16>
    %216 = vector.extract_strided_slice %213 {offsets = [0, 1], sizes = [24, 1], strides = [1, 1]} : vector<24x16xbf16> to vector<24x1xbf16>
    %217 = vector.extract_strided_slice %213 {offsets = [0, 14], sizes = [24, 1], strides = [1, 1]} : vector<24x16xbf16> to vector<24x1xbf16>
    %218 = vector.extract_strided_slice %213 {offsets = [0, 13], sizes = [24, 1], strides = [1, 1]} : vector<24x16xbf16> to vector<24x1xbf16>
    %219 = vector.extract_strided_slice %213 {offsets = [0, 12], sizes = [24, 1], strides = [1, 1]} : vector<24x16xbf16> to vector<24x1xbf16>
    %220 = tpu.concatenate %214, %215, %216, %213, %217, %218, %219 in 1 : vector<24x1xbf16>, vector<24x1xbf16>, vector<24x1xbf16>, vector<24x16xbf16>, vector<24x1xbf16>, vector<24x1xbf16>, vector<24x1xbf16> -> vector<24x22xbf16>
    %221 = tpu.concatenate %124, %116, %108, %100, %108, %116, %124, %132, %140, %148, %156, %164, %172, %180, %188, %196 in 1 : vector<24x22xbf16>, vector<24x22xbf16>, vector<24x22xbf16>, vector<24x22xbf16>, vector<24x22xbf16>, vector<24x22xbf16>, vector<24x22xbf16>, vector<24x22xbf16>, vector<24x22xbf16>, vector<24x22xbf16>, vector<24x22xbf16>, vector<24x22xbf16>, vector<24x22xbf16>, vector<24x22xbf16>, vector<24x22xbf16>, vector<24x22xbf16> -> vector<24x352xbf16>
    %222 = tpu.concatenate %204, %212, %220, %212, %204, %196, %100 in 1 : vector<24x22xbf16>, vector<24x22xbf16>, vector<24x22xbf16>, vector<24x22xbf16>, vector<24x22xbf16>, vector<24x22xbf16>, vector<24x22xbf16> -> vector<24x154xbf16>
    %223 = tpu.concatenate %221, %222 in 1 : vector<24x352xbf16>, vector<24x154xbf16> -> vector<24x506xbf16>
    %224 = vector.extract_strided_slice %223 {offsets = [0, 0], sizes = [24, 352], strides = [1, 1]} : vector<24x506xbf16> to vector<24x352xbf16>
    %225 = vector.extract_strided_slice %223 {offsets = [0, 1], sizes = [24, 352], strides = [1, 1]} : vector<24x506xbf16> to vector<24x352xbf16>
    %226 = vector.extract_strided_slice %223 {offsets = [0, 2], sizes = [24, 352], strides = [1, 1]} : vector<24x506xbf16> to vector<24x352xbf16>
    %227 = vector.extract_strided_slice %223 {offsets = [0, 3], sizes = [24, 352], strides = [1, 1]} : vector<24x506xbf16> to vector<24x352xbf16>
    %228 = vector.extract_strided_slice %223 {offsets = [0, 4], sizes = [24, 352], strides = [1, 1]} : vector<24x506xbf16> to vector<24x352xbf16>
    %229 = vector.extract_strided_slice %223 {offsets = [0, 5], sizes = [24, 352], strides = [1, 1]} : vector<24x506xbf16> to vector<24x352xbf16>
    %230 = vector.extract_strided_slice %223 {offsets = [0, 6], sizes = [24, 352], strides = [1, 1]} : vector<24x506xbf16> to vector<24x352xbf16>
    %231 = vector.extract_strided_slice %223 {offsets = [0, 22], sizes = [24, 352], strides = [1, 1]} : vector<24x506xbf16> to vector<24x352xbf16>
    %232 = vector.extract_strided_slice %223 {offsets = [0, 23], sizes = [24, 352], strides = [1, 1]} : vector<24x506xbf16> to vector<24x352xbf16>
    %233 = vector.extract_strided_slice %223 {offsets = [0, 24], sizes = [24, 352], strides = [1, 1]} : vector<24x506xbf16> to vector<24x352xbf16>
    %234 = vector.extract_strided_slice %223 {offsets = [0, 25], sizes = [24, 352], strides = [1, 1]} : vector<24x506xbf16> to vector<24x352xbf16>
    %235 = vector.extract_strided_slice %223 {offsets = [0, 26], sizes = [24, 352], strides = [1, 1]} : vector<24x506xbf16> to vector<24x352xbf16>
    %236 = vector.extract_strided_slice %223 {offsets = [0, 27], sizes = [24, 352], strides = [1, 1]} : vector<24x506xbf16> to vector<24x352xbf16>
    %237 = vector.extract_strided_slice %223 {offsets = [0, 28], sizes = [24, 352], strides = [1, 1]} : vector<24x506xbf16> to vector<24x352xbf16>
    %238 = vector.extract_strided_slice %223 {offsets = [0, 44], sizes = [24, 352], strides = [1, 1]} : vector<24x506xbf16> to vector<24x352xbf16>
    %239 = vector.extract_strided_slice %223 {offsets = [0, 45], sizes = [24, 352], strides = [1, 1]} : vector<24x506xbf16> to vector<24x352xbf16>
    %240 = vector.extract_strided_slice %223 {offsets = [0, 46], sizes = [24, 352], strides = [1, 1]} : vector<24x506xbf16> to vector<24x352xbf16>
    %241 = vector.extract_strided_slice %223 {offsets = [0, 47], sizes = [24, 352], strides = [1, 1]} : vector<24x506xbf16> to vector<24x352xbf16>
    %242 = vector.extract_strided_slice %223 {offsets = [0, 48], sizes = [24, 352], strides = [1, 1]} : vector<24x506xbf16> to vector<24x352xbf16>
    %243 = vector.extract_strided_slice %223 {offsets = [0, 49], sizes = [24, 352], strides = [1, 1]} : vector<24x506xbf16> to vector<24x352xbf16>
    %244 = vector.extract_strided_slice %223 {offsets = [0, 50], sizes = [24, 352], strides = [1, 1]} : vector<24x506xbf16> to vector<24x352xbf16>
    %245 = vector.extract_strided_slice %223 {offsets = [0, 66], sizes = [24, 352], strides = [1, 1]} : vector<24x506xbf16> to vector<24x352xbf16>
    %246 = vector.extract_strided_slice %223 {offsets = [0, 67], sizes = [24, 352], strides = [1, 1]} : vector<24x506xbf16> to vector<24x352xbf16>
    %247 = vector.extract_strided_slice %223 {offsets = [0, 68], sizes = [24, 352], strides = [1, 1]} : vector<24x506xbf16> to vector<24x352xbf16>
    %248 = vector.extract_strided_slice %223 {offsets = [0, 69], sizes = [24, 352], strides = [1, 1]} : vector<24x506xbf16> to vector<24x352xbf16>
    %249 = vector.extract_strided_slice %223 {offsets = [0, 70], sizes = [24, 352], strides = [1, 1]} : vector<24x506xbf16> to vector<24x352xbf16>
    %250 = vector.extract_strided_slice %223 {offsets = [0, 71], sizes = [24, 352], strides = [1, 1]} : vector<24x506xbf16> to vector<24x352xbf16>
    %251 = vector.extract_strided_slice %223 {offsets = [0, 72], sizes = [24, 352], strides = [1, 1]} : vector<24x506xbf16> to vector<24x352xbf16>
    %252 = vector.extract_strided_slice %223 {offsets = [0, 88], sizes = [24, 352], strides = [1, 1]} : vector<24x506xbf16> to vector<24x352xbf16>
    %253 = vector.extract_strided_slice %223 {offsets = [0, 89], sizes = [24, 352], strides = [1, 1]} : vector<24x506xbf16> to vector<24x352xbf16>
    %254 = vector.extract_strided_slice %223 {offsets = [0, 90], sizes = [24, 352], strides = [1, 1]} : vector<24x506xbf16> to vector<24x352xbf16>
    %255 = vector.extract_strided_slice %223 {offsets = [0, 91], sizes = [24, 352], strides = [1, 1]} : vector<24x506xbf16> to vector<24x352xbf16>
    %256 = vector.extract_strided_slice %223 {offsets = [0, 92], sizes = [24, 352], strides = [1, 1]} : vector<24x506xbf16> to vector<24x352xbf16>
    %257 = vector.extract_strided_slice %223 {offsets = [0, 93], sizes = [24, 352], strides = [1, 1]} : vector<24x506xbf16> to vector<24x352xbf16>
    %258 = vector.extract_strided_slice %223 {offsets = [0, 94], sizes = [24, 352], strides = [1, 1]} : vector<24x506xbf16> to vector<24x352xbf16>
    %259 = vector.extract_strided_slice %223 {offsets = [0, 110], sizes = [24, 352], strides = [1, 1]} : vector<24x506xbf16> to vector<24x352xbf16>
    %260 = vector.extract_strided_slice %223 {offsets = [0, 111], sizes = [24, 352], strides = [1, 1]} : vector<24x506xbf16> to vector<24x352xbf16>
    %261 = vector.extract_strided_slice %223 {offsets = [0, 112], sizes = [24, 352], strides = [1, 1]} : vector<24x506xbf16> to vector<24x352xbf16>
    %262 = vector.extract_strided_slice %223 {offsets = [0, 113], sizes = [24, 352], strides = [1, 1]} : vector<24x506xbf16> to vector<24x352xbf16>
    %263 = vector.extract_strided_slice %223 {offsets = [0, 114], sizes = [24, 352], strides = [1, 1]} : vector<24x506xbf16> to vector<24x352xbf16>
    %264 = vector.extract_strided_slice %223 {offsets = [0, 115], sizes = [24, 352], strides = [1, 1]} : vector<24x506xbf16> to vector<24x352xbf16>
    %265 = vector.extract_strided_slice %223 {offsets = [0, 116], sizes = [24, 352], strides = [1, 1]} : vector<24x506xbf16> to vector<24x352xbf16>
    %266 = vector.extract_strided_slice %223 {offsets = [0, 132], sizes = [24, 352], strides = [1, 1]} : vector<24x506xbf16> to vector<24x352xbf16>
    %267 = vector.extract_strided_slice %223 {offsets = [0, 133], sizes = [24, 352], strides = [1, 1]} : vector<24x506xbf16> to vector<24x352xbf16>
    %268 = vector.extract_strided_slice %223 {offsets = [0, 134], sizes = [24, 352], strides = [1, 1]} : vector<24x506xbf16> to vector<24x352xbf16>
    %269 = vector.extract_strided_slice %223 {offsets = [0, 135], sizes = [24, 352], strides = [1, 1]} : vector<24x506xbf16> to vector<24x352xbf16>
    %270 = vector.extract_strided_slice %223 {offsets = [0, 136], sizes = [24, 352], strides = [1, 1]} : vector<24x506xbf16> to vector<24x352xbf16>
    %271 = vector.extract_strided_slice %223 {offsets = [0, 137], sizes = [24, 352], strides = [1, 1]} : vector<24x506xbf16> to vector<24x352xbf16>
    %272 = vector.extract_strided_slice %223 {offsets = [0, 138], sizes = [24, 352], strides = [1, 1]} : vector<24x506xbf16> to vector<24x352xbf16>
    %273 = tpu.concatenate %224, %225, %226, %227, %228, %229, %230, %231, %232, %233, %234, %235, %236, %237, %238, %239 in 0 : vector<24x352xbf16>, vector<24x352xbf16>, vector<24x352xbf16>, vector<24x352xbf16>, vector<24x352xbf16>, vector<24x352xbf16>, vector<24x352xbf16>, vector<24x352xbf16>, vector<24x352xbf16>, vector<24x352xbf16>, vector<24x352xbf16>, vector<24x352xbf16>, vector<24x352xbf16>, vector<24x352xbf16>, vector<24x352xbf16>, vector<24x352xbf16> -> vector<384x352xbf16>
    %274 = tpu.concatenate %240, %241, %242, %243, %244, %245, %246, %247, %248, %249, %250, %251, %252, %253, %254, %255 in 0 : vector<24x352xbf16>, vector<24x352xbf16>, vector<24x352xbf16>, vector<24x352xbf16>, vector<24x352xbf16>, vector<24x352xbf16>, vector<24x352xbf16>, vector<24x352xbf16>, vector<24x352xbf16>, vector<24x352xbf16>, vector<24x352xbf16>, vector<24x352xbf16>, vector<24x352xbf16>, vector<24x352xbf16>, vector<24x352xbf16>, vector<24x352xbf16> -> vector<384x352xbf16>
    %275 = tpu.concatenate %256, %257, %258, %259, %260, %261, %262, %263, %264, %265, %266, %267, %268, %269, %270, %271 in 0 : vector<24x352xbf16>, vector<24x352xbf16>, vector<24x352xbf16>, vector<24x352xbf16>, vector<24x352xbf16>, vector<24x352xbf16>, vector<24x352xbf16>, vector<24x352xbf16>, vector<24x352xbf16>, vector<24x352xbf16>, vector<24x352xbf16>, vector<24x352xbf16>, vector<24x352xbf16>, vector<24x352xbf16>, vector<24x352xbf16>, vector<24x352xbf16> -> vector<384x352xbf16>
    %276 = tpu.concatenate %273, %274, %275, %272 in 0 : vector<384x352xbf16>, vector<384x352xbf16>, vector<384x352xbf16>, vector<24x352xbf16> -> vector<1176x352xbf16>
    %c0_16 = arith.constant 0 : index
    %c0_17 = arith.constant 0 : index
    %277 = vector.load %arg3[%c0_16, %c0_17] : memref<24x1176xbf16, #tpu.memory_space<vmem>>, vector<24x1176xbf16>
    %cst_18 = arith.constant dense<0.000000e+00> : vector<24x352xf32>
    %278 = tpu.matmul %277, %276, %cst_18 {dimension_numbers = #tpu.dot_dimension_numbers<[1], [0], [0], [1], [0, 0, 1, 1], [], []>} : vector<24x1176xbf16>, vector<1176x352xbf16>, vector<24x352xf32> -> vector<24x352xf32>
    %279 = vector.extract_strided_slice %1 {offsets = [0, 2], sizes = [24, 1], strides = [1, 1]} : vector<24x4xf32> to vector<24x1xf32>
    %280 = vector.extract_strided_slice %1 {offsets = [0, 3], sizes = [24, 1], strides = [1, 1]} : vector<24x4xf32> to vector<24x1xf32>
    %281 = vector.broadcast %0 : vector<1x352xf32> to vector<24x352xf32>
    %282 = arith.mulf %278, %281 : vector<24x352xf32>
    %cst_19 = arith.constant dense<0.000000e+00> : vector<24xf32>
    %283 = vector.multi_reduction <add>, %282, %cst_19 [1] : vector<24x352xf32> to vector<24xf32>
    %284 = vector.shape_cast %283 : vector<24xf32> to vector<24x1xf32>
    %cst_20 = arith.constant 3.906250e-03 : f32
    %285 = vector.broadcast %cst_20 : f32 to vector<24x1xf32>
    %286 = arith.mulf %284, %285 : vector<24x1xf32>
    %287 = arith.mulf %282, %278 : vector<24x352xf32>
    %cst_21 = arith.constant dense<0.000000e+00> : vector<24xf32>
    %288 = vector.multi_reduction <add>, %287, %cst_21 [1] : vector<24x352xf32> to vector<24xf32>
    %289 = vector.shape_cast %288 : vector<24xf32> to vector<24x1xf32>
    %cst_22 = arith.constant 3.906250e-03 : f32
    %290 = vector.broadcast %cst_22 : f32 to vector<24x1xf32>
    %291 = arith.mulf %289, %290 : vector<24x1xf32>
    %292 = arith.mulf %286, %286 : vector<24x1xf32>
    %293 = arith.subf %291, %292 : vector<24x1xf32>
    %cst_23 = arith.constant 0.000000e+00 : f32
    %294 = vector.broadcast %cst_23 : f32 to vector<24x1xf32>
    %295 = arith.maximumf %293, %294 : vector<24x1xf32>
    %296 = vector.broadcast %286 : vector<24x1xf32> to vector<24x352xf32>
    %297 = arith.subf %278, %296 : vector<24x352xf32>
    %cst_24 = arith.constant 9.99999974E-6 : f32
    %298 = vector.broadcast %cst_24 : f32 to vector<24x1xf32>
    %299 = arith.addf %295, %298 : vector<24x1xf32>
    %300 = math.rsqrt %299 : vector<24x1xf32>
    %301 = vector.broadcast %300 : vector<24x1xf32> to vector<24x352xf32>
    %302 = arith.mulf %297, %301 : vector<24x352xf32>
    %303 = vector.broadcast %279 : vector<24x1xf32> to vector<24x352xf32>
    %304 = arith.mulf %302, %303 : vector<24x352xf32>
    %305 = vector.broadcast %280 : vector<24x1xf32> to vector<24x352xf32>
    %306 = arith.addf %304, %305 : vector<24x352xf32>
    %cst_25 = arith.constant 0.000000e+00 : f32
    %307 = vector.broadcast %cst_25 : f32 to vector<24x352xf32>
    %308 = arith.cmpf oge, %306, %307 : vector<24x352xf32>
    %cst_26 = arith.constant 2.000000e-01 : f32
    %309 = vector.broadcast %cst_26 : f32 to vector<24x352xf32>
    %310 = arith.mulf %309, %306 : vector<24x352xf32>
    %311 = arith.select %308, %306, %310 : vector<24x352xi1>, vector<24x352xf32>
    %c0_27 = arith.constant 0 : index
    %c0_28 = arith.constant 0 : index
    %c0_29 = arith.constant 0 : index
    %312 = vector.load %arg6[%c0_27, %c0_28, %c0_29] : memref<1x24x352xf32, #tpu.memory_space<vmem>>, vector<1x24x352xf32>
    %313 = vector.shape_cast %312 : vector<1x24x352xf32> to vector<24x352xf32>
    %314 = vector.shape_cast %311 : vector<24x352xf32> to vector<1x24x352xf32>
    tpu.vector_store %arg6[%c0_27, %c0_28, %c0_29], %314 {strides = array<i32>} : memref<1x24x352xf32, #tpu.memory_space<vmem>>, vector<1x24x352xf32>,
    return
  }
  func.func @transform_0(%arg0: i32) -> (i32, i32, i32) {
    %c0_i32 = arith.constant 0 : i32
    %c0_i32_0 = arith.constant 0 : i32
    %c0_i32_1 = arith.constant 0 : i32
    return %arg0, %c0_i32, %c0_i32_0 : i32, i32, i32
  }
  func.func @transform_1(%arg0: i32) -> (i32, i32) {
    %c0_i32 = arith.constant 0 : i32
    %c0_i32_0 = arith.constant 0 : i32
    %c0_i32_1 = arith.constant 0 : i32
    return %c0_i32, %c0_i32_0 : i32, i32
  }
  func.func @transform_2(%arg0: i32) -> (i32, i32) {
    %c0_i32 = arith.constant 0 : i32
    %c0_i32_0 = arith.constant 0 : i32
    %c0_i32_1 = arith.constant 0 : i32
    return %c0_i32, %c0_i32_0 : i32, i32
  }
  func.func @transform_3(%arg0: i32) -> (i32, i32) {
    %c0_i32 = arith.constant 0 : i32
    %c0_i32_0 = arith.constant 0 : i32
    %c0_i32_1 = arith.constant 0 : i32
    return %c0_i32, %c0_i32_0 : i32, i32
  }
  func.func @transform_4(%arg0: i32) -> (i32, i32) {
    %c0_i32 = arith.constant 0 : i32
    %c0_i32_0 = arith.constant 0 : i32
    %c0_i32_1 = arith.constant 0 : i32
    return %c0_i32, %c0_i32_0 : i32, i32
  }
  func.func @transform_5(%arg0: i32) -> (i32, i32, i32) {
    %c0_i32 = arith.constant 0 : i32
    %c0_i32_0 = arith.constant 0 : i32
    %c0_i32_1 = arith.constant 0 : i32
    return %arg0, %c0_i32, %c0_i32_0 : i32, i32, i32
  }
}

</mosaic_0001>

<llo_original>
// kernel: tpu_custom_call.1
$region0: #{tpu_custom_call.1}
  #allocation0 [shape = 'u32[]', space=smem, size = 0x4, offset = 0x4, fixed_abs, tag = 'smem constant byte address 0x4 - core index']
  #allocation1 [shape = 'u32[144,128]{1,0:T(1,128)}', space=vmem, size = 0x12000, scoped, tag = 'internal scratch']
  %s0 = inlined_call_operand.hbm [shape: bf16[2,4,506], index: 0, kind: input, shape index: {}]
  %s1 = inlined_call_operand.vmem [shape: bf16[24,196], index: 1, kind: input, shape index: {}]
  %s2 = inlined_call_operand.hbm [shape: bf16[24,1176], index: 2, kind: input, shape index: {}]
  %s3 = inlined_call_operand.vmem [shape: f32[24,4], index: 3, kind: input, shape index: {}]
  %s4 = inlined_call_operand.vmem [shape: f32[1,352], index: 4, kind: input, shape index: {}]
  %s5 = inlined_call_operand.hbm [shape: f32[2,24,352], index: 5, kind: output, shape index: {}]
  %s6 = sld [smem:[#allocation0]]
  $region61: #{tpu_custom_call.1} parent=0
    _
  %s8 = ssub.s32 1, %s6
  %s9 = scalar_select 0, %s8, %s6
  $region1: #{tpu_custom_call.1} parent=0
    #allocation2 [shape = 'u8[8192]{0}', space=vmem, size = 0x2000, scoped, tag = 'input window, operand 0']
    #allocation3 [shape = 's32[2]{0}', space=sflag, size = 0x8, scoped, tag = 'scoped memory for tpu_custom_call.1']
    #allocation4 [shape = 's32[2]{0}', space=sflag, size = 0x8, scoped, tag = 'scoped memory for tpu_custom_call.1']
    #allocation5 [shape = 'u8[61440]{0}', space=vmem, size = 0xf000, scoped, tag = 'input window, operand 2, single buffered']
    #allocation6 [shape = 's32[1]{0}', space=sflag, size = 0x4, scoped, tag = 'scoped memory for tpu_custom_call.1']
    #allocation7 [shape = 'u8[73728]{0}', space=vmem, size = 0x12000, scoped, tag = 'output window, operand 0']
    %10 = vsyncpa [#allocation3], 0
    %s11 = scalar_lea.sflag [#allocation3], 1
    %12 = vsyncpa %s11, 0
    %13 = vsyncpa [#allocation6], 0
    %14 = vsyncpa [#allocation4], 0
    %s15 = scalar_lea.sflag [#allocation4], 1
    %16 = vsyncpa %s15, 0
    loop: start=0, step=1, limit=4
    $region2: #{tpu_custom_call.1} parent=1 // loop_pre_header
      _
    $region3: #{tpu_custom_call.1} parent=1 // loop_header
      %s18 = sphi 0, %s22
      %p19 = scmp.ge.s32.totalorder %s18, 4
      %s28 = sphi 0, %s30
      %s31 = sphi 0, %s28
      %s32 = sphi 0, %s31
      %s48 = sphi 0, %s32
      %s52 = sphi 0, %s52
      %s54 = sphi 0, %s52
      %s55 = sphi 0, %s54
      %s69 = sphi 0, %s55
      %s73 = sphi 0, %s73
      %s75 = sphi 0, %s73
      %s76 = sphi 0, %s75
      %s90 = sphi 0, %s76
      %s94 = sphi 0, %s94
      %s96 = sphi 0, %s94
      %s97 = sphi 0, %s96
      %s111 = sphi 0, %s97
      %s115 = sphi 0, %s115
      %s117 = sphi 0, %s115
      %s118 = sphi 0, %s117
      %s132 = sphi 0, %s118
      %s138 = sphi 0, %s140
      %s141 = sphi 0, %s138
      %s142 = sphi 0, %s141
      %s158 = sphi 0, %s142
    $region4: #{tpu_custom_call.1} parent=1 // loop_header_branch
      %21 = sbr.rel (%p19) target = $region8
    $region5: #{tpu_custom_call.1} parent=1 // loop_body
      %s23 = ssub.s32 %s18, 1
      %s24 = ssub.s32 %s18, 2
      %s25 = sadd.s32 %s18, 1
      %s26 = ssub.s32 %s18, %s25
      %p27 = scmp.eq.s32.totalorder %s26, 0
      %s29 = sadd.s32 %s28, 1
      %s30 = scalar_select %p27, %s28, %s29
      %p33 = pneg %p27
      %p34 = scmp.eq.s32.totalorder %s18, 1
      %p35 = por %p33, %p34
      %p36 = scmp.ne.s32.totalorder %s28, %s31
      %p37 = scmp.eq.s32.totalorder %s18, 0
      %p38 = por %p36, %p37
      %p39 = scmp.ne.s32.totalorder %s28, %s31
      %p40 = scmp.eq.s32.totalorder %s23, 1
      %p41 = por %p39, %p40
      %p42 = scmp.ne.s32.totalorder %s31, %s32
      %p43 = scmp.eq.s32.totalorder %s23, 0
      %p44 = por %p42, %p43
      %p45 = scmp.ne.s32.totalorder %s31, %s32
      %p46 = scmp.eq.s32.totalorder %s24, 1
      %p47 = por %p45, %p46
      %p49 = scmp.ne.s32.totalorder %s32, %s48
      %p50 = scmp.eq.s32.totalorder %s24, 0
      %p51 = por %p49, %p50
      %s53 = sadd.s32 %s52, 1
      %p56 = scmp.eq.s32.totalorder %s18, 1
      %p57 = scmp.ne.s32.totalorder %s52, %s54
      %p58 = scmp.eq.s32.totalorder %s18, 0
      %p59 = por %p57, %p58
      %p60 = scmp.ne.s32.totalorder %s52, %s54
      %p61 = scmp.eq.s32.totalorder %s23, 1
      %p62 = por %p60, %p61
      %p63 = scmp.ne.s32.totalorder %s54, %s55
      %p64 = scmp.eq.s32.totalorder %s23, 0
      %p65 = por %p63, %p64
      %p66 = scmp.ne.s32.totalorder %s54, %s55
      %p67 = scmp.eq.s32.totalorder %s24, 1
      %p68 = por %p66, %p67
      %p70 = scmp.ne.s32.totalorder %s55, %s69
      %p71 = scmp.eq.s32.totalorder %s24, 0
      %p72 = por %p70, %p71
      %s74 = sadd.s32 %s73, 1
      %p77 = scmp.eq.s32.totalorder %s18, 1
      %p78 = scmp.ne.s32.totalorder %s73, %s75
      %p79 = scmp.eq.s32.totalorder %s18, 0
      %p80 = por %p78, %p79
      %p81 = scmp.ne.s32.totalorder %s73, %s75
      %p82 = scmp.eq.s32.totalorder %s23, 1
      %p83 = por %p81, %p82
      %p84 = scmp.ne.s32.totalorder %s75, %s76
      %p85 = scmp.eq.s32.totalorder %s23, 0
      %p86 = por %p84, %p85
      %p87 = scmp.ne.s32.totalorder %s75, %s76
      %p88 = scmp.eq.s32.totalorder %s24, 1
      %p89 = por %p87, %p88
      %p91 = scmp.ne.s32.totalorder %s76, %s90
      %p92 = scmp.eq.s32.totalorder %s24, 0
      %p93 = por %p91, %p92
      %s95 = sadd.s32 %s94, 1
      %p98 = scmp.eq.s32.totalorder %s18, 1
      %p99 = scmp.ne.s32.totalorder %s94, %s96
      %p100 = scmp.eq.s32.totalorder %s18, 0
      %p101 = por %p99, %p100
      %p102 = scmp.ne.s32.totalorder %s94, %s96
      %p103 = scmp.eq.s32.totalorder %s23, 1
      %p104 = por %p102, %p103
      %p105 = scmp.ne.s32.totalorder %s96, %s97
      %p106 = scmp.eq.s32.totalorder %s23, 0
      %p107 = por %p105, %p106
      %p108 = scmp.ne.s32.totalorder %s96, %s97
      %p109 = scmp.eq.s32.totalorder %s24, 1
      %p110 = por %p108, %p109
      %p112 = scmp.ne.s32.totalorder %s97, %s111
      %p113 = scmp.eq.s32.totalorder %s24, 0
      %p114 = por %p112, %p113
      %s116 = sadd.s32 %s115, 1
      %p119 = scmp.eq.s32.totalorder %s18, 1
      %p120 = scmp.ne.s32.totalorder %s115, %s117
      %p121 = scmp.eq.s32.totalorder %s18, 0
      %p122 = por %p120, %p121
      %p123 = scmp.ne.s32.totalorder %s115, %s117
      %p124 = scmp.eq.s32.totalorder %s23, 1
      %p125 = por %p123, %p124
      %p126 = scmp.ne.s32.totalorder %s117, %s118
      %p127 = scmp.eq.s32.totalorder %s23, 0
      %p128 = por %p126, %p127
      %p129 = scmp.ne.s32.totalorder %s117, %s118
      %p130 = scmp.eq.s32.totalorder %s24, 1
      %p131 = por %p129, %p130
      %p133 = scmp.ne.s32.totalorder %s118, %s132
      %p134 = scmp.eq.s32.totalorder %s24, 0
      %p135 = por %p133, %p134
      %s136 = ssub.s32 %s18, %s25
      %p137 = scmp.eq.s32.totalorder %s136, 0
      %s139 = sadd.s32 %s138, 1
      %s140 = scalar_select %p137, %s138, %s139
      %p143 = pneg %p137
      %p144 = scmp.eq.s32.totalorder %s18, 1
      %p145 = por %p143, %p144
      %p146 = scmp.ne.s32.totalorder %s138, %s141
      %p147 = scmp.eq.s32.totalorder %s18, 0
      %p148 = por %p146, %p147
      %p149 = scmp.ne.s32.totalorder %s138, %s141
      %p150 = scmp.eq.s32.totalorder %s23, 1
      %p151 = por %p149, %p150
      %p152 = scmp.ne.s32.totalorder %s141, %s142
      %p153 = scmp.eq.s32.totalorder %s23, 0
      %p154 = por %p152, %p153
      %p155 = scmp.ne.s32.totalorder %s141, %s142
      %p156 = scmp.eq.s32.totalorder %s24, 1
      %p157 = por %p155, %p156
      %p159 = scmp.ne.s32.totalorder %s142, %s158
      %p160 = scmp.eq.s32.totalorder %s24, 0
      %p161 = por %p159, %p160
      %p162 = scmp.le.s32.totalorder 1, %s18
      %p163 = scmp.lt.s32.totalorder %s18, 3
      %p164 = pnand %p162, %p163
      %p165 = pneg %p164
      // Predicated region
      $region9: #{tpu_custom_call.1} parent=5 // pred_check
        _
      $region10: #{tpu_custom_call.1} parent=5 // pred_check_branch
        %167 = sbr.rel (%p164) target = $region12
      $region11: #{tpu_custom_call.1} parent=5 // pred_region
        %s168 = ssub.s32 %s18, 1
        // Predicated region
        $region13: #{tpu_custom_call.1} parent=11 // pred_check
          %p169 = pneg %p65
        $region14: #{tpu_custom_call.1} parent=11 // pred_check_branch
          %171 = sbr.rel (%p169) target = $region16
        $region15: #{tpu_custom_call.1} parent=11 // pred_region
          _
        $region16: #{tpu_custom_call.1} parent=11 // pred_fallthru
          _
        // Predicated region
        $region17: #{tpu_custom_call.1} parent=11 // pred_check
          %p172 = pneg %p86
        $region18: #{tpu_custom_call.1} parent=11 // pred_check_branch
          %174 = sbr.rel (%p172) target = $region20
        $region19: #{tpu_custom_call.1} parent=11 // pred_region
          %s176 = ssub.s32 1920, 1920
          %177 = vsyncadd [#allocation6], %s176
          %s178 = sshll.u32 [#allocation5], 4
          %s179 = int_to_ptr.vmem [resolvable:$true] %s178
          %184 = dma.hbm_to_vmem [thread:$0]  %s2, 1920, %s179, [#allocation6], 640, 640, 40
        $region20: #{tpu_custom_call.1} parent=11 // pred_fallthru
          _
        // Predicated region
        $region21: #{tpu_custom_call.1} parent=11 // pred_check
          %p185 = pneg %p107
        $region22: #{tpu_custom_call.1} parent=11 // pred_check_branch
          %187 = sbr.rel (%p185) target = $region24
        $region23: #{tpu_custom_call.1} parent=11 // pred_region
          _
        $region24: #{tpu_custom_call.1} parent=11 // pred_fallthru
          _
        // Predicated region
        $region25: #{tpu_custom_call.1} parent=11 // pred_check
          %p188 = pneg %p128
        $region26: #{tpu_custom_call.1} parent=11 // pred_check_branch
          %190 = sbr.rel (%p188) target = $region28
        $region27: #{tpu_custom_call.1} parent=11 // pred_region
          _
        $region28: #{tpu_custom_call.1} parent=11 // pred_fallthru
          _
      $region12: #{tpu_custom_call.1} parent=5 // pred_fallthru
        _
      %p191 = scmp.lt.s32.totalorder %s18, 2
      // Predicated region
      $region29: #{tpu_custom_call.1} parent=5 // pred_check
        %p192 = pneg %p191
      $region30: #{tpu_custom_call.1} parent=5 // pred_check_branch
        %194 = sbr.rel (%p192) target = $region32
      $region31: #{tpu_custom_call.1} parent=5 // pred_region
        // Predicated region
        $region33: #{tpu_custom_call.1} parent=31 // pred_check
          %p195 = pneg %p38
        $region34: #{tpu_custom_call.1} parent=31 // pred_check_branch
          %197 = sbr.rel (%p195) target = $region36
        $region35: #{tpu_custom_call.1} parent=31 // pred_region
          %s198 = sand.u32 %s28, 1
          %s199 = scalar_lea.sflag [#allocation3], %s198
          %s200 = sand.u32 %s28, 1
          %s201 = smul.addr %s200, 8
          %s202 = scalar_lea.vmem [#allocation2], %s201
          %s204 = ssub.s32 128, 128
          %205 = vsyncadd %s199, %s204
          %s206 = smul.addr %s18, 4
          %s207 = smul.addr %s206, 32
          %s208 = scalar_lea.hbm %s0, %s207
          %s210 = sshll.u32 %s202, 4
          %s211 = int_to_ptr.vmem [resolvable:$true] %s210
          %213 = dma.hbm_to_vmem [thread:$0]  %s208, 128, %s211, %s199
        $region36: #{tpu_custom_call.1} parent=31 // pred_fallthru
          _
      $region32: #{tpu_custom_call.1} parent=5 // pred_fallthru
        _
      %p214 = scmp.le.s32.totalorder 1, %s18
      %p215 = scmp.lt.s32.totalorder %s18, 3
      %p216 = pnand %p214, %p215
      %p217 = pneg %p216
      // Predicated region
      $region37: #{tpu_custom_call.1} parent=5 // pred_check
        _
      $region38: #{tpu_custom_call.1} parent=5 // pred_check_branch
        %219 = sbr.rel (%p216) target = $region40
      $region39: #{tpu_custom_call.1} parent=5 // pred_region
        %s220 = ssub.s32 %s18, 1
        %s221 = sand.u32 %s31, 1
        %s222 = scalar_lea.sflag [#allocation3], %s221
        %s223 = sand.u32 %s31, 1
        %s224 = smul.addr %s223, 8
        %s225 = scalar_lea.vmem [#allocation2], %s224
        // Predicated region
        $region41: #{tpu_custom_call.1} parent=39 // pred_check
          %p226 = pneg %p44
        $region42: #{tpu_custom_call.1} parent=39 // pred_check_branch
          %228 = sbr.rel (%p226) target = $region44
        $region43: #{tpu_custom_call.1} parent=39 // pred_region
          %229 = dma.done %s222, 128
        $region44: #{tpu_custom_call.1} parent=39 // pred_fallthru
          _
        // Predicated region
        $region45: #{tpu_custom_call.1} parent=39 // pred_check
          %p230 = pneg %p86
        $region46: #{tpu_custom_call.1} parent=39 // pred_check_branch
          %232 = sbr.rel (%p230) target = $region48
        $region47: #{tpu_custom_call.1} parent=39 // pred_region
          %233 = dma.done [#allocation6], 1920
        $region48: #{tpu_custom_call.1} parent=39 // pred_fallthru
          _
        %s234 = sand.u32 %s31, 1
        %s235 = scalar_lea.sflag [#allocation3], %s234
        %s236 = sand.u32 %s31, 1
        %s237 = smul.addr %s236, 8
        %s238 = scalar_lea.vmem [#allocation2], %s237
        %p239 = pneg %p44
        %p240 = pneg %p41
        %p241 = pneg %p65
        %p242 = pneg %p62
        %p243 = pneg %p86
        %p244 = pneg %p83
        %p245 = pneg %p107
        %p246 = pneg %p104
        %p247 = pneg %p128
        %p248 = pneg %p125
        %p249 = pneg %p154
        %p250 = pneg %p151
        %s251 = sand.u32 %s141, 1
        %s252 = scalar_lea.sflag [#allocation4], %s251
        %s253 = sand.u32 %s141, 1
        %s254 = smul.addr %s253, 72
        %s255 = scalar_lea.vmem [#allocation7], %s254
        %v257 = vld [vmem:[%s4] sm:$0x7]
        %v258 = vld [vmem:[%s3] sm:$0xff]
        %v259 = vld [vmem:[%s3 + $0x8] sm:$0xff]
        %v260 = vld [vmem:[%s3 + $0x10] sm:$0xff]
        %v261 = vld [vmem:[%s225] sm:$0xff]
        %v263 = vcombine.high %v261, %v261
        %v265 = vunpack.c.l.s4 1983009808
        %v266 = vunpack.c.0.s8 %v265
        %v267 = vlaneseq
        %v268 = vshrl.u32 %v267, 7
        %v269 = vsub.s32 %v266, %v268
        %v270 = vrot.slane %v261, %v269
        %v272 = vunpack.c.l.s4 1983009808
        %v273 = vunpack.c.0.s8 %v272
        %v274 = vlaneseq
        %v275 = vshrl.u32 %v274, 7
        %v276 = vsub.s32 %v273, %v275
        %v277 = vrot.slane %v263, %v276
        %v278 = vcombine.high %v270, %v270
        %v279 = vcombine.low %v261, %v261
        %v281 = vunpack.c.l.s4 1983009808
        %v282 = vunpack.c.0.s8 %v281
        %v283 = vlaneseq
        %v284 = vshrl.u32 %v283, 7
        %v285 = vsub.s32 %v282, %v284
        %v286 = vrot.slane %v279, %v285
        %v287 = vcombine.high %v286, %v286
        %288 = vrot.lane.b32.xlu0 %v286, 127
        %v289 = vpop.permute.xlu0 %288
        %290 = vrot.lane.b32.xlu0 %v287, 127
        %v291 = vpop.permute.xlu0 %290
        %292 = vrot.lane.b32.xlu0 %v270, 127
        %v293 = vpop.permute.xlu0 %292
        %vm294 = vcmask 1039360
        %v295 = vsel %vm294, %v289, %v291
        %v296 = vsel %vm294, %v291, %v293
        %v297 = vcombine.low %v270, %v270
        %v298 = vcombine.low %v277, %v277
        %299 = vrot.lane.b32.xlu0 %v297, 126
        %v300 = vpop.permute.xlu0 %299
        %301 = vrot.lane.b32.xlu0 %v270, 126
        %v302 = vpop.permute.xlu0 %301
        %303 = vrot.lane.b32.xlu0 %v298, 126
        %v304 = vpop.permute.xlu0 %303
        %vm305 = vcmask 1031168
        %v306 = vsel %vm305, %v300, %v302
        %v307 = vsel %vm305, %v302, %v304
        %v308 = vcombine.low %v286, %v286
        %309 = vrot.lane.b32.xlu0 %v308, 125
        %v310 = vpop.permute.xlu0 %309
        %311 = vrot.lane.b32.xlu0 %v286, 125
        %v312 = vpop.permute.xlu0 %311
        %313 = vrot.lane.b32.xlu0 %v297, 125
        %v314 = vpop.permute.xlu0 %313
        %vm315 = vcmask 1022976
        %v316 = vsel %vm315, %v310, %v312
        %v317 = vsel %vm315, %v312, %v314
        %318 = vrot.lane.b32.xlu0 %v270, 124
        %v319 = vpop.permute.xlu0 %318
        %320 = vrot.lane.b32.xlu0 %v278, 124
        %v321 = vpop.permute.xlu0 %320
        %322 = vrot.lane.b32.xlu0 %v277, 124
        %v323 = vpop.permute.xlu0 %322
        %vm324 = vcmask 1014784
        %v325 = vsel %vm324, %v319, %v321
        %v326 = vsel %vm324, %v321, %v323
        %327 = vrot.lane.b32.xlu0 %v286, 123
        %v328 = vpop.permute.xlu0 %327
        %329 = vrot.lane.b32.xlu0 %v287, 123
        %v330 = vpop.permute.xlu0 %329
        %331 = vrot.lane.b32.xlu0 %v270, 123
        %v332 = vpop.permute.xlu0 %331
        %vm333 = vcmask 1006592
        %v334 = vsel %vm333, %v328, %v330
        %v335 = vsel %vm333, %v330, %v332
        %336 = vrot.lane.b32.xlu0 %v297, 122
        %v337 = vpop.permute.xlu0 %336
        %338 = vrot.lane.b32.xlu0 %v270, 122
        %v339 = vpop.permute.xlu0 %338
        %340 = vrot.lane.b32.xlu0 %v298, 122
        %v341 = vpop.permute.xlu0 %340
        %vm342 = vcmask 998400
        %v343 = vsel %vm342, %v337, %v339
        %v344 = vsel %vm342, %v339, %v341
        %345 = vrot.lane.b32.xlu0 %v308, 106
        %v346 = vpop.permute.xlu0 %345
        %347 = vrot.lane.b32.xlu0 %v286, 106
        %v348 = vpop.permute.xlu0 %347
        %349 = vrot.lane.b32.xlu0 %v297, 106
        %v350 = vpop.permute.xlu0 %349
        %vm351 = vcmask 867328
        %v352 = vsel %vm351, %v346, %v348
        %v353 = vsel %vm351, %v348, %v350
        %354 = vrot.lane.b32.xlu0 %v270, 105
        %v355 = vpop.permute.xlu0 %354
        %356 = vrot.lane.b32.xlu0 %v278, 105
        %v357 = vpop.permute.xlu0 %356
        %358 = vrot.lane.b32.xlu0 %v277, 105
        %v359 = vpop.permute.xlu0 %358
        %vm360 = vcmask 859136
        %v361 = vsel %vm360, %v355, %v357
        %v362 = vsel %vm360, %v357, %v359
        %363 = vrot.lane.b32.xlu0 %v286, 104
        %v364 = vpop.permute.xlu0 %363
        %365 = vrot.lane.b32.xlu0 %v287, 104
        %v366 = vpop.permute.xlu0 %365
        %367 = vrot.lane.b32.xlu0 %v270, 104
        %v368 = vpop.permute.xlu0 %367
        %vm369 = vcmask 850944
        %v370 = vsel %vm369, %v364, %v366
        %v371 = vsel %vm369, %v366, %v368
        %372 = vrot.lane.b32.xlu0 %v297, 103
        %v373 = vpop.permute.xlu0 %372
        %374 = vrot.lane.b32.xlu0 %v270, 103
        %v375 = vpop.permute.xlu0 %374
        %376 = vrot.lane.b32.xlu0 %v298, 103
        %v377 = vpop.permute.xlu0 %376
        %vm378 = vcmask 842752
        %v379 = vsel %vm378, %v373, %v375
        %v380 = vsel %vm378, %v375, %v377
        %381 = vrot.lane.b32.xlu0 %v308, 102
        %v382 = vpop.permute.xlu0 %381
        %383 = vrot.lane.b32.xlu0 %v286, 102
        %v384 = vpop.permute.xlu0 %383
        %385 = vrot.lane.b32.xlu0 %v297, 102
        %v386 = vpop.permute.xlu0 %385
        %vm387 = vcmask 834560
        %v388 = vsel %vm387, %v382, %v384
        %v389 = vsel %vm387, %v384, %v386
        %390 = vrot.lane.b32.xlu0 %v270, 101
        %v391 = vpop.permute.xlu0 %390
        %392 = vrot.lane.b32.xlu0 %v278, 101
        %v393 = vpop.permute.xlu0 %392
        %394 = vrot.lane.b32.xlu0 %v277, 101
        %v395 = vpop.permute.xlu0 %394
        %vm396 = vcmask 826368
        %v397 = vsel %vm396, %v391, %v393
        %v398 = vsel %vm396, %v393, %v395
        %399 = vrot.lane.b32.xlu0 %v286, 100
        %v400 = vpop.permute.xlu0 %399
        %401 = vrot.lane.b32.xlu0 %v287, 100
        %v402 = vpop.permute.xlu0 %401
        %403 = vrot.lane.b32.xlu0 %v270, 100
        %v404 = vpop.permute.xlu0 %403
        %vm405 = vcmask 818176
        %v406 = vsel %vm405, %v400, %v402
        %v407 = vsel %vm405, %v402, %v404
        %408 = vrot.lane.b32.xlu0 %v297, 84
        %v409 = vpop.permute.xlu0 %408
        %410 = vrot.lane.b32.xlu0 %v270, 84
        %v411 = vpop.permute.xlu0 %410
        %412 = vrot.lane.b32.xlu0 %v298, 84
        %v413 = vpop.permute.xlu0 %412
        %414 = vrot.lane.b32.xlu0 %v277, 84
        %v415 = vpop.permute.xlu0 %414
        %vm416 = vcmask 687104
        %v417 = vsel %vm416, %v409, %v411
        %v418 = vsel %vm416, %v411, %v413
        %v419 = vsel %vm416, %v413, %v415
        %420 = vrot.lane.b32.xlu0 %v308, 83
        %v421 = vpop.permute.xlu0 %420
        %422 = vrot.lane.b32.xlu0 %v286, 83
        %v423 = vpop.permute.xlu0 %422
        %424 = vrot.lane.b32.xlu0 %v297, 83
        %v425 = vpop.permute.xlu0 %424
        %426 = vrot.lane.b32.xlu0 %v270, 83
        %v427 = vpop.permute.xlu0 %426
        %vm428 = vcmask 678912
        %v429 = vsel %vm428, %v421, %v423
        %v430 = vsel %vm428, %v423, %v425
        %v431 = vsel %vm428, %v425, %v427
        %vm432 = vcmask 1041408
        %v435 = vsel %vm432, %v270, %v295
        %v438 = vsel %vm432, %v278, %v296
        %v441 = vsel %vm432, %v277, %v293
        %vm442 = vcmask 1043456
        %v444 = vsel %vm442, %v435, %v306
        %v446 = vsel %vm442, %v438, %v307
        %v448 = vsel %vm442, %v441, %v304
        %vm449 = vcmask 1045504
        %v451 = vsel %vm449, %v444, %v316
        %v454 = vsel %vm449, %v446, %v317
        %v457 = vsel %vm449, %v448, %v314
        %v461 = vsel %vm432, %v325, %v334
        %v464 = vsel %vm432, %v326, %v335
        %v467 = vsel %vm432, %v323, %v332
        %v469 = vsel %vm442, %v461, %v343
        %v471 = vsel %vm442, %v464, %v344
        %v473 = vsel %vm442, %v467, %v341
        %v475 = vsel %vm449, %v469, %v352
        %v478 = vsel %vm449, %v471, %v353
        %v481 = vsel %vm449, %v473, %v350
        %v485 = vsel %vm432, %v361, %v370
        %v488 = vsel %vm432, %v362, %v371
        %v491 = vsel %vm432, %v359, %v368
        %v493 = vsel %vm442, %v485, %v379
        %v495 = vsel %vm442, %v488, %v380
        %v497 = vsel %vm442, %v491, %v377
        %v499 = vsel %vm449, %v493, %v388
        %v502 = vsel %vm449, %v495, %v389
        %v505 = vsel %vm449, %v497, %v386
        %v509 = vsel %vm432, %v397, %v406
        %v512 = vsel %vm432, %v398, %v407
        %v515 = vsel %vm432, %v395, %v404
        %v517 = vsel %vm442, %v509, %v417
        %v519 = vsel %vm442, %v512, %v418
        %v521 = vsel %vm442, %v515, %v419
        %v523 = vsel %vm449, %v517, %v429
        %v526 = vsel %vm449, %v519, %v430
        %v529 = vsel %vm449, %v521, %v431
        %v531 = vcombine.high %v277, %v277
        %532 = vrot.lane.b32.xlu0 %v278, 127
        %v533 = vpop.permute.xlu0 %532
        %v534 = vsel %vm294, %v293, %v533
        %535 = vrot.lane.b32.xlu0 %v277, 126
        %v536 = vpop.permute.xlu0 %535
        %v537 = vsel %vm305, %v304, %v536
        %538 = vrot.lane.b32.xlu0 %v270, 125
        %v539 = vpop.permute.xlu0 %538
        %v540 = vsel %vm315, %v314, %v539
        %541 = vrot.lane.b32.xlu0 %v531, 124
        %v542 = vpop.permute.xlu0 %541
        %v543 = vsel %vm324, %v323, %v542
        %544 = vrot.lane.b32.xlu0 %v286, 108
        %v545 = vpop.permute.xlu0 %544
        %546 = vrot.lane.b32.xlu0 %v287, 108
        %v547 = vpop.permute.xlu0 %546
        %548 = vrot.lane.b32.xlu0 %v270, 108
        %v549 = vpop.permute.xlu0 %548
        %550 = vrot.lane.b32.xlu0 %v278, 108
        %v551 = vpop.permute.xlu0 %550
        %vm552 = vcmask 883712
        %v553 = vsel %vm552, %v545, %v547
        %v554 = vsel %vm552, %v547, %v549
        %v555 = vsel %vm552, %v549, %v551
        %556 = vrot.lane.b32.xlu0 %v297, 107
        %v557 = vpop.permute.xlu0 %556
        %558 = vrot.lane.b32.xlu0 %v270, 107
        %v559 = vpop.permute.xlu0 %558
        %560 = vrot.lane.b32.xlu0 %v298, 107
        %v561 = vpop.permute.xlu0 %560
        %562 = vrot.lane.b32.xlu0 %v277, 107
        %v563 = vpop.permute.xlu0 %562
        %vm564 = vcmask 875520
        %v565 = vsel %vm564, %v557, %v559
        %v566 = vsel %vm564, %v559, %v561
        %v567 = vsel %vm564, %v561, %v563
        %568 = vrot.lane.b32.xlu0 %v270, 106
        %v569 = vpop.permute.xlu0 %568
        %v570 = vsel %vm351, %v350, %v569
        %571 = vrot.lane.b32.xlu0 %v531, 105
        %v572 = vpop.permute.xlu0 %571
        %v573 = vsel %vm360, %v359, %v572
        %574 = vrot.lane.b32.xlu0 %v278, 104
        %v575 = vpop.permute.xlu0 %574
        %v576 = vsel %vm369, %v368, %v575
        %577 = vrot.lane.b32.xlu0 %v277, 103
        %v578 = vpop.permute.xlu0 %577
        %v579 = vsel %vm378, %v377, %v578
        %580 = vrot.lane.b32.xlu0 %v270, 102
        %v581 = vpop.permute.xlu0 %580
        %v582 = vsel %vm387, %v386, %v581
        %583 = vrot.lane.b32.xlu0 %v270, 86
        %v584 = vpop.permute.xlu0 %583
        %585 = vrot.lane.b32.xlu0 %v278, 86
        %v586 = vpop.permute.xlu0 %585
        %587 = vrot.lane.b32.xlu0 %v277, 86
        %v588 = vpop.permute.xlu0 %587
        %589 = vrot.lane.b32.xlu0 %v531, 86
        %v590 = vpop.permute.xlu0 %589
        %vm591 = vcmask 703488
        %v592 = vsel %vm591, %v584, %v586
        %v593 = vsel %vm591, %v586, %v588
        %v594 = vsel %vm591, %v588, %v590
        %595 = vrot.lane.b32.xlu0 %v286, 85
        %v596 = vpop.permute.xlu0 %595
        %597 = vrot.lane.b32.xlu0 %v287, 85
        %v598 = vpop.permute.xlu0 %597
        %599 = vrot.lane.b32.xlu0 %v270, 85
        %v600 = vpop.permute.xlu0 %599
        %601 = vrot.lane.b32.xlu0 %v278, 85
        %v602 = vpop.permute.xlu0 %601
        %vm603 = vcmask 695296
        %v604 = vsel %vm603, %v596, %v598
        %v605 = vsel %vm603, %v598, %v600
        %v606 = vsel %vm603, %v600, %v602
        %v608 = vsel %vm432, %v277, %v534
        %v611 = vsel %vm432, %v531, %v533
        %v613 = vsel %vm442, %v608, %v537
        %v615 = vsel %vm442, %v611, %v536
        %v617 = vsel %vm449, %v613, %v540
        %v619 = vsel %vm449, %v615, %v539
        %v621 = vsel %vm432, %v325, %v553
        %v623 = vsel %vm432, %v326, %v554
        %v626 = vsel %vm432, %v543, %v555
        %v629 = vsel %vm432, %v542, %v551
        %v631 = vsel %vm442, %v621, %v565
        %v633 = vsel %vm442, %v623, %v566
        %v635 = vsel %vm442, %v626, %v567
        %v637 = vsel %vm442, %v629, %v563
        %v638 = vsel %vm449, %v631, %v352
        %v639 = vsel %vm449, %v633, %v353
        %v641 = vsel %vm449, %v635, %v570
        %v643 = vsel %vm449, %v637, %v569
        %v646 = vsel %vm432, %v573, %v576
        %v649 = vsel %vm432, %v572, %v575
        %v651 = vsel %vm442, %v646, %v579
        %v653 = vsel %vm442, %v649, %v578
        %v655 = vsel %vm449, %v651, %v582
        %v657 = vsel %vm449, %v653, %v581
        %v660 = vsel %vm432, %v592, %v604
        %v663 = vsel %vm432, %v593, %v605
        %v666 = vsel %vm432, %v594, %v606
        %v669 = vsel %vm432, %v590, %v602
        %v670 = vsel %vm442, %v660, %v417
        %v671 = vsel %vm442, %v663, %v418
        %v672 = vsel %vm442, %v666, %v419
        %v674 = vsel %vm442, %v669, %v415
        %v675 = vsel %vm449, %v670, %v429
        %v676 = vsel %vm449, %v671, %v430
        %v677 = vsel %vm449, %v672, %v431
        %v679 = vsel %vm449, %v674, %v427
        %680 = vrot.lane.b32.xlu0 %v308, 110
        %v681 = vpop.permute.xlu0 %680
        %682 = vrot.lane.b32.xlu0 %v286, 110
        %v683 = vpop.permute.xlu0 %682
        %684 = vrot.lane.b32.xlu0 %v297, 110
        %v685 = vpop.permute.xlu0 %684
        %686 = vrot.lane.b32.xlu0 %v270, 110
        %v687 = vpop.permute.xlu0 %686
        %vm688 = vcmask 900096
        %v689 = vsel %vm688, %v681, %v683
        %v690 = vsel %vm688, %v683, %v685
        %v691 = vsel %vm688, %v685, %v687
        %692 = vrot.lane.b32.xlu0 %v270, 109
        %v693 = vpop.permute.xlu0 %692
        %694 = vrot.lane.b32.xlu0 %v278, 109
        %v695 = vpop.permute.xlu0 %694
        %696 = vrot.lane.b32.xlu0 %v277, 109
        %v697 = vpop.permute.xlu0 %696
        %698 = vrot.lane.b32.xlu0 %v531, 109
        %v699 = vpop.permute.xlu0 %698
        %vm700 = vcmask 891904
        %v701 = vsel %vm700, %v693, %v695
        %v702 = vsel %vm700, %v695, %v697
        %v703 = vsel %vm700, %v697, %v699
        %704 = vrot.lane.b32.xlu0 %v270, 88
        %v705 = vpop.permute.xlu0 %704
        %706 = vrot.lane.b32.xlu0 %v298, 88
        %v707 = vpop.permute.xlu0 %706
        %708 = vrot.lane.b32.xlu0 %v277, 88
        %v709 = vpop.permute.xlu0 %708
        %vm710 = vcmask 719872
        %v711 = vsel %vm710, %v705, %v707
        %v712 = vsel %vm710, %v707, %v709
        %713 = vrot.lane.b32.xlu0 %v286, 87
        %v714 = vpop.permute.xlu0 %713
        %715 = vrot.lane.b32.xlu0 %v297, 87
        %v716 = vpop.permute.xlu0 %715
        %717 = vrot.lane.b32.xlu0 %v270, 87
        %v718 = vpop.permute.xlu0 %717
        %vm719 = vcmask 711680
        %v720 = vsel %vm719, %v714, %v716
        %v721 = vsel %vm719, %v716, %v718
        %v723 = vsel %vm449, %v444, %v689
        %v725 = vsel %vm449, %v446, %v690
        %v727 = vsel %vm449, %v613, %v691
        %v729 = vsel %vm449, %v615, %v687
        %v731 = vsel %vm432, %v701, %v553
        %v733 = vsel %vm432, %v702, %v554
        %v735 = vsel %vm432, %v703, %v555
        %v737 = vsel %vm432, %v699, %v551
        %v738 = vsel %vm442, %v731, %v565
        %v739 = vsel %vm442, %v733, %v566
        %v740 = vsel %vm442, %v735, %v567
        %v741 = vsel %vm442, %v737, %v563
        %v742 = vsel %vm449, %v738, %v352
        %v743 = vsel %vm449, %v739, %v353
        %v744 = vsel %vm449, %v740, %v570
        %v745 = vsel %vm449, %v741, %v569
        %v747 = vsel %vm442, %v485, %v705
        %v749 = vsel %vm442, %v488, %v711
        %v751 = vsel %vm442, %v646, %v712
        %v753 = vsel %vm442, %v649, %v709
        %v755 = vsel %vm449, %v747, %v714
        %v757 = vsel %vm449, %v749, %v720
        %v759 = vsel %vm449, %v751, %v721
        %v761 = vsel %vm449, %v753, %v718
        %v764 = vsel %vm432, %v586, %v598
        %v766 = vsel %vm442, %v764, %v411
        %v768 = vsel %vm449, %v766, %v423
        %785 = vrot.lane.b32.xlu0 %v451, 82
        %v786 = vpop.permute.xlu0 %785
        %787 = vrot.lane.b32.xlu0 %v454, 82
        %v788 = vpop.permute.xlu0 %787
        %789 = vrot.lane.b32.xlu0 %v617, 82
        %v790 = vpop.permute.xlu0 %789
        %791 = vrot.lane.b32.xlu0 %v619, 82
        %v792 = vpop.permute.xlu0 %791
        %793 = vrot.lane.b32.xlu0 %v638, 82
        %v794 = vpop.permute.xlu0 %793
        %795 = vrot.lane.b32.xlu0 %v639, 82
        %v796 = vpop.permute.xlu0 %795
        %797 = vrot.lane.b32.xlu0 %v641, 82
        %v798 = vpop.permute.xlu0 %797
        %799 = vrot.lane.b32.xlu0 %v643, 82
        %v800 = vpop.permute.xlu0 %799
        %801 = vrot.lane.b32.xlu0 %v499, 82
        %v802 = vpop.permute.xlu0 %801
        %803 = vrot.lane.b32.xlu0 %v502, 82
        %v804 = vpop.permute.xlu0 %803
        %805 = vrot.lane.b32.xlu0 %v655, 82
        %v806 = vpop.permute.xlu0 %805
        %807 = vrot.lane.b32.xlu0 %v657, 82
        %v808 = vpop.permute.xlu0 %807
        %809 = vrot.lane.b32.xlu0 %v675, 82
        %v810 = vpop.permute.xlu0 %809
        %811 = vrot.lane.b32.xlu0 %v676, 82
        %v812 = vpop.permute.xlu0 %811
        %813 = vrot.lane.b32.xlu0 %v677, 82
        %v814 = vpop.permute.xlu0 %813
        %815 = vrot.lane.b32.xlu0 %v679, 82
        %v816 = vpop.permute.xlu0 %815
        %vm817 = vcmask 670720
        %v818 = vsel %vm817, %v786, %v788
        %v819 = vsel %vm817, %v788, %v790
        %v820 = vsel %vm817, %v790, %v792
        %v821 = vsel %vm817, %v794, %v796
        %v822 = vsel %vm817, %v796, %v798
        %v823 = vsel %vm817, %v798, %v800
        %v824 = vsel %vm817, %v802, %v804
        %v825 = vsel %vm817, %v804, %v806
        %v826 = vsel %vm817, %v806, %v808
        %v827 = vsel %vm817, %v810, %v812
        %v828 = vsel %vm817, %v812, %v814
        %v829 = vsel %vm817, %v814, %v816
        %855 = vrot.lane.b32.xlu0 %v723, 36
        %v856 = vpop.permute.xlu0 %855
        %857 = vrot.lane.b32.xlu0 %v725, 36
        %v858 = vpop.permute.xlu0 %857
        %859 = vrot.lane.b32.xlu0 %v727, 36
        %v860 = vpop.permute.xlu0 %859
        %861 = vrot.lane.b32.xlu0 %v729, 36
        %v862 = vpop.permute.xlu0 %861
        %863 = vrot.lane.b32.xlu0 %v742, 36
        %v864 = vpop.permute.xlu0 %863
        %865 = vrot.lane.b32.xlu0 %v743, 36
        %v866 = vpop.permute.xlu0 %865
        %867 = vrot.lane.b32.xlu0 %v744, 36
        %v868 = vpop.permute.xlu0 %867
        %869 = vrot.lane.b32.xlu0 %v745, 36
        %v870 = vpop.permute.xlu0 %869
        %871 = vrot.lane.b32.xlu0 %v755, 36
        %v872 = vpop.permute.xlu0 %871
        %873 = vrot.lane.b32.xlu0 %v757, 36
        %v874 = vpop.permute.xlu0 %873
        %875 = vrot.lane.b32.xlu0 %v759, 36
        %v876 = vpop.permute.xlu0 %875
        %877 = vrot.lane.b32.xlu0 %v761, 36
        %v878 = vpop.permute.xlu0 %877
        %879 = vrot.lane.b32.xlu0 %v768, 36
        %v880 = vpop.permute.xlu0 %879
        %881 = vrot.lane.b32.xlu0 %v676, 36
        %v882 = vpop.permute.xlu0 %881
        %883 = vrot.lane.b32.xlu0 %v677, 36
        %v884 = vpop.permute.xlu0 %883
        %885 = vrot.lane.b32.xlu0 %v679, 36
        %v886 = vpop.permute.xlu0 %885
        %vm887 = vcmask 293888
        %v888 = vsel %vm887, %v856, %v858
        %v889 = vsel %vm887, %v858, %v860
        %v890 = vsel %vm887, %v860, %v862
        %v891 = vsel %vm887, %v864, %v866
        %v892 = vsel %vm887, %v866, %v868
        %v893 = vsel %vm887, %v868, %v870
        %v894 = vsel %vm887, %v872, %v874
        %v895 = vsel %vm887, %v874, %v876
        %v896 = vsel %vm887, %v876, %v878
        %v897 = vsel %vm887, %v880, %v882
        %v898 = vsel %vm887, %v882, %v884
        %v899 = vsel %vm887, %v884, %v886
        %912 = vrot.lane.b32.xlu0 %v278, 118
        %v913 = vpop.permute.xlu0 %912
        %914 = vrot.lane.b32.xlu0 %v277, 118
        %v915 = vpop.permute.xlu0 %914
        %916 = vrot.lane.b32.xlu0 %v531, 118
        %v917 = vpop.permute.xlu0 %916
        %vm918 = vcmask 965632
        %v919 = vsel %vm918, %v913, %v915
        %v920 = vsel %vm918, %v915, %v917
        %v921 = vld [vmem:[%s1] sm:$0xff]
        %v922 = vld [vmem:[%s1 + $0x8] sm:$0xff]
        %v923 = vld [vmem:[%s1 + $0x10] sm:$0xff]
        %v927 = vunpack.c.l.b16 %v921
        %v928 = vunpack.c.h.b16 %v921
        %v929 = vunpack.c.l.b16 %v922
        %v930 = vunpack.c.h.b16 %v922
        %v931 = vunpack.c.l.b16 %v923
        %v932 = vunpack.c.h.b16 %v923
        %v933 = vpack.c.b16 %v929, %v927
        %v934 = vpack.c.b16 %v930, %v928
        %v935 = vpack.c.b16 %v931, %v931
        %v936 = vpack.c.b16 %v932, %v932
        %vm939 = vcmask 556032
        %v941 = vsel %vm939, %v934, 0
        %v944 = vsel %vm939, %v936, 0
        %v947 = vsel %vm432, %v919, 0
        %v950 = vsel %vm432, %v920, 0
        %v953 = vsel %vm432, %v917, 0
        %955 = vmatprep.subr.bf16.mxu0 %v454
        %956 = vmatpush1.bf16.msra.mxu0 %v451
        %957 = vmatprep.subr.bf16.mxu0 %v478
        %958 = vmatpush1.bf16.msra.mxu0 %v475
        %959 = vmatprep.subr.bf16.mxu0 %v502
        %960 = vmatpush1.bf16.msra.mxu0 %v499
        %961 = vmatprep.subr.bf16.mxu0 %v526
        %962 = vmatpush1.bf16.msra.mxu0 %v523
        %963 = vmatprep.subr.bf16.mxu0 %v819
        %964 = vmatpush1.bf16.msra.mxu0 %v818
        %965 = vmatprep.subr.bf16.mxu0 %v822
        %966 = vmatpush1.bf16.msra.mxu0 %v821
        %967 = vmatprep.subr.bf16.mxu0 %v825
        %968 = vmatpush1.bf16.msra.mxu0 %v824
        %969 = vmatprep.subr.bf16.mxu0 %v828
        %970 = vmatpush1.bf16.msra.mxu0 %v827
        %971 = vmatprep.subr.bf16.mxu0 %v889
        %972 = vmatpush1.bf16.msra.mxu0 %v888
        %973 = vmatprep.subr.bf16.mxu0 %v892
        %974 = vmatpush1.bf16.msra.mxu0 %v891
        %975 = vmatprep.subr.bf16.mxu0 %v895
        %976 = vmatpush1.bf16.msra.mxu0 %v894
        %977 = vmatprep.subr.bf16.mxu0 %v898
        %978 = vmatpush1.bf16.msra.mxu0 %v897
        %979 = vmatprep.subr.bf16.mxu0 %v950
        %980 = vmatpush1.bf16.msra.mxu0 %v947
        %981 = vmatprep.subr.bf16.mxu0 0
        %982 = vmatpush1.bf16.msra.mxu0 0
        %983 = vmatprep.subr.bf16.mxu0 0
        %984 = vmatpush1.bf16.msra.mxu0 0
        %985 = vmatprep.subr.bf16.mxu0 0
        %986 = vmatpush1.bf16.msra.mxu0 0
        %987 = vmatprep.mubr.bf16.mxu0 %v941
        %988 = vmatmul.mubr.bf16.gmra.mrb[0].mxu0 %v933
        %v989 = vpop.f32.mrb[0].mxu0
        %v990 = vadd.f32 0.0, %v989
        %v991 = vpop.f32.mrb[0].mxu0
        %v992 = vadd.f32 0.0, %v991
        %v993 = vpop.f32.mrb[0].mxu0
        %v994 = vadd.f32 0.0, %v993
        %v995 = vpop.f32.mrb[0].mxu0
        %v996 = vadd.f32 0.0, %v995
        %997 = vmatprep.mubr.bf16.mxu0 %v944
        %998 = vmatmul.mubr.bf16.gmra.mrb[0].mxu0 %v935
        %v999 = vpop.f32.mrb[0].mxu0
        %v1000 = vadd.f32 0.0, %v999
        %v1001 = vpop.f32.mrb[0].mxu0
        %v1002 = vadd.f32 0.0, %v1001
        %v1003 = vpop.f32.mrb[0].mxu0
        %v1004 = vpop.f32.mrb[0].mxu0
        %1005 = vdwg.mxu0
        %1006 = vmatprep.subr.bf16.mxu0 0
        %1007 = vmatpush1.bf16.msra.mxu0 %v457
        %1008 = vmatprep.subr.bf16.mxu0 0
        %1009 = vmatpush1.bf16.msra.mxu0 %v481
        %1010 = vmatprep.subr.bf16.mxu0 0
        %1011 = vmatpush1.bf16.msra.mxu0 %v505
        %1012 = vmatprep.subr.bf16.mxu0 0
        %1013 = vmatpush1.bf16.msra.mxu0 %v529
        %1014 = vmatprep.subr.bf16.mxu0 0
        %1015 = vmatpush1.bf16.msra.mxu0 %v820
        %1016 = vmatprep.subr.bf16.mxu0 0
        %1017 = vmatpush1.bf16.msra.mxu0 %v823
        %1018 = vmatprep.subr.bf16.mxu0 0
        %1019 = vmatpush1.bf16.msra.mxu0 %v826
        %1020 = vmatprep.subr.bf16.mxu0 0
        %1021 = vmatpush1.bf16.msra.mxu0 %v829
        %1022 = vmatprep.subr.bf16.mxu0 0
        %1023 = vmatpush1.bf16.msra.mxu0 %v890
        %1024 = vmatprep.subr.bf16.mxu0 0
        %1025 = vmatpush1.bf16.msra.mxu0 %v893
        %1026 = vmatprep.subr.bf16.mxu0 0
        %1027 = vmatpush1.bf16.msra.mxu0 %v896
        %1028 = vmatprep.subr.bf16.mxu0 0
        %1029 = vmatpush1.bf16.msra.mxu0 %v899
        %1030 = vmatprep.subr.bf16.mxu0 0
        %1031 = vmatpush1.bf16.msra.mxu0 %v953
        %1032 = vmatprep.subr.bf16.mxu0 0
        %1033 = vmatpush1.bf16.msra.mxu0 0
        %1034 = vmatprep.subr.bf16.mxu0 0
        %1035 = vmatpush1.bf16.msra.mxu0 0
        %1036 = vmatprep.subr.bf16.mxu0 0
        %1037 = vmatpush1.bf16.msra.mxu0 0
        %1038 = vmatprep.mubr.bf16.mxu0 %v941
        %1039 = vmatmul.mubr.bf16.gmra.mrb[0].mxu0 %v933
        %v1040 = vpop.f32.mrb[0].mxu0
        %v1041 = vadd.f32 0.0, %v1040
        %v1042 = vpop.f32.mrb[0].mxu0
        %v1043 = vpop.f32.mrb[0].mxu0
        %v1044 = vadd.f32 0.0, %v1043
        %v1045 = vpop.f32.mrb[0].mxu0
        %1046 = vmatprep.mubr.bf16.mxu0 %v944
        %1047 = vmatmul.mubr.bf16.gmra.mrb[0].mxu0 %v935
        %v1048 = vpop.f32.mrb[0].mxu0
        %v1049 = vadd.f32 0.0, %v1048
        %v1050 = vpop.f32.mrb[0].mxu0
        %v1051 = vpop.f32.mrb[0].mxu0
        %v1052 = vpop.f32.mrb[0].mxu0
        %1053 = vdwg.mxu0
        %v1055 = vlaneseq
        %v1056 = vshrl.u32 %v1055, 7
        %v1057 = vsub.s32 0, %v1056
        %v1058 = vrot.slane %v257, %v1057
        %v1059 = vlaneseq
        %v1060 = vshrl.u32 %v1059, 7
        %v1061 = vsub.s32 1, %v1060
        %v1062 = vrot.slane %v257, %v1061
        %v1063 = vlaneseq
        %v1064 = vshrl.u32 %v1063, 7
        %v1065 = vsub.s32 2, %v1064
        %v1066 = vrot.slane %v257, %v1065
        %v1070 = vmul.f32 %v990, %v1058
        %v1071 = vmul.f32 %v992, %v1062
        %v1072 = vmul.f32 %v1041, %v1066
        %v1073 = vmul.f32 %v994, %v1058
        %v1074 = vmul.f32 %v996, %v1062
        %v1075 = vmul.f32 %v1044, %v1066
        %v1076 = vmul.f32 %v1000, %v1058
        %v1077 = vmul.f32 %v1002, %v1062
        %v1078 = vmul.f32 %v1049, %v1066
        %v1079 = vadd.f32 %v1070, %v1071
        %vm1080 = vcmask 785408
        %v1081 = vsel %vm1080, %v1072, 0.0
        %v1082 = vadd.f32 %v1079, %v1081
        %1083 = vadd.xlane.f32.xlu0 %v1082
        %v1084 = vpop.xlane.xlu0 %1083
        %v1085 = vadd.f32 %v1073, %v1074
        %v1086 = vsel %vm1080, %v1075, 0.0
        %v1087 = vadd.f32 %v1085, %v1086
        %1088 = vadd.xlane.f32.xlu0 %v1087
        %v1089 = vpop.xlane.xlu0 %1088
        %v1090 = vadd.f32 %v1076, %v1077
        %v1091 = vsel %vm1080, %v1078, 0.0
        %v1092 = vadd.f32 %v1090, %v1091
        %1093 = vadd.xlane.f32.xlu0 %v1092
        %v1094 = vpop.xlane.xlu0 %1093
        %v1095 = vmul.f32 %v1084, 0.00390625
        %v1096 = vmul.f32 %v1089, 0.00390625
        %v1097 = vmul.f32 %v1094, 0.00390625
        %v1098 = vmul.f32 %v1070, %v990
        %v1099 = vmul.f32 %v1071, %v992
        %v1100 = vmul.f32 %v1072, %v1041
        %v1101 = vmul.f32 %v1073, %v994
        %v1102 = vmul.f32 %v1074, %v996
        %v1103 = vmul.f32 %v1075, %v1044
        %v1104 = vmul.f32 %v1076, %v1000
        %v1105 = vmul.f32 %v1077, %v1002
        %v1106 = vmul.f32 %v1078, %v1049
        %v1107 = vadd.f32 %v1098, %v1099
        %v1108 = vsel %vm1080, %v1100, 0.0
        %v1109 = vadd.f32 %v1107, %v1108
        %1110 = vadd.xlane.f32.xlu0 %v1109
        %v1111 = vpop.xlane.xlu0 %1110
        %v1112 = vadd.f32 %v1101, %v1102
        %v1113 = vsel %vm1080, %v1103, 0.0
        %v1114 = vadd.f32 %v1112, %v1113
        %1115 = vadd.xlane.f32.xlu0 %v1114
        %v1116 = vpop.xlane.xlu0 %1115
        %v1117 = vadd.f32 %v1104, %v1105
        %v1118 = vsel %vm1080, %v1106, 0.0
        %v1119 = vadd.f32 %v1117, %v1118
        %1120 = vadd.xlane.f32.xlu0 %v1119
        %v1121 = vpop.xlane.xlu0 %1120
        %v1122 = vmul.f32 %v1111, 0.00390625
        %v1123 = vmul.f32 %v1116, 0.00390625
        %v1124 = vmul.f32 %v1121, 0.00390625
        %v1125 = vmul.f32 %v1095, %v1095
        %v1126 = vmul.f32 %v1096, %v1096
        %v1127 = vmul.f32 %v1097, %v1097
        %v1128 = vsub.f32 %v1122, %v1125
        %v1129 = vsub.f32 %v1123, %v1126
        %v1130 = vsub.f32 %v1124, %v1127
        %v1131 = vmax.f32 %v1128, 0.0
        %v1132 = vmax.f32 %v1129, 0.0
        %v1133 = vmax.f32 %v1130, 0.0
        %v1134 = vsub.f32 %v990, %v1095
        %v1135 = vsub.f32 %v992, %v1095
        %v1136 = vsub.f32 %v1041, %v1095
        %v1137 = vsub.f32 %v994, %v1096
        %v1138 = vsub.f32 %v996, %v1096
        %v1139 = vsub.f32 %v1044, %v1096
        %v1140 = vsub.f32 %v1000, %v1097
        %v1141 = vsub.f32 %v1002, %v1097
        %v1142 = vsub.f32 %v1049, %v1097
        %v1143 = vadd.f32 %v1131, 1e-05
        %v1144 = vadd.f32 %v1132, 1e-05
        %v1145 = vadd.f32 %v1133, 1e-05
        %v1146 = vrsqrt.pop %v1143
        %v1147 = vrsqrt.pop %v1144
        %v1148 = vrsqrt.pop %v1145
        %v1149 = vmul.f32 %v1134, %v1146
        %v1150 = vmul.f32 %v1135, %v1146
        %v1151 = vmul.f32 %v1136, %v1146
        %v1152 = vmul.f32 %v1137, %v1147
        %v1153 = vmul.f32 %v1138, %v1147
        %v1154 = vmul.f32 %v1139, %v1147
        %v1155 = vmul.f32 %v1140, %v1148
        %v1156 = vmul.f32 %v1141, %v1148
        %v1157 = vmul.f32 %v1142, %v1148
        %1159 = vset.pattern.permute.xlu0 0
        %1160 = vperm.xlu0 %1159, %v258
        %v1161 = vpop.permute.xlu0 %1160
        %1164 = vset.pattern.permute.xlu0 0
        %1165 = vperm.xlu0 %1164, %v259
        %v1166 = vpop.permute.xlu0 %1165
        %1169 = vset.pattern.permute.xlu0 0
        %1170 = vperm.xlu0 %1169, %v260
        %v1171 = vpop.permute.xlu0 %1170
        %v1173 = vmul.f32 %v1149, %v1161
        %v1174 = vmul.f32 %v1150, %v1161
        %v1175 = vmul.f32 %v1151, %v1161
        %v1176 = vmul.f32 %v1152, %v1166
        %v1177 = vmul.f32 %v1153, %v1166
        %v1178 = vmul.f32 %v1154, %v1166
        %v1179 = vmul.f32 %v1155, %v1171
        %v1180 = vmul.f32 %v1156, %v1171
        %v1181 = vmul.f32 %v1157, %v1171
        %1182 = vset.pattern.permute.xlu0 1
        %1183 = vperm.xlu0 %1182, %v258
        %v1184 = vpop.permute.xlu0 %1183
        %1186 = vset.pattern.permute.xlu0 1
        %1187 = vperm.xlu0 %1186, %v259
        %v1188 = vpop.permute.xlu0 %1187
        %1190 = vset.pattern.permute.xlu0 1
        %1191 = vperm.xlu0 %1190, %v260
        %v1192 = vpop.permute.xlu0 %1191
        %v1194 = vadd.f32 %v1173, %v1184
        %v1195 = vadd.f32 %v1174, %v1184
        %v1196 = vadd.f32 %v1175, %v1184
        %v1197 = vadd.f32 %v1176, %v1188
        %v1198 = vadd.f32 %v1177, %v1188
        %v1199 = vadd.f32 %v1178, %v1188
        %v1200 = vadd.f32 %v1179, %v1192
        %v1201 = vadd.f32 %v1180, %v1192
        %v1202 = vadd.f32 %v1181, %v1192
        %vm1203 = vcmp.ge.f32.partialorder %v1194, 0.0
        %vm1204 = vcmp.ge.f32.partialorder %v1195, 0.0
        %vm1205 = vcmp.ge.f32.partialorder %v1196, 0.0
        %vm1206 = vcmp.ge.f32.partialorder %v1197, 0.0
        %vm1207 = vcmp.ge.f32.partialorder %v1198, 0.0
        %vm1208 = vcmp.ge.f32.partialorder %v1199, 0.0
        %vm1209 = vcmp.ge.f32.partialorder %v1200, 0.0
        %vm1210 = vcmp.ge.f32.partialorder %v1201, 0.0
        %vm1211 = vcmp.ge.f32.partialorder %v1202, 0.0
        %v1212 = vmul.f32 %v1194, 0.2
        %v1213 = vmul.f32 %v1195, 0.2
        %v1214 = vmul.f32 %v1196, 0.2
        %v1215 = vmul.f32 %v1197, 0.2
        %v1216 = vmul.f32 %v1198, 0.2
        %v1217 = vmul.f32 %v1199, 0.2
        %v1218 = vmul.f32 %v1200, 0.2
        %v1219 = vmul.f32 %v1201, 0.2
        %v1220 = vmul.f32 %v1202, 0.2
        %v1221 = vsel %vm1203, %v1194, %v1212
        %v1222 = vsel %vm1204, %v1195, %v1213
        %v1223 = vsel %vm1205, %v1196, %v1214
        %v1224 = vsel %vm1206, %v1197, %v1215
        %v1225 = vsel %vm1207, %v1198, %v1216
        %v1226 = vsel %vm1208, %v1199, %v1217
        %v1227 = vsel %vm1209, %v1200, %v1218
        %v1228 = vsel %vm1210, %v1201, %v1219
        %v1229 = vsel %vm1211, %v1202, %v1220
        %v1230 = vpack.c.bf16 %v1224, %v1221
        %v1231 = vpack.c.bf16 %v1225, %v1222
        %v1232 = vpack.c.bf16 %v1226, %v1223
        %v1233 = vpack.c.bf16 %v1227, %v1227
        %v1234 = vpack.c.bf16 %v1228, %v1228
        %v1235 = vpack.c.bf16 %v1229, %v1229
        %1238 = vrot.lane.b32.xlu0 %v1230, 125
        %v1239 = vpop.permute.xlu0 %1238
        %1240 = vrot.lane.b32.xlu0 %v1233, 125
        %v1241 = vpop.permute.xlu0 %1240
        %1242 = vrot.lane.b32.xlu0 %v1230, 127
        %v1243 = vpop.permute.xlu0 %1242
        %1244 = vrot.lane.b32.xlu0 %v1233, 127
        %v1245 = vpop.permute.xlu0 %1244
        %1246 = vrot.lane.b32.xlu0 %v1230, 1
        %v1247 = vpop.permute.xlu0 %1246
        %1248 = vrot.lane.b32.xlu0 %v1233, 1
        %v1249 = vpop.permute.xlu0 %1248
        %1250 = vrot.lane.b32.xlu0 %v1230, 3
        %v1251 = vpop.permute.xlu0 %1250
        %1252 = vrot.lane.b32.xlu0 %v1233, 3
        %v1253 = vpop.permute.xlu0 %1252
        %1254 = vrot.lane.b32.xlu0 %v1230, 5
        %v1255 = vpop.permute.xlu0 %1254
        %1256 = vrot.lane.b32.xlu0 %v1233, 5
        %v1257 = vpop.permute.xlu0 %1256
        %1258 = vrot.lane.b32.xlu0 %v1230, 7
        %v1259 = vpop.permute.xlu0 %1258
        %1260 = vrot.lane.b32.xlu0 %v1233, 7
        %v1261 = vpop.permute.xlu0 %1260
        %1262 = vrot.lane.b32.xlu0 %v1230, 9
        %v1263 = vpop.permute.xlu0 %1262
        %1264 = vrot.lane.b32.xlu0 %v1233, 9
        %v1265 = vpop.permute.xlu0 %1264
        %vm1266 = vcmask 7168
        %v1269 = vsel %vm1266, %v1239, %v1243
        %v1272 = vsel %vm1266, %v1241, %v1245
        %vm1273 = vcmask 15360
        %v1275 = vsel %vm1273, %v1269, %v1247
        %v1277 = vsel %vm1273, %v1272, %v1249
        %vm1278 = vcmask 23552
        %v1280 = vsel %vm1278, %v1275, %v1251
        %v1282 = vsel %vm1278, %v1277, %v1253
        %vm1283 = vcmask 154624
        %v1285 = vsel %vm1283, %v1280, %v1255
        %v1287 = vsel %vm1283, %v1282, %v1257
        %vm1288 = vcmask 162816
        %v1290 = vsel %vm1288, %v1285, %v1259
        %v1292 = vsel %vm1288, %v1287, %v1261
        %vm1293 = vcmask 171008
        %v1295 = vsel %vm1293, %v1290, %v1263
        %v1297 = vsel %vm1293, %v1292, %v1265
        %1298 = vrot.lane.b32.xlu0 %v1230, 103
        %v1299 = vpop.permute.xlu0 %1298
        %1300 = vrot.lane.b32.xlu0 %v1233, 103
        %v1301 = vpop.permute.xlu0 %1300
        %1302 = vrot.lane.b32.xlu0 %v1230, 105
        %v1303 = vpop.permute.xlu0 %1302
        %1304 = vrot.lane.b32.xlu0 %v1233, 105
        %v1305 = vpop.permute.xlu0 %1304
        %1306 = vrot.lane.b32.xlu0 %v1230, 107
        %v1307 = vpop.permute.xlu0 %1306
        %1308 = vrot.lane.b32.xlu0 %v1233, 107
        %v1309 = vpop.permute.xlu0 %1308
        %1310 = vrot.lane.b32.xlu0 %v1230, 109
        %v1311 = vpop.permute.xlu0 %1310
        %1312 = vrot.lane.b32.xlu0 %v1233, 109
        %v1313 = vpop.permute.xlu0 %1312
        %1314 = vrot.lane.b32.xlu0 %v1230, 111
        %v1315 = vpop.permute.xlu0 %1314
        %1316 = vrot.lane.b32.xlu0 %v1233, 111
        %v1317 = vpop.permute.xlu0 %1316
        %1318 = vrot.lane.b32.xlu0 %v1230, 113
        %v1319 = vpop.permute.xlu0 %1318
        %1320 = vrot.lane.b32.xlu0 %v1233, 113
        %v1321 = vpop.permute.xlu0 %1320
        %1322 = vrot.lane.b32.xlu0 %v1230, 115
        %v1323 = vpop.permute.xlu0 %1322
        %1324 = vrot.lane.b32.xlu0 %v1233, 115
        %v1325 = vpop.permute.xlu0 %1324
        %v1328 = vsel %vm1266, %v1299, %v1303
        %v1331 = vsel %vm1266, %v1301, %v1305
        %v1333 = vsel %vm1273, %v1328, %v1307
        %v1335 = vsel %vm1273, %v1331, %v1309
        %v1337 = vsel %vm1278, %v1333, %v1311
        %v1339 = vsel %vm1278, %v1335, %v1313
        %v1341 = vsel %vm1283, %v1337, %v1315
        %v1343 = vsel %vm1283, %v1339, %v1317
        %v1345 = vsel %vm1288, %v1341, %v1319
        %v1347 = vsel %vm1288, %v1343, %v1321
        %v1349 = vsel %vm1293, %v1345, %v1323
        %v1351 = vsel %vm1293, %v1347, %v1325
        %1352 = vrot.lane.b32.xlu0 %v1230, 81
        %v1353 = vpop.permute.xlu0 %1352
        %1354 = vrot.lane.b32.xlu0 %v1233, 81
        %v1355 = vpop.permute.xlu0 %1354
        %1356 = vrot.lane.b32.xlu0 %v1230, 83
        %v1357 = vpop.permute.xlu0 %1356
        %1358 = vrot.lane.b32.xlu0 %v1233, 83
        %v1359 = vpop.permute.xlu0 %1358
        %1360 = vrot.lane.b32.xlu0 %v1230, 85
        %v1361 = vpop.permute.xlu0 %1360
        %1362 = vrot.lane.b32.xlu0 %v1233, 85
        %v1363 = vpop.permute.xlu0 %1362
        %1364 = vrot.lane.b32.xlu0 %v1230, 87
        %v1365 = vpop.permute.xlu0 %1364
        %1366 = vrot.lane.b32.xlu0 %v1233, 87
        %v1367 = vpop.permute.xlu0 %1366
        %1368 = vrot.lane.b32.xlu0 %v1230, 89
        %v1369 = vpop.permute.xlu0 %1368
        %1370 = vrot.lane.b32.xlu0 %v1233, 89
        %v1371 = vpop.permute.xlu0 %1370
        %1372 = vrot.lane.b32.xlu0 %v1230, 91
        %v1373 = vpop.permute.xlu0 %1372
        %1374 = vrot.lane.b32.xlu0 %v1233, 91
        %v1375 = vpop.permute.xlu0 %1374
        %1376 = vrot.lane.b32.xlu0 %v1230, 93
        %v1377 = vpop.permute.xlu0 %1376
        %1378 = vrot.lane.b32.xlu0 %v1233, 93
        %v1379 = vpop.permute.xlu0 %1378
        %v1382 = vsel %vm1266, %v1353, %v1357
        %v1385 = vsel %vm1266, %v1355, %v1359
        %v1387 = vsel %vm1273, %v1382, %v1361
        %v1389 = vsel %vm1273, %v1385, %v1363
        %v1391 = vsel %vm1278, %v1387, %v1365
        %v1393 = vsel %vm1278, %v1389, %v1367
        %v1395 = vsel %vm1283, %v1391, %v1369
        %v1397 = vsel %vm1283, %v1393, %v1371
        %v1399 = vsel %vm1288, %v1395, %v1373
        %v1401 = vsel %vm1288, %v1397, %v1375
        %v1403 = vsel %vm1293, %v1399, %v1377
        %v1405 = vsel %vm1293, %v1401, %v1379
        %1406 = vrot.lane.b32.xlu0 %v1230, 59
        %v1407 = vpop.permute.xlu0 %1406
        %1408 = vrot.lane.b32.xlu0 %v1233, 59
        %v1409 = vpop.permute.xlu0 %1408
        %1410 = vrot.lane.b32.xlu0 %v1230, 61
        %v1411 = vpop.permute.xlu0 %1410
        %1412 = vrot.lane.b32.xlu0 %v1233, 61
        %v1413 = vpop.permute.xlu0 %1412
        %1414 = vrot.lane.b32.xlu0 %v1230, 63
        %v1415 = vpop.permute.xlu0 %1414
        %1416 = vrot.lane.b32.xlu0 %v1233, 63
        %v1417 = vpop.permute.xlu0 %1416
        %1418 = vrot.lane.b32.xlu0 %v1230, 65
        %v1419 = vpop.permute.xlu0 %1418
        %1420 = vrot.lane.b32.xlu0 %v1233, 65
        %v1421 = vpop.permute.xlu0 %1420
        %1422 = vrot.lane.b32.xlu0 %v1230, 67
        %v1423 = vpop.permute.xlu0 %1422
        %1424 = vrot.lane.b32.xlu0 %v1233, 67
        %v1425 = vpop.permute.xlu0 %1424
        %1426 = vrot.lane.b32.xlu0 %v1230, 69
        %v1427 = vpop.permute.xlu0 %1426
        %1428 = vrot.lane.b32.xlu0 %v1233, 69
        %v1429 = vpop.permute.xlu0 %1428
        %1430 = vrot.lane.b32.xlu0 %v1230, 71
        %v1431 = vpop.permute.xlu0 %1430
        %1432 = vrot.lane.b32.xlu0 %v1233, 71
        %v1433 = vpop.permute.xlu0 %1432
        %v1436 = vsel %vm1266, %v1407, %v1411
        %v1439 = vsel %vm1266, %v1409, %v1413
        %v1441 = vsel %vm1273, %v1436, %v1415
        %v1443 = vsel %vm1273, %v1439, %v1417
        %v1445 = vsel %vm1278, %v1441, %v1419
        %v1447 = vsel %vm1278, %v1443, %v1421
        %v1449 = vsel %vm1283, %v1445, %v1423
        %v1451 = vsel %vm1283, %v1447, %v1425
        %v1453 = vsel %vm1288, %v1449, %v1427
        %v1455 = vsel %vm1288, %v1451, %v1429
        %v1457 = vsel %vm1293, %v1453, %v1431
        %v1459 = vsel %vm1293, %v1455, %v1433
        %1460 = vrot.lane.b32.xlu0 %v1230, 37
        %v1461 = vpop.permute.xlu0 %1460
        %1462 = vrot.lane.b32.xlu0 %v1233, 37
        %v1463 = vpop.permute.xlu0 %1462
        %1464 = vrot.lane.b32.xlu0 %v1230, 39
        %v1465 = vpop.permute.xlu0 %1464
        %1466 = vrot.lane.b32.xlu0 %v1233, 39
        %v1467 = vpop.permute.xlu0 %1466
        %1468 = vrot.lane.b32.xlu0 %v1230, 41
        %v1469 = vpop.permute.xlu0 %1468
        %1470 = vrot.lane.b32.xlu0 %v1233, 41
        %v1471 = vpop.permute.xlu0 %1470
        %1472 = vrot.lane.b32.xlu0 %v1230, 43
        %v1473 = vpop.permute.xlu0 %1472
        %1474 = vrot.lane.b32.xlu0 %v1233, 43
        %v1475 = vpop.permute.xlu0 %1474
        %1476 = vrot.lane.b32.xlu0 %v1230, 45
        %v1477 = vpop.permute.xlu0 %1476
        %1478 = vrot.lane.b32.xlu0 %v1233, 45
        %v1479 = vpop.permute.xlu0 %1478
        %1480 = vrot.lane.b32.xlu0 %v1230, 47
        %v1481 = vpop.permute.xlu0 %1480
        %1482 = vrot.lane.b32.xlu0 %v1233, 47
        %v1483 = vpop.permute.xlu0 %1482
        %1484 = vrot.lane.b32.xlu0 %v1230, 49
        %v1485 = vpop.permute.xlu0 %1484
        %1486 = vrot.lane.b32.xlu0 %v1233, 49
        %v1487 = vpop.permute.xlu0 %1486
        %v1490 = vsel %vm1266, %v1461, %v1465
        %v1493 = vsel %vm1266, %v1463, %v1467
        %v1495 = vsel %vm1273, %v1490, %v1469
        %v1497 = vsel %vm1273, %v1493, %v1471
        %v1499 = vsel %vm1278, %v1495, %v1473
        %v1501 = vsel %vm1278, %v1497, %v1475
        %v1503 = vsel %vm1283, %v1499, %v1477
        %v1505 = vsel %vm1283, %v1501, %v1479
        %v1507 = vsel %vm1288, %v1503, %v1481
        %v1509 = vsel %vm1288, %v1505, %v1483
        %v1511 = vsel %vm1293, %v1507, %v1485
        %v1513 = vsel %vm1293, %v1509, %v1487
        %1514 = vrot.lane.b32.xlu0 %v1230, 15
        %v1515 = vpop.permute.xlu0 %1514
        %1516 = vrot.lane.b32.xlu0 %v1233, 15
        %v1517 = vpop.permute.xlu0 %1516
        %1518 = vrot.lane.b32.xlu0 %v1230, 17
        %v1519 = vpop.permute.xlu0 %1518
        %1520 = vrot.lane.b32.xlu0 %v1233, 17
        %v1521 = vpop.permute.xlu0 %1520
        %1522 = vrot.lane.b32.xlu0 %v1230, 19
        %v1523 = vpop.permute.xlu0 %1522
        %1524 = vrot.lane.b32.xlu0 %v1233, 19
        %v1525 = vpop.permute.xlu0 %1524
        %1526 = vrot.lane.b32.xlu0 %v1230, 21
        %v1527 = vpop.permute.xlu0 %1526
        %1528 = vrot.lane.b32.xlu0 %v1233, 21
        %v1529 = vpop.permute.xlu0 %1528
        %1530 = vrot.lane.b32.xlu0 %v1230, 23
        %v1531 = vpop.permute.xlu0 %1530
        %1532 = vrot.lane.b32.xlu0 %v1233, 23
        %v1533 = vpop.permute.xlu0 %1532
        %1534 = vrot.lane.b32.xlu0 %v1230, 25
        %v1535 = vpop.permute.xlu0 %1534
        %1536 = vrot.lane.b32.xlu0 %v1233, 25
        %v1537 = vpop.permute.xlu0 %1536
        %1538 = vrot.lane.b32.xlu0 %v1230, 27
        %v1539 = vpop.permute.xlu0 %1538
        %1540 = vrot.lane.b32.xlu0 %v1233, 27
        %v1541 = vpop.permute.xlu0 %1540
        %v1544 = vsel %vm1266, %v1515, %v1519
        %v1547 = vsel %vm1266, %v1517, %v1521
        %v1549 = vsel %vm1273, %v1544, %v1523
        %v1551 = vsel %vm1273, %v1547, %v1525
        %v1553 = vsel %vm1278, %v1549, %v1527
        %v1555 = vsel %vm1278, %v1551, %v1529
        %v1557 = vsel %vm1283, %v1553, %v1531
        %v1559 = vsel %vm1283, %v1555, %v1533
        %v1561 = vsel %vm1288, %v1557, %v1535
        %v1563 = vsel %vm1288, %v1559, %v1537
        %v1565 = vsel %vm1293, %v1561, %v1539
        %v1567 = vsel %vm1293, %v1563, %v1541
        %1570 = vrot.lane.b32.xlu0 %v1231, 121
        %v1571 = vpop.permute.xlu0 %1570
        %1572 = vrot.lane.b32.xlu0 %v1234, 121
        %v1573 = vpop.permute.xlu0 %1572
        %1574 = vrot.lane.b32.xlu0 %v1231, 123
        %v1575 = vpop.permute.xlu0 %1574
        %1576 = vrot.lane.b32.xlu0 %v1234, 123
        %v1577 = vpop.permute.xlu0 %1576
        %1578 = vrot.lane.b32.xlu0 %v1231, 125
        %v1579 = vpop.permute.xlu0 %1578
        %1580 = vrot.lane.b32.xlu0 %v1234, 125
        %v1581 = vpop.permute.xlu0 %1580
        %1582 = vrot.lane.b32.xlu0 %v1231, 127
        %v1583 = vpop.permute.xlu0 %1582
        %1584 = vrot.lane.b32.xlu0 %v1234, 127
        %v1585 = vpop.permute.xlu0 %1584
        %1586 = vrot.lane.b32.xlu0 %v1231, 1
        %v1587 = vpop.permute.xlu0 %1586
        %1588 = vrot.lane.b32.xlu0 %v1234, 1
        %v1589 = vpop.permute.xlu0 %1588
        %1590 = vrot.lane.b32.xlu0 %v1231, 3
        %v1591 = vpop.permute.xlu0 %1590
        %1592 = vrot.lane.b32.xlu0 %v1234, 3
        %v1593 = vpop.permute.xlu0 %1592
        %1594 = vrot.lane.b32.xlu0 %v1231, 5
        %v1595 = vpop.permute.xlu0 %1594
        %1596 = vrot.lane.b32.xlu0 %v1234, 5
        %v1597 = vpop.permute.xlu0 %1596
        %v1600 = vsel %vm1266, %v1571, %v1575
        %v1603 = vsel %vm1266, %v1573, %v1577
        %v1605 = vsel %vm1273, %v1600, %v1579
        %v1607 = vsel %vm1273, %v1603, %v1581
        %v1609 = vsel %vm1278, %v1605, %v1583
        %v1611 = vsel %vm1278, %v1607, %v1585
        %v1613 = vsel %vm1283, %v1609, %v1587
        %v1615 = vsel %vm1283, %v1611, %v1589
        %v1617 = vsel %vm1288, %v1613, %v1591
        %v1619 = vsel %vm1288, %v1615, %v1593
        %v1621 = vsel %vm1293, %v1617, %v1595
        %v1623 = vsel %vm1293, %v1619, %v1597
        %1624 = vrot.lane.b32.xlu0 %v1231, 99
        %v1625 = vpop.permute.xlu0 %1624
        %1626 = vrot.lane.b32.xlu0 %v1234, 99
        %v1627 = vpop.permute.xlu0 %1626
        %1628 = vrot.lane.b32.xlu0 %v1231, 101
        %v1629 = vpop.permute.xlu0 %1628
        %1630 = vrot.lane.b32.xlu0 %v1234, 101
        %v1631 = vpop.permute.xlu0 %1630
        %1632 = vrot.lane.b32.xlu0 %v1231, 103
        %v1633 = vpop.permute.xlu0 %1632
        %1634 = vrot.lane.b32.xlu0 %v1234, 103
        %v1635 = vpop.permute.xlu0 %1634
        %1636 = vrot.lane.b32.xlu0 %v1231, 105
        %v1637 = vpop.permute.xlu0 %1636
        %1638 = vrot.lane.b32.xlu0 %v1234, 105
        %v1639 = vpop.permute.xlu0 %1638
        %1640 = vrot.lane.b32.xlu0 %v1231, 107
        %v1641 = vpop.permute.xlu0 %1640
        %1642 = vrot.lane.b32.xlu0 %v1234, 107
        %v1643 = vpop.permute.xlu0 %1642
        %1644 = vrot.lane.b32.xlu0 %v1231, 109
        %v1645 = vpop.permute.xlu0 %1644
        %1646 = vrot.lane.b32.xlu0 %v1234, 109
        %v1647 = vpop.permute.xlu0 %1646
        %1648 = vrot.lane.b32.xlu0 %v1231, 111
        %v1649 = vpop.permute.xlu0 %1648
        %1650 = vrot.lane.b32.xlu0 %v1234, 111
        %v1651 = vpop.permute.xlu0 %1650
        %v1654 = vsel %vm1266, %v1625, %v1629
        %v1657 = vsel %vm1266, %v1627, %v1631
        %v1659 = vsel %vm1273, %v1654, %v1633
        %v1661 = vsel %vm1273, %v1657, %v1635
        %v1663 = vsel %vm1278, %v1659, %v1637
        %v1665 = vsel %vm1278, %v1661, %v1639
        %v1667 = vsel %vm1283, %v1663, %v1641
        %v1669 = vsel %vm1283, %v1665, %v1643
        %v1671 = vsel %vm1288, %v1667, %v1645
        %v1673 = vsel %vm1288, %v1669, %v1647
        %v1675 = vsel %vm1293, %v1671, %v1649
        %v1677 = vsel %vm1293, %v1673, %v1651
        %1678 = vrot.lane.b32.xlu0 %v1231, 77
        %v1679 = vpop.permute.xlu0 %1678
        %1680 = vrot.lane.b32.xlu0 %v1234, 77
        %v1681 = vpop.permute.xlu0 %1680
        %1682 = vrot.lane.b32.xlu0 %v1231, 79
        %v1683 = vpop.permute.xlu0 %1682
        %1684 = vrot.lane.b32.xlu0 %v1234, 79
        %v1685 = vpop.permute.xlu0 %1684
        %1686 = vrot.lane.b32.xlu0 %v1231, 81
        %v1687 = vpop.permute.xlu0 %1686
        %1688 = vrot.lane.b32.xlu0 %v1234, 81
        %v1689 = vpop.permute.xlu0 %1688
        %1690 = vrot.lane.b32.xlu0 %v1231, 83
        %v1691 = vpop.permute.xlu0 %1690
        %1692 = vrot.lane.b32.xlu0 %v1234, 83
        %v1693 = vpop.permute.xlu0 %1692
        %1694 = vrot.lane.b32.xlu0 %v1231, 85
        %v1695 = vpop.permute.xlu0 %1694
        %1696 = vrot.lane.b32.xlu0 %v1234, 85
        %v1697 = vpop.permute.xlu0 %1696
        %1698 = vrot.lane.b32.xlu0 %v1231, 87
        %v1699 = vpop.permute.xlu0 %1698
        %1700 = vrot.lane.b32.xlu0 %v1234, 87
        %v1701 = vpop.permute.xlu0 %1700
        %1702 = vrot.lane.b32.xlu0 %v1231, 89
        %v1703 = vpop.permute.xlu0 %1702
        %1704 = vrot.lane.b32.xlu0 %v1234, 89
        %v1705 = vpop.permute.xlu0 %1704
        %v1708 = vsel %vm1266, %v1679, %v1683
        %v1711 = vsel %vm1266, %v1681, %v1685
        %v1713 = vsel %vm1273, %v1708, %v1687
        %v1715 = vsel %vm1273, %v1711, %v1689
        %v1717 = vsel %vm1278, %v1713, %v1691
        %v1719 = vsel %vm1278, %v1715, %v1693
        %v1721 = vsel %vm1283, %v1717, %v1695
        %v1723 = vsel %vm1283, %v1719, %v1697
        %v1725 = vsel %vm1288, %v1721, %v1699
        %v1727 = vsel %vm1288, %v1723, %v1701
        %v1729 = vsel %vm1293, %v1725, %v1703
        %v1731 = vsel %vm1293, %v1727, %v1705
        %1732 = vrot.lane.b32.xlu0 %v1231, 55
        %v1733 = vpop.permute.xlu0 %1732
        %1734 = vrot.lane.b32.xlu0 %v1234, 55
        %v1735 = vpop.permute.xlu0 %1734
        %1736 = vrot.lane.b32.xlu0 %v1231, 57
        %v1737 = vpop.permute.xlu0 %1736
        %1738 = vrot.lane.b32.xlu0 %v1234, 57
        %v1739 = vpop.permute.xlu0 %1738
        %1740 = vrot.lane.b32.xlu0 %v1231, 59
        %v1741 = vpop.permute.xlu0 %1740
        %1742 = vrot.lane.b32.xlu0 %v1234, 59
        %v1743 = vpop.permute.xlu0 %1742
        %1744 = vrot.lane.b32.xlu0 %v1231, 61
        %v1745 = vpop.permute.xlu0 %1744
        %1746 = vrot.lane.b32.xlu0 %v1234, 61
        %v1747 = vpop.permute.xlu0 %1746
        %1748 = vrot.lane.b32.xlu0 %v1231, 63
        %v1749 = vpop.permute.xlu0 %1748
        %1750 = vrot.lane.b32.xlu0 %v1234, 63
        %v1751 = vpop.permute.xlu0 %1750
        %1752 = vrot.lane.b32.xlu0 %v1231, 65
        %v1753 = vpop.permute.xlu0 %1752
        %1754 = vrot.lane.b32.xlu0 %v1234, 65
        %v1755 = vpop.permute.xlu0 %1754
        %1756 = vrot.lane.b32.xlu0 %v1231, 67
        %v1757 = vpop.permute.xlu0 %1756
        %1758 = vrot.lane.b32.xlu0 %v1234, 67
        %v1759 = vpop.permute.xlu0 %1758
        %v1762 = vsel %vm1266, %v1733, %v1737
        %v1765 = vsel %vm1266, %v1735, %v1739
        %v1767 = vsel %vm1273, %v1762, %v1741
        %v1769 = vsel %vm1273, %v1765, %v1743
        %v1771 = vsel %vm1278, %v1767, %v1745
        %v1773 = vsel %vm1278, %v1769, %v1747
        %v1775 = vsel %vm1283, %v1771, %v1749
        %v1777 = vsel %vm1283, %v1773, %v1751
        %v1779 = vsel %vm1288, %v1775, %v1753
        %v1781 = vsel %vm1288, %v1777, %v1755
        %v1783 = vsel %vm1293, %v1779, %v1757
        %v1785 = vsel %vm1293, %v1781, %v1759
        %1786 = vrot.lane.b32.xlu0 %v1231, 33
        %v1787 = vpop.permute.xlu0 %1786
        %1788 = vrot.lane.b32.xlu0 %v1234, 33
        %v1789 = vpop.permute.xlu0 %1788
        %1790 = vrot.lane.b32.xlu0 %v1231, 35
        %v1791 = vpop.permute.xlu0 %1790
        %1792 = vrot.lane.b32.xlu0 %v1234, 35
        %v1793 = vpop.permute.xlu0 %1792
        %1794 = vrot.lane.b32.xlu0 %v1231, 37
        %v1795 = vpop.permute.xlu0 %1794
        %1796 = vrot.lane.b32.xlu0 %v1234, 37
        %v1797 = vpop.permute.xlu0 %1796
        %1798 = vrot.lane.b32.xlu0 %v1231, 39
        %v1799 = vpop.permute.xlu0 %1798
        %1800 = vrot.lane.b32.xlu0 %v1234, 39
        %v1801 = vpop.permute.xlu0 %1800
        %1802 = vrot.lane.b32.xlu0 %v1231, 41
        %v1803 = vpop.permute.xlu0 %1802
        %1804 = vrot.lane.b32.xlu0 %v1234, 41
        %v1805 = vpop.permute.xlu0 %1804
        %1806 = vrot.lane.b32.xlu0 %v1231, 43
        %v1807 = vpop.permute.xlu0 %1806
        %1808 = vrot.lane.b32.xlu0 %v1234, 43
        %v1809 = vpop.permute.xlu0 %1808
        %1810 = vrot.lane.b32.xlu0 %v1231, 45
        %v1811 = vpop.permute.xlu0 %1810
        %1812 = vrot.lane.b32.xlu0 %v1234, 45
        %v1813 = vpop.permute.xlu0 %1812
        %v1816 = vsel %vm1266, %v1787, %v1791
        %v1819 = vsel %vm1266, %v1789, %v1793
        %v1821 = vsel %vm1273, %v1816, %v1795
        %v1823 = vsel %vm1273, %v1819, %v1797
        %v1825 = vsel %vm1278, %v1821, %v1799
        %v1827 = vsel %vm1278, %v1823, %v1801
        %v1829 = vsel %vm1283, %v1825, %v1803
        %v1831 = vsel %vm1283, %v1827, %v1805
        %v1833 = vsel %vm1288, %v1829, %v1807
        %v1835 = vsel %vm1288, %v1831, %v1809
        %v1837 = vsel %vm1293, %v1833, %v1811
        %v1839 = vsel %vm1293, %v1835, %v1813
        %1840 = vrot.lane.b32.xlu0 %v1231, 11
        %v1841 = vpop.permute.xlu0 %1840
        %1842 = vrot.lane.b32.xlu0 %v1234, 11
        %v1843 = vpop.permute.xlu0 %1842
        %1844 = vrot.lane.b32.xlu0 %v1231, 13
        %v1845 = vpop.permute.xlu0 %1844
        %1846 = vrot.lane.b32.xlu0 %v1234, 13
        %v1847 = vpop.permute.xlu0 %1846
        %1848 = vrot.lane.b32.xlu0 %v1231, 15
        %v1849 = vpop.permute.xlu0 %1848
        %1850 = vrot.lane.b32.xlu0 %v1234, 15
        %v1851 = vpop.permute.xlu0 %1850
        %1854 = vrot.lane.b32.xlu0 %v1231, 17
        %v1855 = vpop.permute.xlu0 %1854
        %1856 = vrot.lane.b32.xlu0 %v1232, 17
        %v1857 = vpop.permute.xlu0 %1856
        %1858 = vrot.lane.b32.xlu0 %v1234, 17
        %v1859 = vpop.permute.xlu0 %1858
        %1860 = vrot.lane.b32.xlu0 %v1235, 17
        %v1861 = vpop.permute.xlu0 %1860
        %vm1862 = vcmask 138240
        %v1863 = vsel %vm1862, %v1855, %v1857
        %v1864 = vsel %vm1862, %v1859, %v1861
        %1865 = vrot.lane.b32.xlu0 %v1232, 19
        %v1866 = vpop.permute.xlu0 %1865
        %1867 = vrot.lane.b32.xlu0 %v1235, 19
        %v1868 = vpop.permute.xlu0 %1867
        %1869 = vrot.lane.b32.xlu0 %v1231, 21
        %v1870 = vpop.permute.xlu0 %1869
        %1871 = vrot.lane.b32.xlu0 %v1234, 21
        %v1872 = vpop.permute.xlu0 %1871
        %1873 = vrot.lane.b32.xlu0 %v1231, 23
        %v1874 = vpop.permute.xlu0 %1873
        %1875 = vrot.lane.b32.xlu0 %v1234, 23
        %v1876 = vpop.permute.xlu0 %1875
        %v1879 = vsel %vm1266, %v1841, %v1845
        %v1882 = vsel %vm1266, %v1843, %v1847
        %v1884 = vsel %vm1273, %v1879, %v1849
        %v1886 = vsel %vm1273, %v1882, %v1851
        %v1888 = vsel %vm1278, %v1884, %v1863
        %v1890 = vsel %vm1278, %v1886, %v1864
        %v1892 = vsel %vm1283, %v1888, %v1866
        %v1894 = vsel %vm1283, %v1890, %v1868
        %v1896 = vsel %vm1288, %v1892, %v1870
        %v1898 = vsel %vm1288, %v1894, %v1872
        %v1900 = vsel %vm1293, %v1896, %v1874
        %v1902 = vsel %vm1293, %v1898, %v1876
        %1903 = vrot.lane.b32.xlu0 %v1232, 117
        %v1904 = vpop.permute.xlu0 %1903
        %1905 = vrot.lane.b32.xlu0 %v1235, 117
        %v1906 = vpop.permute.xlu0 %1905
        %1907 = vrot.lane.b32.xlu0 %v1232, 119
        %v1908 = vpop.permute.xlu0 %1907
        %1909 = vrot.lane.b32.xlu0 %v1235, 119
        %v1910 = vpop.permute.xlu0 %1909
        %1911 = vrot.lane.b32.xlu0 %v1232, 121
        %v1912 = vpop.permute.xlu0 %1911
        %1913 = vrot.lane.b32.xlu0 %v1235, 121
        %v1914 = vpop.permute.xlu0 %1913
        %1915 = vrot.lane.b32.xlu0 %v1232, 123
        %v1916 = vpop.permute.xlu0 %1915
        %1917 = vrot.lane.b32.xlu0 %v1235, 123
        %v1918 = vpop.permute.xlu0 %1917
        %1919 = vrot.lane.b32.xlu0 %v1232, 125
        %v1920 = vpop.permute.xlu0 %1919
        %1921 = vrot.lane.b32.xlu0 %v1235, 125
        %v1922 = vpop.permute.xlu0 %1921
        %1923 = vrot.lane.b32.xlu0 %v1232, 127
        %v1924 = vpop.permute.xlu0 %1923
        %1925 = vrot.lane.b32.xlu0 %v1235, 127
        %v1926 = vpop.permute.xlu0 %1925
        %1927 = vrot.lane.b32.xlu0 %v1232, 1
        %v1928 = vpop.permute.xlu0 %1927
        %1929 = vrot.lane.b32.xlu0 %v1235, 1
        %v1930 = vpop.permute.xlu0 %1929
        %v1933 = vsel %vm1266, %v1904, %v1908
        %v1936 = vsel %vm1266, %v1906, %v1910
        %v1938 = vsel %vm1273, %v1933, %v1912
        %v1940 = vsel %vm1273, %v1936, %v1914
        %v1942 = vsel %vm1278, %v1938, %v1916
        %v1944 = vsel %vm1278, %v1940, %v1918
        %v1946 = vsel %vm1283, %v1942, %v1920
        %v1948 = vsel %vm1283, %v1944, %v1922
        %v1950 = vsel %vm1288, %v1946, %v1924
        %v1952 = vsel %vm1288, %v1948, %v1926
        %v1954 = vsel %vm1293, %v1950, %v1928
        %v1956 = vsel %vm1293, %v1952, %v1930
        %1957 = vrot.lane.b32.xlu0 %v1232, 95
        %v1958 = vpop.permute.xlu0 %1957
        %1959 = vrot.lane.b32.xlu0 %v1235, 95
        %v1960 = vpop.permute.xlu0 %1959
        %1961 = vrot.lane.b32.xlu0 %v1232, 97
        %v1962 = vpop.permute.xlu0 %1961
        %1963 = vrot.lane.b32.xlu0 %v1235, 97
        %v1964 = vpop.permute.xlu0 %1963
        %1965 = vrot.lane.b32.xlu0 %v1232, 99
        %v1966 = vpop.permute.xlu0 %1965
        %1967 = vrot.lane.b32.xlu0 %v1235, 99
        %v1968 = vpop.permute.xlu0 %1967
        %1969 = vrot.lane.b32.xlu0 %v1232, 101
        %v1970 = vpop.permute.xlu0 %1969
        %1971 = vrot.lane.b32.xlu0 %v1235, 101
        %v1972 = vpop.permute.xlu0 %1971
        %1973 = vrot.lane.b32.xlu0 %v1232, 103
        %v1974 = vpop.permute.xlu0 %1973
        %1975 = vrot.lane.b32.xlu0 %v1235, 103
        %v1976 = vpop.permute.xlu0 %1975
        %1977 = vrot.lane.b32.xlu0 %v1232, 105
        %v1978 = vpop.permute.xlu0 %1977
        %1979 = vrot.lane.b32.xlu0 %v1235, 105
        %v1980 = vpop.permute.xlu0 %1979
        %1981 = vrot.lane.b32.xlu0 %v1232, 107
        %v1982 = vpop.permute.xlu0 %1981
        %1983 = vrot.lane.b32.xlu0 %v1235, 107
        %v1984 = vpop.permute.xlu0 %1983
        %v1987 = vsel %vm1266, %v1958, %v1962
        %v1990 = vsel %vm1266, %v1960, %v1964
        %v1992 = vsel %vm1273, %v1987, %v1966
        %v1994 = vsel %vm1273, %v1990, %v1968
        %v1996 = vsel %vm1278, %v1992, %v1970
        %v1998 = vsel %vm1278, %v1994, %v1972
        %v2000 = vsel %vm1283, %v1996, %v1974
        %v2002 = vsel %vm1283, %v1998, %v1976
        %v2004 = vsel %vm1288, %v2000, %v1978
        %v2006 = vsel %vm1288, %v2002, %v1980
        %v2008 = vsel %vm1293, %v2004, %v1982
        %v2010 = vsel %vm1293, %v2006, %v1984
        %2011 = vrot.lane.b32.xlu0 %v1232, 73
        %v2012 = vpop.permute.xlu0 %2011
        %2013 = vrot.lane.b32.xlu0 %v1235, 73
        %v2014 = vpop.permute.xlu0 %2013
        %2015 = vrot.lane.b32.xlu0 %v1232, 75
        %v2016 = vpop.permute.xlu0 %2015
        %2017 = vrot.lane.b32.xlu0 %v1235, 75
        %v2018 = vpop.permute.xlu0 %2017
        %2019 = vrot.lane.b32.xlu0 %v1232, 77
        %v2020 = vpop.permute.xlu0 %2019
        %2021 = vrot.lane.b32.xlu0 %v1235, 77
        %v2022 = vpop.permute.xlu0 %2021
        %2023 = vrot.lane.b32.xlu0 %v1232, 79
        %v2024 = vpop.permute.xlu0 %2023
        %2025 = vrot.lane.b32.xlu0 %v1235, 79
        %v2026 = vpop.permute.xlu0 %2025
        %2027 = vrot.lane.b32.xlu0 %v1232, 81
        %v2028 = vpop.permute.xlu0 %2027
        %2029 = vrot.lane.b32.xlu0 %v1235, 81
        %v2030 = vpop.permute.xlu0 %2029
        %2031 = vrot.lane.b32.xlu0 %v1232, 83
        %v2032 = vpop.permute.xlu0 %2031
        %2033 = vrot.lane.b32.xlu0 %v1235, 83
        %v2034 = vpop.permute.xlu0 %2033
        %2035 = vrot.lane.b32.xlu0 %v1232, 85
        %v2036 = vpop.permute.xlu0 %2035
        %2037 = vrot.lane.b32.xlu0 %v1235, 85
        %v2038 = vpop.permute.xlu0 %2037
        %v2041 = vsel %vm1266, %v2012, %v2016
        %v2044 = vsel %vm1266, %v2014, %v2018
        %v2046 = vsel %vm1273, %v2041, %v2020
        %v2048 = vsel %vm1273, %v2044, %v2022
        %v2050 = vsel %vm1278, %v2046, %v2024
        %v2052 = vsel %vm1278, %v2048, %v2026
        %v2054 = vsel %vm1283, %v2050, %v2028
        %v2056 = vsel %vm1283, %v2052, %v2030
        %v2058 = vsel %vm1288, %v2054, %v2032
        %v2060 = vsel %vm1288, %v2056, %v2034
        %v2062 = vsel %vm1293, %v2058, %v2036
        %v2064 = vsel %vm1293, %v2060, %v2038
        %2065 = vrot.lane.b32.xlu0 %v1232, 51
        %v2066 = vpop.permute.xlu0 %2065
        %2067 = vrot.lane.b32.xlu0 %v1235, 51
        %v2068 = vpop.permute.xlu0 %2067
        %2069 = vrot.lane.b32.xlu0 %v1232, 53
        %v2070 = vpop.permute.xlu0 %2069
        %2071 = vrot.lane.b32.xlu0 %v1235, 53
        %v2072 = vpop.permute.xlu0 %2071
        %2073 = vrot.lane.b32.xlu0 %v1232, 55
        %v2074 = vpop.permute.xlu0 %2073
        %2075 = vrot.lane.b32.xlu0 %v1235, 55
        %v2076 = vpop.permute.xlu0 %2075
        %2077 = vrot.lane.b32.xlu0 %v1232, 57
        %v2078 = vpop.permute.xlu0 %2077
        %2079 = vrot.lane.b32.xlu0 %v1235, 57
        %v2080 = vpop.permute.xlu0 %2079
        %2081 = vrot.lane.b32.xlu0 %v1232, 59
        %v2082 = vpop.permute.xlu0 %2081
        %2083 = vrot.lane.b32.xlu0 %v1235, 59
        %v2084 = vpop.permute.xlu0 %2083
        %2085 = vrot.lane.b32.xlu0 %v1232, 61
        %v2086 = vpop.permute.xlu0 %2085
        %2087 = vrot.lane.b32.xlu0 %v1235, 61
        %v2088 = vpop.permute.xlu0 %2087
        %2089 = vrot.lane.b32.xlu0 %v1232, 63
        %v2090 = vpop.permute.xlu0 %2089
        %2091 = vrot.lane.b32.xlu0 %v1235, 63
        %v2092 = vpop.permute.xlu0 %2091
        %v2095 = vsel %vm1266, %v2066, %v2070
        %v2098 = vsel %vm1266, %v2068, %v2072
        %v2100 = vsel %vm1273, %v2095, %v2074
        %v2102 = vsel %vm1273, %v2098, %v2076
        %v2104 = vsel %vm1278, %v2100, %v2078
        %v2106 = vsel %vm1278, %v2102, %v2080
        %v2108 = vsel %vm1283, %v2104, %v2082
        %v2110 = vsel %vm1283, %v2106, %v2084
        %v2112 = vsel %vm1288, %v2108, %v2086
        %v2114 = vsel %vm1288, %v2110, %v2088
        %v2116 = vsel %vm1293, %v2112, %v2090
        %v2118 = vsel %vm1293, %v2114, %v2092
        %2121 = vrot.lane.b32.xlu0 %v1403, 22
        %v2122 = vpop.permute.xlu0 %2121
        %2123 = vrot.lane.b32.xlu0 %v1405, 22
        %v2124 = vpop.permute.xlu0 %2123
        %2127 = vrot.lane.b32.xlu0 %v1349, 44
        %v2128 = vpop.permute.xlu0 %2127
        %2129 = vrot.lane.b32.xlu0 %v1351, 44
        %v2130 = vpop.permute.xlu0 %2129
        %2133 = vrot.lane.b32.xlu0 %v1295, 66
        %v2134 = vpop.permute.xlu0 %2133
        %2135 = vrot.lane.b32.xlu0 %v1297, 66
        %v2136 = vpop.permute.xlu0 %2135
        %2137 = vrot.lane.b32.xlu0 %v1349, 88
        %v2138 = vpop.permute.xlu0 %2137
        %2139 = vrot.lane.b32.xlu0 %v1351, 88
        %v2140 = vpop.permute.xlu0 %2139
        %2141 = vrot.lane.b32.xlu0 %v1403, 110
        %v2142 = vpop.permute.xlu0 %2141
        %2143 = vrot.lane.b32.xlu0 %v1405, 110
        %v2144 = vpop.permute.xlu0 %2143
        %2147 = vrot.lane.b32.xlu0 %v1457, 4
        %v2148 = vpop.permute.xlu0 %2147
        %2149 = vrot.lane.b32.xlu0 %v1459, 4
        %v2150 = vpop.permute.xlu0 %2149
        %2153 = vrot.lane.b32.xlu0 %v1511, 26
        %v2154 = vpop.permute.xlu0 %2153
        %2155 = vrot.lane.b32.xlu0 %v1513, 26
        %v2156 = vpop.permute.xlu0 %2155
        %2159 = vrot.lane.b32.xlu0 %v1565, 48
        %v2160 = vpop.permute.xlu0 %2159
        %2161 = vrot.lane.b32.xlu0 %v1567, 48
        %v2162 = vpop.permute.xlu0 %2161
        %2165 = vrot.lane.b32.xlu0 %v1621, 70
        %v2166 = vpop.permute.xlu0 %2165
        %2167 = vrot.lane.b32.xlu0 %v1623, 70
        %v2168 = vpop.permute.xlu0 %2167
        %2171 = vrot.lane.b32.xlu0 %v1675, 92
        %v2172 = vpop.permute.xlu0 %2171
        %2173 = vrot.lane.b32.xlu0 %v1677, 92
        %v2174 = vpop.permute.xlu0 %2173
        %2177 = vrot.lane.b32.xlu0 %v1729, 114
        %v2178 = vpop.permute.xlu0 %2177
        %2179 = vrot.lane.b32.xlu0 %v1731, 114
        %v2180 = vpop.permute.xlu0 %2179
        %2183 = vrot.lane.b32.xlu0 %v1783, 8
        %v2184 = vpop.permute.xlu0 %2183
        %2185 = vrot.lane.b32.xlu0 %v1785, 8
        %v2186 = vpop.permute.xlu0 %2185
        %2189 = vrot.lane.b32.xlu0 %v1837, 30
        %v2190 = vpop.permute.xlu0 %2189
        %2191 = vrot.lane.b32.xlu0 %v1839, 30
        %v2192 = vpop.permute.xlu0 %2191
        %2195 = vrot.lane.b32.xlu0 %v1900, 52
        %v2196 = vpop.permute.xlu0 %2195
        %2197 = vrot.lane.b32.xlu0 %v1902, 52
        %v2198 = vpop.permute.xlu0 %2197
        %2201 = vrot.lane.b32.xlu0 %v1954, 74
        %v2202 = vpop.permute.xlu0 %2201
        %2203 = vrot.lane.b32.xlu0 %v1956, 74
        %v2204 = vpop.permute.xlu0 %2203
        %vm2205 = vcmask 179200
        %v2207 = vsel %vm2205, %v1457, %v2122
        %v2209 = vsel %vm2205, %v1459, %v2124
        %vm2210 = vcmask 359424
        %v2212 = vsel %vm2210, %v2207, %v2128
        %v2214 = vsel %vm2210, %v2209, %v2130
        %vm2215 = vcmask 539648
        %v2217 = vsel %vm2215, %v2212, %v2134
        %v2219 = vsel %vm2215, %v2214, %v2136
        %vm2220 = vcmask 719872
        %v2222 = vsel %vm2220, %v2217, %v2138
        %v2224 = vsel %vm2220, %v2219, %v2140
        %vm2225 = vcmask 900096
        %v2227 = vsel %vm2225, %v2222, %v2142
        %v2230 = vsel %vm2225, %v2224, %v2144
        %vm2231 = vcmask 31744
        %v2233 = vsel %vm2231, %v2142, %v2148
        %v2235 = vsel %vm2231, %v2144, %v2150
        %vm2236 = vcmask 211968
        %v2238 = vsel %vm2236, %v2233, %v2154
        %v2240 = vsel %vm2236, %v2235, %v2156
        %vm2241 = vcmask 392192
        %v2243 = vsel %vm2241, %v2238, %v2160
        %v2245 = vsel %vm2241, %v2240, %v2162
        %vm2246 = vcmask 572416
        %v2248 = vsel %vm2246, %v2243, %v2166
        %v2250 = vsel %vm2246, %v2245, %v2168
        %vm2251 = vcmask 752640
        %v2253 = vsel %vm2251, %v2248, %v2172
        %v2255 = vsel %vm2251, %v2250, %v2174
        %vm2256 = vcmask 932864
        %v2258 = vsel %vm2256, %v2253, %v2178
        %v2261 = vsel %vm2256, %v2255, %v2180
        %vm2262 = vcmask 64512
        %v2264 = vsel %vm2262, %v2178, %v2184
        %v2266 = vsel %vm2262, %v2180, %v2186
        %vm2267 = vcmask 244736
        %v2269 = vsel %vm2267, %v2264, %v2190
        %v2271 = vsel %vm2267, %v2266, %v2192
        %vm2272 = vcmask 424960
        %v2274 = vsel %vm2272, %v2269, %v2196
        %v2276 = vsel %vm2272, %v2271, %v2198
        %vm2277 = vcmask 605184
        %v2279 = vsel %vm2277, %v2274, %v2202
        %v2281 = vsel %vm2277, %v2276, %v2204
        %2284 = vrot.lane.b32.xlu0 %v2062, 22
        %v2285 = vpop.permute.xlu0 %2284
        %2286 = vrot.lane.b32.xlu0 %v2064, 22
        %v2287 = vpop.permute.xlu0 %2286
        %2290 = vrot.lane.b32.xlu0 %v2116, 44
        %v2291 = vpop.permute.xlu0 %2290
        %2292 = vrot.lane.b32.xlu0 %v2118, 44
        %v2293 = vpop.permute.xlu0 %2292
        %2294 = vrot.lane.b32.xlu0 %v2062, 66
        %v2295 = vpop.permute.xlu0 %2294
        %2296 = vrot.lane.b32.xlu0 %v2064, 66
        %v2297 = vpop.permute.xlu0 %2296
        %2300 = vrot.lane.b32.xlu0 %v2008, 88
        %v2301 = vpop.permute.xlu0 %2300
        %2302 = vrot.lane.b32.xlu0 %v2010, 88
        %v2303 = vpop.permute.xlu0 %2302
        %2304 = vrot.lane.b32.xlu0 %v1954, 110
        %v2305 = vpop.permute.xlu0 %2304
        %2306 = vrot.lane.b32.xlu0 %v1956, 110
        %v2307 = vpop.permute.xlu0 %2306
        %2308 = vrot.lane.b32.xlu0 %v1295, 4
        %v2309 = vpop.permute.xlu0 %2308
        %2310 = vrot.lane.b32.xlu0 %v1297, 4
        %v2311 = vpop.permute.xlu0 %2310
        %v2313 = vsel %vm2205, %v2008, %v2285
        %v2315 = vsel %vm2205, %v2010, %v2287
        %v2317 = vsel %vm2210, %v2313, %v2291
        %v2319 = vsel %vm2210, %v2315, %v2293
        %v2321 = vsel %vm2215, %v2317, %v2295
        %v2323 = vsel %vm2215, %v2319, %v2297
        %v2325 = vsel %vm2220, %v2321, %v2301
        %v2327 = vsel %vm2220, %v2323, %v2303
        %v2329 = vsel %vm2225, %v2325, %v2305
        %v2331 = vsel %vm2225, %v2327, %v2307
        %v2333 = vsel %vm2231, %v2305, %v2309
        %v2335 = vsel %vm2231, %v2307, %v2311
        %2340 = vrot.lane.b32.xlu0 %v2329, 96
        %v2341 = vpop.permute.xlu0 %2340
        %2342 = vrot.lane.b32.xlu0 %v2333, 96
        %v2343 = vpop.permute.xlu0 %2342
        %2344 = vrot.lane.b32.xlu0 %v2331, 96
        %v2345 = vpop.permute.xlu0 %2344
        %2346 = vrot.lane.b32.xlu0 %v2335, 96
        %v2347 = vpop.permute.xlu0 %2346
        %vm2348 = vcmask 785408
        %v2349 = vsel %vm2348, %v2341, %v2343
        %v2350 = vsel %vm2348, %v2345, %v2347
        %v2352 = vsel %vm1080, %v2279, %v2341
        %v2355 = vsel %vm1080, %v2281, %v2345
        %vm2362 = vcmask 1043456
        %v2363 = vrot.slane %v2227, 4
        %v2364 = vrot.slane %v2258, 4
        %v2365 = vrot.slane %v2352, 4
        %v2366 = vrot.slane %v2230, 4
        %v2367 = vsel %vm2362, %v2363, %v2366
        %v2368 = vrot.slane %v2261, 4
        %v2369 = vsel %vm2362, %v2364, %v2368
        %v2370 = vrot.slane %v2355, 4
        %v2371 = vsel %vm2362, %v2365, %v2370
        %2372 = vrot.lane.b32.xlu0 %v2363, 127
        %v2373 = vpop.permute.xlu0 %2372
        %2374 = vrot.lane.b32.xlu0 %v2364, 127
        %v2375 = vpop.permute.xlu0 %2374
        %2376 = vrot.lane.b32.xlu0 %v2365, 127
        %v2377 = vpop.permute.xlu0 %2376
        %2378 = vrot.lane.b32.xlu0 %v2367, 127
        %v2379 = vpop.permute.xlu0 %2378
        %2380 = vrot.lane.b32.xlu0 %v2369, 127
        %v2381 = vpop.permute.xlu0 %2380
        %2382 = vrot.lane.b32.xlu0 %v2371, 127
        %v2383 = vpop.permute.xlu0 %2382
        %v2384 = vsel %vm294, %v2373, %v2375
        %v2385 = vsel %vm294, %v2375, %v2377
        %v2386 = vsel %vm294, %v2379, %v2381
        %v2387 = vsel %vm294, %v2381, %v2383
        %2391 = vrot.lane.b32.xlu0 %v2227, 126
        %v2392 = vpop.permute.xlu0 %2391
        %2393 = vrot.lane.b32.xlu0 %v2258, 126
        %v2394 = vpop.permute.xlu0 %2393
        %2395 = vrot.lane.b32.xlu0 %v2352, 126
        %v2396 = vpop.permute.xlu0 %2395
        %2397 = vrot.lane.b32.xlu0 %v2230, 126
        %v2398 = vpop.permute.xlu0 %2397
        %2399 = vrot.lane.b32.xlu0 %v2261, 126
        %v2400 = vpop.permute.xlu0 %2399
        %2401 = vrot.lane.b32.xlu0 %v2355, 126
        %v2402 = vpop.permute.xlu0 %2401
        %v2403 = vsel %vm305, %v2392, %v2394
        %v2404 = vsel %vm305, %v2394, %v2396
        %v2405 = vsel %vm305, %v2398, %v2400
        %v2406 = vsel %vm305, %v2400, %v2402
        %2410 = vrot.lane.b32.xlu0 %v2363, 125
        %v2411 = vpop.permute.xlu0 %2410
        %2412 = vrot.lane.b32.xlu0 %v2364, 125
        %v2413 = vpop.permute.xlu0 %2412
        %2414 = vrot.lane.b32.xlu0 %v2365, 125
        %v2415 = vpop.permute.xlu0 %2414
        %2416 = vrot.lane.b32.xlu0 %v2367, 125
        %v2417 = vpop.permute.xlu0 %2416
        %2418 = vrot.lane.b32.xlu0 %v2369, 125
        %v2419 = vpop.permute.xlu0 %2418
        %2420 = vrot.lane.b32.xlu0 %v2371, 125
        %v2421 = vpop.permute.xlu0 %2420
        %v2422 = vsel %vm315, %v2411, %v2413
        %v2423 = vsel %vm315, %v2413, %v2415
        %v2424 = vsel %vm315, %v2417, %v2419
        %v2425 = vsel %vm315, %v2419, %v2421
        %2429 = vrot.lane.b32.xlu0 %v2227, 124
        %v2430 = vpop.permute.xlu0 %2429
        %2431 = vrot.lane.b32.xlu0 %v2258, 124
        %v2432 = vpop.permute.xlu0 %2431
        %2433 = vrot.lane.b32.xlu0 %v2352, 124
        %v2434 = vpop.permute.xlu0 %2433
        %2435 = vrot.lane.b32.xlu0 %v2230, 124
        %v2436 = vpop.permute.xlu0 %2435
        %2437 = vrot.lane.b32.xlu0 %v2261, 124
        %v2438 = vpop.permute.xlu0 %2437
        %2439 = vrot.lane.b32.xlu0 %v2355, 124
        %v2440 = vpop.permute.xlu0 %2439
        %v2441 = vsel %vm324, %v2430, %v2432
        %v2442 = vsel %vm324, %v2432, %v2434
        %v2443 = vsel %vm324, %v2436, %v2438
        %v2444 = vsel %vm324, %v2438, %v2440
        %2448 = vrot.lane.b32.xlu0 %v2363, 123
        %v2449 = vpop.permute.xlu0 %2448
        %2450 = vrot.lane.b32.xlu0 %v2364, 123
        %v2451 = vpop.permute.xlu0 %2450
        %2452 = vrot.lane.b32.xlu0 %v2365, 123
        %v2453 = vpop.permute.xlu0 %2452
        %2454 = vrot.lane.b32.xlu0 %v2367, 123
        %v2455 = vpop.permute.xlu0 %2454
        %2456 = vrot.lane.b32.xlu0 %v2369, 123
        %v2457 = vpop.permute.xlu0 %2456
        %2458 = vrot.lane.b32.xlu0 %v2371, 123
        %v2459 = vpop.permute.xlu0 %2458
        %v2460 = vsel %vm333, %v2449, %v2451
        %v2461 = vsel %vm333, %v2451, %v2453
        %v2462 = vsel %vm333, %v2455, %v2457
        %v2463 = vsel %vm333, %v2457, %v2459
        %2467 = vrot.lane.b32.xlu0 %v2227, 122
        %v2468 = vpop.permute.xlu0 %2467
        %2469 = vrot.lane.b32.xlu0 %v2258, 122
        %v2470 = vpop.permute.xlu0 %2469
        %2471 = vrot.lane.b32.xlu0 %v2352, 122
        %v2472 = vpop.permute.xlu0 %2471
        %2473 = vrot.lane.b32.xlu0 %v2230, 122
        %v2474 = vpop.permute.xlu0 %2473
        %2475 = vrot.lane.b32.xlu0 %v2261, 122
        %v2476 = vpop.permute.xlu0 %2475
        %2477 = vrot.lane.b32.xlu0 %v2355, 122
        %v2478 = vpop.permute.xlu0 %2477
        %v2479 = vsel %vm342, %v2468, %v2470
        %v2480 = vsel %vm342, %v2470, %v2472
        %v2481 = vsel %vm342, %v2474, %v2476
        %v2482 = vsel %vm342, %v2476, %v2478
        %2486 = vrot.lane.b32.xlu0 %v2363, 106
        %v2487 = vpop.permute.xlu0 %2486
        %2488 = vrot.lane.b32.xlu0 %v2364, 106
        %v2489 = vpop.permute.xlu0 %2488
        %2490 = vrot.lane.b32.xlu0 %v2365, 106
        %v2491 = vpop.permute.xlu0 %2490
        %2492 = vrot.lane.b32.xlu0 %v2367, 106
        %v2493 = vpop.permute.xlu0 %2492
        %2494 = vrot.lane.b32.xlu0 %v2369, 106
        %v2495 = vpop.permute.xlu0 %2494
        %2496 = vrot.lane.b32.xlu0 %v2371, 106
        %v2497 = vpop.permute.xlu0 %2496
        %v2498 = vsel %vm351, %v2487, %v2489
        %v2499 = vsel %vm351, %v2489, %v2491
        %v2500 = vsel %vm351, %v2493, %v2495
        %v2501 = vsel %vm351, %v2495, %v2497
        %2505 = vrot.lane.b32.xlu0 %v2227, 105
        %v2506 = vpop.permute.xlu0 %2505
        %2507 = vrot.lane.b32.xlu0 %v2258, 105
        %v2508 = vpop.permute.xlu0 %2507
        %2509 = vrot.lane.b32.xlu0 %v2352, 105
        %v2510 = vpop.permute.xlu0 %2509
        %2511 = vrot.lane.b32.xlu0 %v2230, 105
        %v2512 = vpop.permute.xlu0 %2511
        %2513 = vrot.lane.b32.xlu0 %v2261, 105
        %v2514 = vpop.permute.xlu0 %2513
        %2515 = vrot.lane.b32.xlu0 %v2355, 105
        %v2516 = vpop.permute.xlu0 %2515
        %v2517 = vsel %vm360, %v2506, %v2508
        %v2518 = vsel %vm360, %v2508, %v2510
        %v2519 = vsel %vm360, %v2512, %v2514
        %v2520 = vsel %vm360, %v2514, %v2516
        %2524 = vrot.lane.b32.xlu0 %v2363, 104
        %v2525 = vpop.permute.xlu0 %2524
        %2526 = vrot.lane.b32.xlu0 %v2364, 104
        %v2527 = vpop.permute.xlu0 %2526
        %2528 = vrot.lane.b32.xlu0 %v2365, 104
        %v2529 = vpop.permute.xlu0 %2528
        %2530 = vrot.lane.b32.xlu0 %v2367, 104
        %v2531 = vpop.permute.xlu0 %2530
        %2532 = vrot.lane.b32.xlu0 %v2369, 104
        %v2533 = vpop.permute.xlu0 %2532
        %2534 = vrot.lane.b32.xlu0 %v2371, 104
        %v2535 = vpop.permute.xlu0 %2534
        %v2536 = vsel %vm369, %v2525, %v2527
        %v2537 = vsel %vm369, %v2527, %v2529
        %v2538 = vsel %vm369, %v2531, %v2533
        %v2539 = vsel %vm369, %v2533, %v2535
        %2543 = vrot.lane.b32.xlu0 %v2227, 103
        %v2544 = vpop.permute.xlu0 %2543
        %2545 = vrot.lane.b32.xlu0 %v2258, 103
        %v2546 = vpop.permute.xlu0 %2545
        %2547 = vrot.lane.b32.xlu0 %v2352, 103
        %v2548 = vpop.permute.xlu0 %2547
        %2549 = vrot.lane.b32.xlu0 %v2230, 103
        %v2550 = vpop.permute.xlu0 %2549
        %2551 = vrot.lane.b32.xlu0 %v2261, 103
        %v2552 = vpop.permute.xlu0 %2551
        %2553 = vrot.lane.b32.xlu0 %v2355, 103
        %v2554 = vpop.permute.xlu0 %2553
        %v2555 = vsel %vm378, %v2544, %v2546
        %v2556 = vsel %vm378, %v2546, %v2548
        %v2557 = vsel %vm378, %v2550, %v2552
        %v2558 = vsel %vm378, %v2552, %v2554
        %2562 = vrot.lane.b32.xlu0 %v2363, 102
        %v2563 = vpop.permute.xlu0 %2562
        %2564 = vrot.lane.b32.xlu0 %v2364, 102
        %v2565 = vpop.permute.xlu0 %2564
        %2566 = vrot.lane.b32.xlu0 %v2365, 102
        %v2567 = vpop.permute.xlu0 %2566
        %2568 = vrot.lane.b32.xlu0 %v2367, 102
        %v2569 = vpop.permute.xlu0 %2568
        %2570 = vrot.lane.b32.xlu0 %v2369, 102
        %v2571 = vpop.permute.xlu0 %2570
        %2572 = vrot.lane.b32.xlu0 %v2371, 102
        %v2573 = vpop.permute.xlu0 %2572
        %v2574 = vsel %vm387, %v2563, %v2565
        %v2575 = vsel %vm387, %v2565, %v2567
        %v2576 = vsel %vm387, %v2569, %v2571
        %v2577 = vsel %vm387, %v2571, %v2573
        %2581 = vrot.lane.b32.xlu0 %v2227, 101
        %v2582 = vpop.permute.xlu0 %2581
        %2583 = vrot.lane.b32.xlu0 %v2258, 101
        %v2584 = vpop.permute.xlu0 %2583
        %2585 = vrot.lane.b32.xlu0 %v2352, 101
        %v2586 = vpop.permute.xlu0 %2585
        %2587 = vrot.lane.b32.xlu0 %v2230, 101
        %v2588 = vpop.permute.xlu0 %2587
        %2589 = vrot.lane.b32.xlu0 %v2261, 101
        %v2590 = vpop.permute.xlu0 %2589
        %2591 = vrot.lane.b32.xlu0 %v2355, 101
        %v2592 = vpop.permute.xlu0 %2591
        %v2593 = vsel %vm396, %v2582, %v2584
        %v2594 = vsel %vm396, %v2584, %v2586
        %v2595 = vsel %vm396, %v2588, %v2590
        %v2596 = vsel %vm396, %v2590, %v2592
        %2600 = vrot.lane.b32.xlu0 %v2363, 100
        %v2601 = vpop.permute.xlu0 %2600
        %2602 = vrot.lane.b32.xlu0 %v2364, 100
        %v2603 = vpop.permute.xlu0 %2602
        %2604 = vrot.lane.b32.xlu0 %v2365, 100
        %v2605 = vpop.permute.xlu0 %2604
        %2606 = vrot.lane.b32.xlu0 %v2367, 100
        %v2607 = vpop.permute.xlu0 %2606
        %2608 = vrot.lane.b32.xlu0 %v2369, 100
        %v2609 = vpop.permute.xlu0 %2608
        %2610 = vrot.lane.b32.xlu0 %v2371, 100
        %v2611 = vpop.permute.xlu0 %2610
        %v2612 = vsel %vm405, %v2601, %v2603
        %v2613 = vsel %vm405, %v2603, %v2605
        %v2614 = vsel %vm405, %v2607, %v2609
        %v2615 = vsel %vm405, %v2609, %v2611
        %2619 = vrot.lane.b32.xlu0 %v2227, 84
        %v2620 = vpop.permute.xlu0 %2619
        %2621 = vrot.lane.b32.xlu0 %v2258, 84
        %v2622 = vpop.permute.xlu0 %2621
        %2623 = vrot.lane.b32.xlu0 %v2352, 84
        %v2624 = vpop.permute.xlu0 %2623
        %2625 = vrot.lane.b32.xlu0 %v2349, 84
        %v2626 = vpop.permute.xlu0 %2625
        %2627 = vrot.lane.b32.xlu0 %v2230, 84
        %v2628 = vpop.permute.xlu0 %2627
        %2629 = vrot.lane.b32.xlu0 %v2261, 84
        %v2630 = vpop.permute.xlu0 %2629
        %2631 = vrot.lane.b32.xlu0 %v2355, 84
        %v2632 = vpop.permute.xlu0 %2631
        %2633 = vrot.lane.b32.xlu0 %v2350, 84
        %v2634 = vpop.permute.xlu0 %2633
        %v2635 = vsel %vm416, %v2620, %v2622
        %v2636 = vsel %vm416, %v2622, %v2624
        %v2637 = vsel %vm416, %v2624, %v2626
        %v2638 = vsel %vm416, %v2628, %v2630
        %v2639 = vsel %vm416, %v2630, %v2632
        %v2640 = vsel %vm416, %v2632, %v2634
        %v2644 = vrot.slane %v2349, 4
        %v2645 = vrot.slane %v2350, 4
        %v2646 = vsel %vm2362, %v2644, %v2645
        %2647 = vrot.lane.b32.xlu0 %v2363, 83
        %v2648 = vpop.permute.xlu0 %2647
        %2649 = vrot.lane.b32.xlu0 %v2364, 83
        %v2650 = vpop.permute.xlu0 %2649
        %2651 = vrot.lane.b32.xlu0 %v2365, 83
        %v2652 = vpop.permute.xlu0 %2651
        %2653 = vrot.lane.b32.xlu0 %v2644, 83
        %v2654 = vpop.permute.xlu0 %2653
        %2655 = vrot.lane.b32.xlu0 %v2367, 83
        %v2656 = vpop.permute.xlu0 %2655
        %2657 = vrot.lane.b32.xlu0 %v2369, 83
        %v2658 = vpop.permute.xlu0 %2657
        %2659 = vrot.lane.b32.xlu0 %v2371, 83
        %v2660 = vpop.permute.xlu0 %2659
        %2661 = vrot.lane.b32.xlu0 %v2646, 83
        %v2662 = vpop.permute.xlu0 %2661
        %v2663 = vsel %vm428, %v2648, %v2650
        %v2664 = vsel %vm428, %v2650, %v2652
        %v2665 = vsel %vm428, %v2652, %v2654
        %v2666 = vsel %vm428, %v2656, %v2658
        %v2667 = vsel %vm428, %v2658, %v2660
        %v2668 = vsel %vm428, %v2660, %v2662
        %v2673 = vsel %vm442, %v2230, %v2384
        %v2676 = vsel %vm442, %v2261, %v2385
        %v2679 = vsel %vm442, %v2355, %v2377
        %v2683 = vsel %vm442, %v2405, %v2422
        %v2687 = vsel %vm442, %v2406, %v2423
        %v2691 = vsel %vm442, %v2402, %v2415
        %v2695 = vsel %vm442, %v2443, %v2460
        %v2699 = vsel %vm442, %v2444, %v2461
        %v2703 = vsel %vm442, %v2440, %v2453
        %v2707 = vsel %vm442, %v2481, %v2498
        %v2711 = vsel %vm442, %v2482, %v2499
        %v2715 = vsel %vm442, %v2478, %v2491
        %v2719 = vsel %vm442, %v2519, %v2536
        %v2723 = vsel %vm442, %v2520, %v2537
        %v2727 = vsel %vm442, %v2516, %v2529
        %v2731 = vsel %vm442, %v2557, %v2574
        %v2735 = vsel %vm442, %v2558, %v2575
        %v2739 = vsel %vm442, %v2554, %v2567
        %v2743 = vsel %vm442, %v2595, %v2612
        %v2747 = vsel %vm442, %v2596, %v2613
        %v2751 = vsel %vm442, %v2592, %v2605
        %v2755 = vsel %vm442, %v2638, %v2663
        %v2759 = vsel %vm442, %v2639, %v2664
        %v2763 = vsel %vm442, %v2640, %v2665
        %2765 = vrot.lane.b32.xlu0 %v2644, 127
        %v2766 = vpop.permute.xlu0 %2765
        %2767 = vrot.lane.b32.xlu0 %v2646, 127
        %v2768 = vpop.permute.xlu0 %2767
        %v2769 = vsel %vm294, %v2377, %v2766
        %v2770 = vsel %vm294, %v2383, %v2768
        %2771 = vrot.lane.b32.xlu0 %v2349, 126
        %v2772 = vpop.permute.xlu0 %2771
        %2773 = vrot.lane.b32.xlu0 %v2350, 126
        %v2774 = vpop.permute.xlu0 %2773
        %v2775 = vsel %vm305, %v2396, %v2772
        %v2776 = vsel %vm305, %v2402, %v2774
        %2777 = vrot.lane.b32.xlu0 %v2644, 125
        %v2778 = vpop.permute.xlu0 %2777
        %2779 = vrot.lane.b32.xlu0 %v2646, 125
        %v2780 = vpop.permute.xlu0 %2779
        %v2781 = vsel %vm315, %v2415, %v2778
        %v2782 = vsel %vm315, %v2421, %v2780
        %2783 = vrot.lane.b32.xlu0 %v2349, 124
        %v2784 = vpop.permute.xlu0 %2783
        %2785 = vrot.lane.b32.xlu0 %v2350, 124
        %v2786 = vpop.permute.xlu0 %2785
        %v2787 = vsel %vm324, %v2434, %v2784
        %v2788 = vsel %vm324, %v2440, %v2786
        %2789 = vrot.lane.b32.xlu0 %v2363, 108
        %v2790 = vpop.permute.xlu0 %2789
        %2791 = vrot.lane.b32.xlu0 %v2364, 108
        %v2792 = vpop.permute.xlu0 %2791
        %2793 = vrot.lane.b32.xlu0 %v2365, 108
        %v2794 = vpop.permute.xlu0 %2793
        %2795 = vrot.lane.b32.xlu0 %v2644, 108
        %v2796 = vpop.permute.xlu0 %2795
        %2797 = vrot.lane.b32.xlu0 %v2367, 108
        %v2798 = vpop.permute.xlu0 %2797
        %2799 = vrot.lane.b32.xlu0 %v2369, 108
        %v2800 = vpop.permute.xlu0 %2799
        %2801 = vrot.lane.b32.xlu0 %v2371, 108
        %v2802 = vpop.permute.xlu0 %2801
        %2803 = vrot.lane.b32.xlu0 %v2646, 108
        %v2804 = vpop.permute.xlu0 %2803
        %v2805 = vsel %vm552, %v2790, %v2792
        %v2806 = vsel %vm552, %v2792, %v2794
        %v2807 = vsel %vm552, %v2794, %v2796
        %v2808 = vsel %vm552, %v2798, %v2800
        %v2809 = vsel %vm552, %v2800, %v2802
        %v2810 = vsel %vm552, %v2802, %v2804
        %2811 = vrot.lane.b32.xlu0 %v2227, 107
        %v2812 = vpop.permute.xlu0 %2811
        %2813 = vrot.lane.b32.xlu0 %v2258, 107
        %v2814 = vpop.permute.xlu0 %2813
        %2815 = vrot.lane.b32.xlu0 %v2352, 107
        %v2816 = vpop.permute.xlu0 %2815
        %2817 = vrot.lane.b32.xlu0 %v2349, 107
        %v2818 = vpop.permute.xlu0 %2817
        %2819 = vrot.lane.b32.xlu0 %v2230, 107
        %v2820 = vpop.permute.xlu0 %2819
        %2821 = vrot.lane.b32.xlu0 %v2261, 107
        %v2822 = vpop.permute.xlu0 %2821
        %2823 = vrot.lane.b32.xlu0 %v2355, 107
        %v2824 = vpop.permute.xlu0 %2823
        %2825 = vrot.lane.b32.xlu0 %v2350, 107
        %v2826 = vpop.permute.xlu0 %2825
        %v2827 = vsel %vm564, %v2812, %v2814
        %v2828 = vsel %vm564, %v2814, %v2816
        %v2829 = vsel %vm564, %v2816, %v2818
        %v2830 = vsel %vm564, %v2820, %v2822
        %v2831 = vsel %vm564, %v2822, %v2824
        %v2832 = vsel %vm564, %v2824, %v2826
        %2833 = vrot.lane.b32.xlu0 %v2644, 106
        %v2834 = vpop.permute.xlu0 %2833
        %2835 = vrot.lane.b32.xlu0 %v2646, 106
        %v2836 = vpop.permute.xlu0 %2835
        %v2837 = vsel %vm351, %v2491, %v2834
        %v2838 = vsel %vm351, %v2497, %v2836
        %2839 = vrot.lane.b32.xlu0 %v2349, 105
        %v2840 = vpop.permute.xlu0 %2839
        %2841 = vrot.lane.b32.xlu0 %v2350, 105
        %v2842 = vpop.permute.xlu0 %2841
        %v2843 = vsel %vm360, %v2510, %v2840
        %v2844 = vsel %vm360, %v2516, %v2842
        %2845 = vrot.lane.b32.xlu0 %v2644, 104
        %v2846 = vpop.permute.xlu0 %2845
        %2847 = vrot.lane.b32.xlu0 %v2646, 104
        %v2848 = vpop.permute.xlu0 %2847
        %v2849 = vsel %vm369, %v2529, %v2846
        %v2850 = vsel %vm369, %v2535, %v2848
        %2851 = vrot.lane.b32.xlu0 %v2349, 103
        %v2852 = vpop.permute.xlu0 %2851
        %2853 = vrot.lane.b32.xlu0 %v2350, 103
        %v2854 = vpop.permute.xlu0 %2853
        %v2855 = vsel %vm378, %v2548, %v2852
        %v2856 = vsel %vm378, %v2554, %v2854
        %2857 = vrot.lane.b32.xlu0 %v2644, 102
        %v2858 = vpop.permute.xlu0 %2857
        %2859 = vrot.lane.b32.xlu0 %v2646, 102
        %v2860 = vpop.permute.xlu0 %2859
        %v2861 = vsel %vm387, %v2567, %v2858
        %v2862 = vsel %vm387, %v2573, %v2860
        %2863 = vrot.lane.b32.xlu0 %v2227, 86
        %v2864 = vpop.permute.xlu0 %2863
        %2865 = vrot.lane.b32.xlu0 %v2258, 86
        %v2866 = vpop.permute.xlu0 %2865
        %2867 = vrot.lane.b32.xlu0 %v2352, 86
        %v2868 = vpop.permute.xlu0 %2867
        %2869 = vrot.lane.b32.xlu0 %v2349, 86
        %v2870 = vpop.permute.xlu0 %2869
        %2871 = vrot.lane.b32.xlu0 %v2230, 86
        %v2872 = vpop.permute.xlu0 %2871
        %2873 = vrot.lane.b32.xlu0 %v2261, 86
        %v2874 = vpop.permute.xlu0 %2873
        %2875 = vrot.lane.b32.xlu0 %v2355, 86
        %v2876 = vpop.permute.xlu0 %2875
        %2877 = vrot.lane.b32.xlu0 %v2350, 86
        %v2878 = vpop.permute.xlu0 %2877
        %v2879 = vsel %vm591, %v2864, %v2866
        %v2880 = vsel %vm591, %v2866, %v2868
        %v2881 = vsel %vm591, %v2868, %v2870
        %v2882 = vsel %vm591, %v2872, %v2874
        %v2883 = vsel %vm591, %v2874, %v2876
        %v2884 = vsel %vm591, %v2876, %v2878
        %2885 = vrot.lane.b32.xlu0 %v2363, 85
        %v2886 = vpop.permute.xlu0 %2885
        %2887 = vrot.lane.b32.xlu0 %v2364, 85
        %v2888 = vpop.permute.xlu0 %2887
        %2889 = vrot.lane.b32.xlu0 %v2365, 85
        %v2890 = vpop.permute.xlu0 %2889
        %2891 = vrot.lane.b32.xlu0 %v2644, 85
        %v2892 = vpop.permute.xlu0 %2891
        %2893 = vrot.lane.b32.xlu0 %v2367, 85
        %v2894 = vpop.permute.xlu0 %2893
        %2895 = vrot.lane.b32.xlu0 %v2369, 85
        %v2896 = vpop.permute.xlu0 %2895
        %2897 = vrot.lane.b32.xlu0 %v2371, 85
        %v2898 = vpop.permute.xlu0 %2897
        %2899 = vrot.lane.b32.xlu0 %v2646, 85
        %v2900 = vpop.permute.xlu0 %2899
        %v2901 = vsel %vm603, %v2886, %v2888
        %v2902 = vsel %vm603, %v2888, %v2890
        %v2903 = vsel %vm603, %v2890, %v2892
        %v2904 = vsel %vm603, %v2894, %v2896
        %v2905 = vsel %vm603, %v2896, %v2898
        %v2906 = vsel %vm603, %v2898, %v2900
        %v2908 = vsel %vm442, %v2355, %v2769
        %v2911 = vsel %vm442, %v2350, %v2766
        %v2914 = vsel %vm442, %v2776, %v2781
        %v2917 = vsel %vm442, %v2774, %v2778
        %v2919 = vsel %vm442, %v2443, %v2805
        %v2921 = vsel %vm442, %v2444, %v2806
        %v2924 = vsel %vm442, %v2788, %v2807
        %v2927 = vsel %vm442, %v2786, %v2796
        %v2929 = vsel %vm442, %v2830, %v2498
        %v2931 = vsel %vm442, %v2831, %v2499
        %v2934 = vsel %vm442, %v2832, %v2837
        %v2937 = vsel %vm442, %v2826, %v2834
        %v2940 = vsel %vm442, %v2844, %v2849
        %v2943 = vsel %vm442, %v2842, %v2846
        %v2946 = vsel %vm442, %v2856, %v2861
        %v2949 = vsel %vm442, %v2854, %v2858
        %v2952 = vsel %vm442, %v2882, %v2901
        %v2955 = vsel %vm442, %v2883, %v2902
        %v2958 = vsel %vm442, %v2884, %v2903
        %v2961 = vsel %vm442, %v2878, %v2892
        %v2964 = vsel %vm442, %v2634, %v2654
        %2965 = vrot.lane.b32.xlu0 %v2363, 110
        %v2966 = vpop.permute.xlu0 %2965
        %2967 = vrot.lane.b32.xlu0 %v2364, 110
        %v2968 = vpop.permute.xlu0 %2967
        %2969 = vrot.lane.b32.xlu0 %v2365, 110
        %v2970 = vpop.permute.xlu0 %2969
        %2971 = vrot.lane.b32.xlu0 %v2644, 110
        %v2972 = vpop.permute.xlu0 %2971
        %2973 = vrot.lane.b32.xlu0 %v2367, 110
        %v2974 = vpop.permute.xlu0 %2973
        %2975 = vrot.lane.b32.xlu0 %v2369, 110
        %v2976 = vpop.permute.xlu0 %2975
        %2977 = vrot.lane.b32.xlu0 %v2371, 110
        %v2978 = vpop.permute.xlu0 %2977
        %2979 = vrot.lane.b32.xlu0 %v2646, 110
        %v2980 = vpop.permute.xlu0 %2979
        %v2981 = vsel %vm688, %v2966, %v2968
        %v2982 = vsel %vm688, %v2968, %v2970
        %v2983 = vsel %vm688, %v2970, %v2972
        %v2984 = vsel %vm688, %v2974, %v2976
        %v2985 = vsel %vm688, %v2976, %v2978
        %v2986 = vsel %vm688, %v2978, %v2980
        %2987 = vrot.lane.b32.xlu0 %v2227, 109
        %v2988 = vpop.permute.xlu0 %2987
        %2989 = vrot.lane.b32.xlu0 %v2258, 109
        %v2990 = vpop.permute.xlu0 %2989
        %2991 = vrot.lane.b32.xlu0 %v2352, 109
        %v2992 = vpop.permute.xlu0 %2991
        %2993 = vrot.lane.b32.xlu0 %v2349, 109
        %v2994 = vpop.permute.xlu0 %2993
        %2995 = vrot.lane.b32.xlu0 %v2230, 109
        %v2996 = vpop.permute.xlu0 %2995
        %2997 = vrot.lane.b32.xlu0 %v2261, 109
        %v2998 = vpop.permute.xlu0 %2997
        %2999 = vrot.lane.b32.xlu0 %v2355, 109
        %v3000 = vpop.permute.xlu0 %2999
        %3001 = vrot.lane.b32.xlu0 %v2350, 109
        %v3002 = vpop.permute.xlu0 %3001
        %v3003 = vsel %vm700, %v2988, %v2990
        %v3004 = vsel %vm700, %v2990, %v2992
        %v3005 = vsel %vm700, %v2992, %v2994
        %v3006 = vsel %vm700, %v2996, %v2998
        %v3007 = vsel %vm700, %v2998, %v3000
        %v3008 = vsel %vm700, %v3000, %v3002
        %3009 = vrot.lane.b32.xlu0 %v2258, 88
        %v3010 = vpop.permute.xlu0 %3009
        %3011 = vrot.lane.b32.xlu0 %v2352, 88
        %v3012 = vpop.permute.xlu0 %3011
        %3013 = vrot.lane.b32.xlu0 %v2349, 88
        %v3014 = vpop.permute.xlu0 %3013
        %3015 = vrot.lane.b32.xlu0 %v2261, 88
        %v3016 = vpop.permute.xlu0 %3015
        %3017 = vrot.lane.b32.xlu0 %v2355, 88
        %v3018 = vpop.permute.xlu0 %3017
        %3019 = vrot.lane.b32.xlu0 %v2350, 88
        %v3020 = vpop.permute.xlu0 %3019
        %v3021 = vsel %vm710, %v3010, %v3012
        %v3022 = vsel %vm710, %v3012, %v3014
        %v3023 = vsel %vm710, %v3016, %v3018
        %v3024 = vsel %vm710, %v3018, %v3020
        %3025 = vrot.lane.b32.xlu0 %v2364, 87
        %v3026 = vpop.permute.xlu0 %3025
        %3027 = vrot.lane.b32.xlu0 %v2365, 87
        %v3028 = vpop.permute.xlu0 %3027
        %3029 = vrot.lane.b32.xlu0 %v2644, 87
        %v3030 = vpop.permute.xlu0 %3029
        %3031 = vrot.lane.b32.xlu0 %v2369, 87
        %v3032 = vpop.permute.xlu0 %3031
        %3033 = vrot.lane.b32.xlu0 %v2371, 87
        %v3034 = vpop.permute.xlu0 %3033
        %3035 = vrot.lane.b32.xlu0 %v2646, 87
        %v3036 = vpop.permute.xlu0 %3035
        %v3037 = vsel %vm719, %v3026, %v3028
        %v3038 = vsel %vm719, %v3028, %v3030
        %v3039 = vsel %vm719, %v3032, %v3034
        %v3040 = vsel %vm719, %v3034, %v3036
        %v3042 = vsel %vm442, %v2405, %v2981
        %v3044 = vsel %vm442, %v2406, %v2982
        %v3046 = vsel %vm442, %v2776, %v2983
        %v3048 = vsel %vm442, %v2774, %v2972
        %v3050 = vsel %vm442, %v3006, %v2805
        %v3052 = vsel %vm442, %v3007, %v2806
        %v3054 = vsel %vm442, %v3008, %v2807
        %v3056 = vsel %vm442, %v3002, %v2796
        %v3059 = vsel %vm442, %v3016, %v3026
        %v3062 = vsel %vm442, %v3023, %v3037
        %v3065 = vsel %vm442, %v3024, %v3038
        %v3068 = vsel %vm442, %v3020, %v3030
        %v3071 = vsel %vm442, %v2874, %v2888
        %v3074 = vsel %vm442, %v2630, %v2650
        %3107 = vrot.lane.b32.xlu0 %v2227, 82
        %v3108 = vpop.permute.xlu0 %3107
        %3109 = vrot.lane.b32.xlu0 %v2258, 82
        %v3110 = vpop.permute.xlu0 %3109
        %3111 = vrot.lane.b32.xlu0 %v2352, 82
        %v3112 = vpop.permute.xlu0 %3111
        %3113 = vrot.lane.b32.xlu0 %v2349, 82
        %v3114 = vpop.permute.xlu0 %3113
        %3115 = vrot.lane.b32.xlu0 %v2673, 82
        %v3116 = vpop.permute.xlu0 %3115
        %3117 = vrot.lane.b32.xlu0 %v2676, 82
        %v3118 = vpop.permute.xlu0 %3117
        %3119 = vrot.lane.b32.xlu0 %v2908, 82
        %v3120 = vpop.permute.xlu0 %3119
        %3121 = vrot.lane.b32.xlu0 %v2911, 82
        %v3122 = vpop.permute.xlu0 %3121
        %3123 = vrot.lane.b32.xlu0 %v2386, 82
        %v3124 = vpop.permute.xlu0 %3123
        %3125 = vrot.lane.b32.xlu0 %v2387, 82
        %v3126 = vpop.permute.xlu0 %3125
        %3127 = vrot.lane.b32.xlu0 %v2770, 82
        %v3128 = vpop.permute.xlu0 %3127
        %3129 = vrot.lane.b32.xlu0 %v2768, 82
        %v3130 = vpop.permute.xlu0 %3129
        %3131 = vrot.lane.b32.xlu0 %v2403, 82
        %v3132 = vpop.permute.xlu0 %3131
        %3133 = vrot.lane.b32.xlu0 %v2404, 82
        %v3134 = vpop.permute.xlu0 %3133
        %3135 = vrot.lane.b32.xlu0 %v2775, 82
        %v3136 = vpop.permute.xlu0 %3135
        %3137 = vrot.lane.b32.xlu0 %v2772, 82
        %v3138 = vpop.permute.xlu0 %3137
        %3139 = vrot.lane.b32.xlu0 %v2683, 82
        %v3140 = vpop.permute.xlu0 %3139
        %3141 = vrot.lane.b32.xlu0 %v2687, 82
        %v3142 = vpop.permute.xlu0 %3141
        %3143 = vrot.lane.b32.xlu0 %v2914, 82
        %v3144 = vpop.permute.xlu0 %3143
        %3145 = vrot.lane.b32.xlu0 %v2917, 82
        %v3146 = vpop.permute.xlu0 %3145
        %3147 = vrot.lane.b32.xlu0 %v2424, 82
        %v3148 = vpop.permute.xlu0 %3147
        %3149 = vrot.lane.b32.xlu0 %v2425, 82
        %v3150 = vpop.permute.xlu0 %3149
        %3151 = vrot.lane.b32.xlu0 %v2782, 82
        %v3152 = vpop.permute.xlu0 %3151
        %3153 = vrot.lane.b32.xlu0 %v2780, 82
        %v3154 = vpop.permute.xlu0 %3153
        %3155 = vrot.lane.b32.xlu0 %v2441, 82
        %v3156 = vpop.permute.xlu0 %3155
        %3157 = vrot.lane.b32.xlu0 %v2442, 82
        %v3158 = vpop.permute.xlu0 %3157
        %3159 = vrot.lane.b32.xlu0 %v2787, 82
        %v3160 = vpop.permute.xlu0 %3159
        %3161 = vrot.lane.b32.xlu0 %v2784, 82
        %v3162 = vpop.permute.xlu0 %3161
        %3163 = vrot.lane.b32.xlu0 %v2919, 82
        %v3164 = vpop.permute.xlu0 %3163
        %3165 = vrot.lane.b32.xlu0 %v2921, 82
        %v3166 = vpop.permute.xlu0 %3165
        %3167 = vrot.lane.b32.xlu0 %v2924, 82
        %v3168 = vpop.permute.xlu0 %3167
        %3169 = vrot.lane.b32.xlu0 %v2927, 82
        %v3170 = vpop.permute.xlu0 %3169
        %3171 = vrot.lane.b32.xlu0 %v2808, 82
        %v3172 = vpop.permute.xlu0 %3171
        %3173 = vrot.lane.b32.xlu0 %v2809, 82
        %v3174 = vpop.permute.xlu0 %3173
        %3175 = vrot.lane.b32.xlu0 %v2810, 82
        %v3176 = vpop.permute.xlu0 %3175
        %3177 = vrot.lane.b32.xlu0 %v2804, 82
        %v3178 = vpop.permute.xlu0 %3177
        %3179 = vrot.lane.b32.xlu0 %v2827, 82
        %v3180 = vpop.permute.xlu0 %3179
        %3181 = vrot.lane.b32.xlu0 %v2828, 82
        %v3182 = vpop.permute.xlu0 %3181
        %3183 = vrot.lane.b32.xlu0 %v2829, 82
        %v3184 = vpop.permute.xlu0 %3183
        %3185 = vrot.lane.b32.xlu0 %v2818, 82
        %v3186 = vpop.permute.xlu0 %3185
        %3187 = vrot.lane.b32.xlu0 %v2929, 82
        %v3188 = vpop.permute.xlu0 %3187
        %3189 = vrot.lane.b32.xlu0 %v2931, 82
        %v3190 = vpop.permute.xlu0 %3189
        %3191 = vrot.lane.b32.xlu0 %v2934, 82
        %v3192 = vpop.permute.xlu0 %3191
        %3193 = vrot.lane.b32.xlu0 %v2937, 82
        %v3194 = vpop.permute.xlu0 %3193
        %3195 = vrot.lane.b32.xlu0 %v2500, 82
        %v3196 = vpop.permute.xlu0 %3195
        %3197 = vrot.lane.b32.xlu0 %v2501, 82
        %v3198 = vpop.permute.xlu0 %3197
        %3199 = vrot.lane.b32.xlu0 %v2838, 82
        %v3200 = vpop.permute.xlu0 %3199
        %3201 = vrot.lane.b32.xlu0 %v2836, 82
        %v3202 = vpop.permute.xlu0 %3201
        %3203 = vrot.lane.b32.xlu0 %v2517, 82
        %v3204 = vpop.permute.xlu0 %3203
        %3205 = vrot.lane.b32.xlu0 %v2518, 82
        %v3206 = vpop.permute.xlu0 %3205
        %3207 = vrot.lane.b32.xlu0 %v2843, 82
        %v3208 = vpop.permute.xlu0 %3207
        %3209 = vrot.lane.b32.xlu0 %v2840, 82
        %v3210 = vpop.permute.xlu0 %3209
        %3211 = vrot.lane.b32.xlu0 %v2719, 82
        %v3212 = vpop.permute.xlu0 %3211
        %3213 = vrot.lane.b32.xlu0 %v2723, 82
        %v3214 = vpop.permute.xlu0 %3213
        %3215 = vrot.lane.b32.xlu0 %v2940, 82
        %v3216 = vpop.permute.xlu0 %3215
        %3217 = vrot.lane.b32.xlu0 %v2943, 82
        %v3218 = vpop.permute.xlu0 %3217
        %3219 = vrot.lane.b32.xlu0 %v2538, 82
        %v3220 = vpop.permute.xlu0 %3219
        %3221 = vrot.lane.b32.xlu0 %v2539, 82
        %v3222 = vpop.permute.xlu0 %3221
        %3223 = vrot.lane.b32.xlu0 %v2850, 82
        %v3224 = vpop.permute.xlu0 %3223
        %3225 = vrot.lane.b32.xlu0 %v2848, 82
        %v3226 = vpop.permute.xlu0 %3225
        %3227 = vrot.lane.b32.xlu0 %v2555, 82
        %v3228 = vpop.permute.xlu0 %3227
        %3229 = vrot.lane.b32.xlu0 %v2556, 82
        %v3230 = vpop.permute.xlu0 %3229
        %3231 = vrot.lane.b32.xlu0 %v2855, 82
        %v3232 = vpop.permute.xlu0 %3231
        %3233 = vrot.lane.b32.xlu0 %v2852, 82
        %v3234 = vpop.permute.xlu0 %3233
        %3235 = vrot.lane.b32.xlu0 %v2731, 82
        %v3236 = vpop.permute.xlu0 %3235
        %3237 = vrot.lane.b32.xlu0 %v2735, 82
        %v3238 = vpop.permute.xlu0 %3237
        %3239 = vrot.lane.b32.xlu0 %v2946, 82
        %v3240 = vpop.permute.xlu0 %3239
        %3241 = vrot.lane.b32.xlu0 %v2949, 82
        %v3242 = vpop.permute.xlu0 %3241
        %3243 = vrot.lane.b32.xlu0 %v2576, 82
        %v3244 = vpop.permute.xlu0 %3243
        %3245 = vrot.lane.b32.xlu0 %v2577, 82
        %v3246 = vpop.permute.xlu0 %3245
        %3247 = vrot.lane.b32.xlu0 %v2862, 82
        %v3248 = vpop.permute.xlu0 %3247
        %3249 = vrot.lane.b32.xlu0 %v2860, 82
        %v3250 = vpop.permute.xlu0 %3249
        %3251 = vrot.lane.b32.xlu0 %v2879, 82
        %v3252 = vpop.permute.xlu0 %3251
        %3253 = vrot.lane.b32.xlu0 %v2880, 82
        %v3254 = vpop.permute.xlu0 %3253
        %3255 = vrot.lane.b32.xlu0 %v2881, 82
        %v3256 = vpop.permute.xlu0 %3255
        %3257 = vrot.lane.b32.xlu0 %v2870, 82
        %v3258 = vpop.permute.xlu0 %3257
        %3259 = vrot.lane.b32.xlu0 %v2952, 82
        %v3260 = vpop.permute.xlu0 %3259
        %3261 = vrot.lane.b32.xlu0 %v2955, 82
        %v3262 = vpop.permute.xlu0 %3261
        %3263 = vrot.lane.b32.xlu0 %v2958, 82
        %v3264 = vpop.permute.xlu0 %3263
        %3265 = vrot.lane.b32.xlu0 %v2961, 82
        %v3266 = vpop.permute.xlu0 %3265
        %3267 = vrot.lane.b32.xlu0 %v2904, 82
        %v3268 = vpop.permute.xlu0 %3267
        %3269 = vrot.lane.b32.xlu0 %v2905, 82
        %v3270 = vpop.permute.xlu0 %3269
        %3271 = vrot.lane.b32.xlu0 %v2906, 82
        %v3272 = vpop.permute.xlu0 %3271
        %3273 = vrot.lane.b32.xlu0 %v2900, 82
        %v3274 = vpop.permute.xlu0 %3273
        %3275 = vrot.lane.b32.xlu0 %v2635, 82
        %v3276 = vpop.permute.xlu0 %3275
        %3277 = vrot.lane.b32.xlu0 %v2636, 82
        %v3278 = vpop.permute.xlu0 %3277
        %3279 = vrot.lane.b32.xlu0 %v2637, 82
        %v3280 = vpop.permute.xlu0 %3279
        %3281 = vrot.lane.b32.xlu0 %v2626, 82
        %v3282 = vpop.permute.xlu0 %3281
        %3283 = vrot.lane.b32.xlu0 %v2755, 82
        %v3284 = vpop.permute.xlu0 %3283
        %3285 = vrot.lane.b32.xlu0 %v2759, 82
        %v3286 = vpop.permute.xlu0 %3285
        %3287 = vrot.lane.b32.xlu0 %v2763, 82
        %v3288 = vpop.permute.xlu0 %3287
        %3289 = vrot.lane.b32.xlu0 %v2964, 82
        %v3290 = vpop.permute.xlu0 %3289
        %3291 = vrot.lane.b32.xlu0 %v2666, 82
        %v3292 = vpop.permute.xlu0 %3291
        %3293 = vrot.lane.b32.xlu0 %v2667, 82
        %v3294 = vpop.permute.xlu0 %3293
        %3295 = vrot.lane.b32.xlu0 %v2668, 82
        %v3296 = vpop.permute.xlu0 %3295
        %3297 = vrot.lane.b32.xlu0 %v2662, 82
        %v3298 = vpop.permute.xlu0 %3297
        %v3299 = vsel %vm817, %v3108, %v3110
        %v3300 = vsel %vm817, %v3110, %v3112
        %v3301 = vsel %vm817, %v3112, %v3114
        %v3302 = vsel %vm817, %v3116, %v3118
        %v3303 = vsel %vm817, %v3118, %v3120
        %v3304 = vsel %vm817, %v3120, %v3122
        %v3305 = vsel %vm817, %v3124, %v3126
        %v3306 = vsel %vm817, %v3126, %v3128
        %v3307 = vsel %vm817, %v3128, %v3130
        %v3308 = vsel %vm817, %v3132, %v3134
        %v3309 = vsel %vm817, %v3134, %v3136
        %v3310 = vsel %vm817, %v3136, %v3138
        %v3311 = vsel %vm817, %v3140, %v3142
        %v3312 = vsel %vm817, %v3142, %v3144
        %v3313 = vsel %vm817, %v3144, %v3146
        %v3314 = vsel %vm817, %v3148, %v3150
        %v3315 = vsel %vm817, %v3150, %v3152
        %v3316 = vsel %vm817, %v3152, %v3154
        %v3317 = vsel %vm817, %v3156, %v3158
        %v3318 = vsel %vm817, %v3158, %v3160
        %v3319 = vsel %vm817, %v3160, %v3162
        %v3320 = vsel %vm817, %v3164, %v3166
        %v3321 = vsel %vm817, %v3166, %v3168
        %v3322 = vsel %vm817, %v3168, %v3170
        %v3323 = vsel %vm817, %v3172, %v3174
        %v3324 = vsel %vm817, %v3174, %v3176
        %v3325 = vsel %vm817, %v3176, %v3178
        %v3326 = vsel %vm817, %v3180, %v3182
        %v3327 = vsel %vm817, %v3182, %v3184
        %v3328 = vsel %vm817, %v3184, %v3186
        %v3329 = vsel %vm817, %v3188, %v3190
        %v3330 = vsel %vm817, %v3190, %v3192
        %v3331 = vsel %vm817, %v3192, %v3194
        %v3332 = vsel %vm817, %v3196, %v3198
        %v3333 = vsel %vm817, %v3198, %v3200
        %v3334 = vsel %vm817, %v3200, %v3202
        %v3335 = vsel %vm817, %v3204, %v3206
        %v3336 = vsel %vm817, %v3206, %v3208
        %v3337 = vsel %vm817, %v3208, %v3210
        %v3338 = vsel %vm817, %v3212, %v3214
        %v3339 = vsel %vm817, %v3214, %v3216
        %v3340 = vsel %vm817, %v3216, %v3218
        %v3341 = vsel %vm817, %v3220, %v3222
        %v3342 = vsel %vm817, %v3222, %v3224
        %v3343 = vsel %vm817, %v3224, %v3226
        %v3344 = vsel %vm817, %v3228, %v3230
        %v3345 = vsel %vm817, %v3230, %v3232
        %v3346 = vsel %vm817, %v3232, %v3234
        %v3347 = vsel %vm817, %v3236, %v3238
        %v3348 = vsel %vm817, %v3238, %v3240
        %v3349 = vsel %vm817, %v3240, %v3242
        %v3350 = vsel %vm817, %v3244, %v3246
        %v3351 = vsel %vm817, %v3246, %v3248
        %v3352 = vsel %vm817, %v3248, %v3250
        %v3353 = vsel %vm817, %v3252, %v3254
        %v3354 = vsel %vm817, %v3254, %v3256
        %v3355 = vsel %vm817, %v3256, %v3258
        %v3356 = vsel %vm817, %v3260, %v3262
        %v3357 = vsel %vm817, %v3262, %v3264
        %v3358 = vsel %vm817, %v3264, %v3266
        %v3359 = vsel %vm817, %v3268, %v3270
        %v3360 = vsel %vm817, %v3270, %v3272
        %v3361 = vsel %vm817, %v3272, %v3274
        %v3362 = vsel %vm817, %v3276, %v3278
        %v3363 = vsel %vm817, %v3278, %v3280
        %v3364 = vsel %vm817, %v3280, %v3282
        %v3365 = vsel %vm817, %v3284, %v3286
        %v3366 = vsel %vm817, %v3286, %v3288
        %v3367 = vsel %vm817, %v3288, %v3290
        %v3368 = vsel %vm817, %v3292, %v3294
        %v3369 = vsel %vm817, %v3294, %v3296
        %v3370 = vsel %vm817, %v3296, %v3298
        %3457 = vrot.lane.b32.xlu0 %v2227, 36
        %v3458 = vpop.permute.xlu0 %3457
        %3459 = vrot.lane.b32.xlu0 %v2258, 36
        %v3460 = vpop.permute.xlu0 %3459
        %3461 = vrot.lane.b32.xlu0 %v2352, 36
        %v3462 = vpop.permute.xlu0 %3461
        %3463 = vrot.lane.b32.xlu0 %v2349, 36
        %v3464 = vpop.permute.xlu0 %3463
        %3465 = vrot.lane.b32.xlu0 %v2673, 36
        %v3466 = vpop.permute.xlu0 %3465
        %3467 = vrot.lane.b32.xlu0 %v2676, 36
        %v3468 = vpop.permute.xlu0 %3467
        %3469 = vrot.lane.b32.xlu0 %v2908, 36
        %v3470 = vpop.permute.xlu0 %3469
        %3471 = vrot.lane.b32.xlu0 %v2911, 36
        %v3472 = vpop.permute.xlu0 %3471
        %3473 = vrot.lane.b32.xlu0 %v2386, 36
        %v3474 = vpop.permute.xlu0 %3473
        %3475 = vrot.lane.b32.xlu0 %v2387, 36
        %v3476 = vpop.permute.xlu0 %3475
        %3477 = vrot.lane.b32.xlu0 %v2770, 36
        %v3478 = vpop.permute.xlu0 %3477
        %3479 = vrot.lane.b32.xlu0 %v2768, 36
        %v3480 = vpop.permute.xlu0 %3479
        %3481 = vrot.lane.b32.xlu0 %v2403, 36
        %v3482 = vpop.permute.xlu0 %3481
        %3483 = vrot.lane.b32.xlu0 %v2404, 36
        %v3484 = vpop.permute.xlu0 %3483
        %3485 = vrot.lane.b32.xlu0 %v2775, 36
        %v3486 = vpop.permute.xlu0 %3485
        %3487 = vrot.lane.b32.xlu0 %v2772, 36
        %v3488 = vpop.permute.xlu0 %3487
        %3489 = vrot.lane.b32.xlu0 %v3042, 36
        %v3490 = vpop.permute.xlu0 %3489
        %3491 = vrot.lane.b32.xlu0 %v3044, 36
        %v3492 = vpop.permute.xlu0 %3491
        %3493 = vrot.lane.b32.xlu0 %v3046, 36
        %v3494 = vpop.permute.xlu0 %3493
        %3495 = vrot.lane.b32.xlu0 %v3048, 36
        %v3496 = vpop.permute.xlu0 %3495
        %3497 = vrot.lane.b32.xlu0 %v2984, 36
        %v3498 = vpop.permute.xlu0 %3497
        %3499 = vrot.lane.b32.xlu0 %v2985, 36
        %v3500 = vpop.permute.xlu0 %3499
        %3501 = vrot.lane.b32.xlu0 %v2986, 36
        %v3502 = vpop.permute.xlu0 %3501
        %3503 = vrot.lane.b32.xlu0 %v2980, 36
        %v3504 = vpop.permute.xlu0 %3503
        %3505 = vrot.lane.b32.xlu0 %v3003, 36
        %v3506 = vpop.permute.xlu0 %3505
        %3507 = vrot.lane.b32.xlu0 %v3004, 36
        %v3508 = vpop.permute.xlu0 %3507
        %3509 = vrot.lane.b32.xlu0 %v3005, 36
        %v3510 = vpop.permute.xlu0 %3509
        %3511 = vrot.lane.b32.xlu0 %v2994, 36
        %v3512 = vpop.permute.xlu0 %3511
        %3513 = vrot.lane.b32.xlu0 %v3050, 36
        %v3514 = vpop.permute.xlu0 %3513
        %3515 = vrot.lane.b32.xlu0 %v3052, 36
        %v3516 = vpop.permute.xlu0 %3515
        %3517 = vrot.lane.b32.xlu0 %v3054, 36
        %v3518 = vpop.permute.xlu0 %3517
        %3519 = vrot.lane.b32.xlu0 %v3056, 36
        %v3520 = vpop.permute.xlu0 %3519
        %3521 = vrot.lane.b32.xlu0 %v2808, 36
        %v3522 = vpop.permute.xlu0 %3521
        %3523 = vrot.lane.b32.xlu0 %v2809, 36
        %v3524 = vpop.permute.xlu0 %3523
        %3525 = vrot.lane.b32.xlu0 %v2810, 36
        %v3526 = vpop.permute.xlu0 %3525
        %3527 = vrot.lane.b32.xlu0 %v2804, 36
        %v3528 = vpop.permute.xlu0 %3527
        %3529 = vrot.lane.b32.xlu0 %v2827, 36
        %v3530 = vpop.permute.xlu0 %3529
        %3531 = vrot.lane.b32.xlu0 %v2828, 36
        %v3532 = vpop.permute.xlu0 %3531
        %3533 = vrot.lane.b32.xlu0 %v2829, 36
        %v3534 = vpop.permute.xlu0 %3533
        %3535 = vrot.lane.b32.xlu0 %v2818, 36
        %v3536 = vpop.permute.xlu0 %3535
        %3537 = vrot.lane.b32.xlu0 %v2929, 36
        %v3538 = vpop.permute.xlu0 %3537
        %3539 = vrot.lane.b32.xlu0 %v2931, 36
        %v3540 = vpop.permute.xlu0 %3539
        %3541 = vrot.lane.b32.xlu0 %v2934, 36
        %v3542 = vpop.permute.xlu0 %3541
        %3543 = vrot.lane.b32.xlu0 %v2937, 36
        %v3544 = vpop.permute.xlu0 %3543
        %3545 = vrot.lane.b32.xlu0 %v2500, 36
        %v3546 = vpop.permute.xlu0 %3545
        %3547 = vrot.lane.b32.xlu0 %v2501, 36
        %v3548 = vpop.permute.xlu0 %3547
        %3549 = vrot.lane.b32.xlu0 %v2838, 36
        %v3550 = vpop.permute.xlu0 %3549
        %3551 = vrot.lane.b32.xlu0 %v2836, 36
        %v3552 = vpop.permute.xlu0 %3551
        %3553 = vrot.lane.b32.xlu0 %v2517, 36
        %v3554 = vpop.permute.xlu0 %3553
        %3555 = vrot.lane.b32.xlu0 %v2518, 36
        %v3556 = vpop.permute.xlu0 %3555
        %3557 = vrot.lane.b32.xlu0 %v2843, 36
        %v3558 = vpop.permute.xlu0 %3557
        %3559 = vrot.lane.b32.xlu0 %v2840, 36
        %v3560 = vpop.permute.xlu0 %3559
        %3561 = vrot.lane.b32.xlu0 %v2719, 36
        %v3562 = vpop.permute.xlu0 %3561
        %3563 = vrot.lane.b32.xlu0 %v2723, 36
        %v3564 = vpop.permute.xlu0 %3563
        %3565 = vrot.lane.b32.xlu0 %v2940, 36
        %v3566 = vpop.permute.xlu0 %3565
        %3567 = vrot.lane.b32.xlu0 %v2943, 36
        %v3568 = vpop.permute.xlu0 %3567
        %3569 = vrot.lane.b32.xlu0 %v2538, 36
        %v3570 = vpop.permute.xlu0 %3569
        %3571 = vrot.lane.b32.xlu0 %v2539, 36
        %v3572 = vpop.permute.xlu0 %3571
        %3573 = vrot.lane.b32.xlu0 %v2850, 36
        %v3574 = vpop.permute.xlu0 %3573
        %3575 = vrot.lane.b32.xlu0 %v2848, 36
        %v3576 = vpop.permute.xlu0 %3575
        %3577 = vrot.lane.b32.xlu0 %v3010, 36
        %v3578 = vpop.permute.xlu0 %3577
        %3579 = vrot.lane.b32.xlu0 %v3021, 36
        %v3580 = vpop.permute.xlu0 %3579
        %3581 = vrot.lane.b32.xlu0 %v3022, 36
        %v3582 = vpop.permute.xlu0 %3581
        %3583 = vrot.lane.b32.xlu0 %v3014, 36
        %v3584 = vpop.permute.xlu0 %3583
        %3585 = vrot.lane.b32.xlu0 %v3059, 36
        %v3586 = vpop.permute.xlu0 %3585
        %3587 = vrot.lane.b32.xlu0 %v3062, 36
        %v3588 = vpop.permute.xlu0 %3587
        %3589 = vrot.lane.b32.xlu0 %v3065, 36
        %v3590 = vpop.permute.xlu0 %3589
        %3591 = vrot.lane.b32.xlu0 %v3068, 36
        %v3592 = vpop.permute.xlu0 %3591
        %3593 = vrot.lane.b32.xlu0 %v3032, 36
        %v3594 = vpop.permute.xlu0 %3593
        %3595 = vrot.lane.b32.xlu0 %v3039, 36
        %v3596 = vpop.permute.xlu0 %3595
        %3597 = vrot.lane.b32.xlu0 %v3040, 36
        %v3598 = vpop.permute.xlu0 %3597
        %3599 = vrot.lane.b32.xlu0 %v3036, 36
        %v3600 = vpop.permute.xlu0 %3599
        %3601 = vrot.lane.b32.xlu0 %v2866, 36
        %v3602 = vpop.permute.xlu0 %3601
        %3603 = vrot.lane.b32.xlu0 %v2880, 36
        %v3604 = vpop.permute.xlu0 %3603
        %3605 = vrot.lane.b32.xlu0 %v2881, 36
        %v3606 = vpop.permute.xlu0 %3605
        %3607 = vrot.lane.b32.xlu0 %v2870, 36
        %v3608 = vpop.permute.xlu0 %3607
        %3609 = vrot.lane.b32.xlu0 %v3071, 36
        %v3610 = vpop.permute.xlu0 %3609
        %3611 = vrot.lane.b32.xlu0 %v2955, 36
        %v3612 = vpop.permute.xlu0 %3611
        %3613 = vrot.lane.b32.xlu0 %v2958, 36
        %v3614 = vpop.permute.xlu0 %3613
        %3615 = vrot.lane.b32.xlu0 %v2961, 36
        %v3616 = vpop.permute.xlu0 %3615
        %3617 = vrot.lane.b32.xlu0 %v2896, 36
        %v3618 = vpop.permute.xlu0 %3617
        %3619 = vrot.lane.b32.xlu0 %v2905, 36
        %v3620 = vpop.permute.xlu0 %3619
        %3621 = vrot.lane.b32.xlu0 %v2906, 36
        %v3622 = vpop.permute.xlu0 %3621
        %3623 = vrot.lane.b32.xlu0 %v2900, 36
        %v3624 = vpop.permute.xlu0 %3623
        %3625 = vrot.lane.b32.xlu0 %v2622, 36
        %v3626 = vpop.permute.xlu0 %3625
        %3627 = vrot.lane.b32.xlu0 %v2636, 36
        %v3628 = vpop.permute.xlu0 %3627
        %3629 = vrot.lane.b32.xlu0 %v2637, 36
        %v3630 = vpop.permute.xlu0 %3629
        %3631 = vrot.lane.b32.xlu0 %v2626, 36
        %v3632 = vpop.permute.xlu0 %3631
        %3633 = vrot.lane.b32.xlu0 %v3074, 36
        %v3634 = vpop.permute.xlu0 %3633
        %3635 = vrot.lane.b32.xlu0 %v2759, 36
        %v3636 = vpop.permute.xlu0 %3635
        %3637 = vrot.lane.b32.xlu0 %v2763, 36
        %v3638 = vpop.permute.xlu0 %3637
        %3639 = vrot.lane.b32.xlu0 %v2964, 36
        %v3640 = vpop.permute.xlu0 %3639
        %3641 = vrot.lane.b32.xlu0 %v2658, 36
        %v3642 = vpop.permute.xlu0 %3641
        %3643 = vrot.lane.b32.xlu0 %v2667, 36
        %v3644 = vpop.permute.xlu0 %3643
        %3645 = vrot.lane.b32.xlu0 %v2668, 36
        %v3646 = vpop.permute.xlu0 %3645
        %3647 = vrot.lane.b32.xlu0 %v2662, 36
        %v3648 = vpop.permute.xlu0 %3647
        %v3649 = vsel %vm887, %v3458, %v3460
        %v3650 = vsel %vm887, %v3460, %v3462
        %v3651 = vsel %vm887, %v3462, %v3464
        %v3652 = vsel %vm887, %v3466, %v3468
        %v3653 = vsel %vm887, %v3468, %v3470
        %v3654 = vsel %vm887, %v3470, %v3472
        %v3655 = vsel %vm887, %v3474, %v3476
        %v3656 = vsel %vm887, %v3476, %v3478
        %v3657 = vsel %vm887, %v3478, %v3480
        %v3658 = vsel %vm887, %v3482, %v3484
        %v3659 = vsel %vm887, %v3484, %v3486
        %v3660 = vsel %vm887, %v3486, %v3488
        %v3661 = vsel %vm887, %v3490, %v3492
        %v3662 = vsel %vm887, %v3492, %v3494
        %v3663 = vsel %vm887, %v3494, %v3496
        %v3664 = vsel %vm887, %v3498, %v3500
        %v3665 = vsel %vm887, %v3500, %v3502
        %v3666 = vsel %vm887, %v3502, %v3504
        %v3667 = vsel %vm887, %v3506, %v3508
        %v3668 = vsel %vm887, %v3508, %v3510
        %v3669 = vsel %vm887, %v3510, %v3512
        %v3670 = vsel %vm887, %v3514, %v3516
        %v3671 = vsel %vm887, %v3516, %v3518
        %v3672 = vsel %vm887, %v3518, %v3520
        %v3673 = vsel %vm887, %v3522, %v3524
        %v3674 = vsel %vm887, %v3524, %v3526
        %v3675 = vsel %vm887, %v3526, %v3528
        %v3676 = vsel %vm887, %v3530, %v3532
        %v3677 = vsel %vm887, %v3532, %v3534
        %v3678 = vsel %vm887, %v3534, %v3536
        %v3679 = vsel %vm887, %v3538, %v3540
        %v3680 = vsel %vm887, %v3540, %v3542
        %v3681 = vsel %vm887, %v3542, %v3544
        %v3682 = vsel %vm887, %v3546, %v3548
        %v3683 = vsel %vm887, %v3548, %v3550
        %v3684 = vsel %vm887, %v3550, %v3552
        %v3685 = vsel %vm887, %v3554, %v3556
        %v3686 = vsel %vm887, %v3556, %v3558
        %v3687 = vsel %vm887, %v3558, %v3560
        %v3688 = vsel %vm887, %v3562, %v3564
        %v3689 = vsel %vm887, %v3564, %v3566
        %v3690 = vsel %vm887, %v3566, %v3568
        %v3691 = vsel %vm887, %v3570, %v3572
        %v3692 = vsel %vm887, %v3572, %v3574
        %v3693 = vsel %vm887, %v3574, %v3576
        %v3694 = vsel %vm887, %v3578, %v3580
        %v3695 = vsel %vm887, %v3580, %v3582
        %v3696 = vsel %vm887, %v3582, %v3584
        %v3697 = vsel %vm887, %v3586, %v3588
        %v3698 = vsel %vm887, %v3588, %v3590
        %v3699 = vsel %vm887, %v3590, %v3592
        %v3700 = vsel %vm887, %v3594, %v3596
        %v3701 = vsel %vm887, %v3596, %v3598
        %v3702 = vsel %vm887, %v3598, %v3600
        %v3703 = vsel %vm887, %v3602, %v3604
        %v3704 = vsel %vm887, %v3604, %v3606
        %v3705 = vsel %vm887, %v3606, %v3608
        %v3706 = vsel %vm887, %v3610, %v3612
        %v3707 = vsel %vm887, %v3612, %v3614
        %v3708 = vsel %vm887, %v3614, %v3616
        %v3709 = vsel %vm887, %v3618, %v3620
        %v3710 = vsel %vm887, %v3620, %v3622
        %v3711 = vsel %vm887, %v3622, %v3624
        %v3712 = vsel %vm887, %v3626, %v3628
        %v3713 = vsel %vm887, %v3628, %v3630
        %v3714 = vsel %vm887, %v3630, %v3632
        %v3715 = vsel %vm887, %v3634, %v3636
        %v3716 = vsel %vm887, %v3636, %v3638
        %v3717 = vsel %vm887, %v3638, %v3640
        %v3718 = vsel %vm887, %v3642, %v3644
        %v3719 = vsel %vm887, %v3644, %v3646
        %v3720 = vsel %vm887, %v3646, %v3648
        %3793 = vrot.lane.b32.xlu0 %v2258, 118
        %v3794 = vpop.permute.xlu0 %3793
        %3795 = vrot.lane.b32.xlu0 %v2352, 118
        %v3796 = vpop.permute.xlu0 %3795
        %3797 = vrot.lane.b32.xlu0 %v2349, 118
        %v3798 = vpop.permute.xlu0 %3797
        %3799 = vrot.lane.b32.xlu0 %v2261, 118
        %v3800 = vpop.permute.xlu0 %3799
        %3801 = vrot.lane.b32.xlu0 %v2355, 118
        %v3802 = vpop.permute.xlu0 %3801
        %3803 = vrot.lane.b32.xlu0 %v2350, 118
        %v3804 = vpop.permute.xlu0 %3803
        %v3805 = vsel %vm918, %v3794, %v3796
        %v3806 = vsel %vm918, %v3796, %v3798
        %v3807 = vsel %vm918, %v3800, %v3802
        %v3808 = vsel %vm918, %v3802, %v3804
        %v3812 = vld [vmem:[#allocation5] sm:$0xff]
        %v3813 = vld [vmem:[#allocation5 + $0x8] sm:$0xff]
        %v3814 = vld [vmem:[#allocation5 + $0x10] sm:$0xff]
        %v3815 = vld [vmem:[#allocation5 + $0x18] sm:$0xff]
        %v3816 = vld [vmem:[#allocation5 + $0x20] sm:$0xff]
        %v3817 = vld [vmem:[#allocation5 + $0x28] sm:$0xff]
        %v3818 = vld [vmem:[#allocation5 + $0x30] sm:$0xff]
        %v3819 = vld [vmem:[#allocation5 + $0x38] sm:$0xff]
        %v3820 = vld [vmem:[#allocation5 + $0x40] sm:$0xff]
        %v3821 = vld [vmem:[#allocation5 + $0x48] sm:$0xff]
        %v3822 = vld [vmem:[#allocation5 + $0x50] sm:$0xff]
        %v3823 = vld [vmem:[#allocation5 + $0x58] sm:$0xff]
        %v3824 = vld [vmem:[#allocation5 + $0x60] sm:$0xff]
        %v3825 = vld [vmem:[#allocation5 + $0x68] sm:$0xff]
        %v3826 = vld [vmem:[#allocation5 + $0x70] sm:$0xff]
        %v3842 = vunpack.c.l.b16 %v3812
        %v3843 = vunpack.c.h.b16 %v3812
        %v3844 = vunpack.c.l.b16 %v3813
        %v3845 = vunpack.c.h.b16 %v3813
        %v3846 = vunpack.c.l.b16 %v3814
        %v3847 = vunpack.c.h.b16 %v3814
        %v3848 = vunpack.c.l.b16 %v3815
        %v3849 = vunpack.c.h.b16 %v3815
        %v3850 = vunpack.c.l.b16 %v3816
        %v3851 = vunpack.c.h.b16 %v3816
        %v3852 = vunpack.c.l.b16 %v3817
        %v3853 = vunpack.c.h.b16 %v3817
        %v3854 = vunpack.c.l.b16 %v3818
        %v3855 = vunpack.c.h.b16 %v3818
        %v3856 = vunpack.c.l.b16 %v3819
        %v3857 = vunpack.c.h.b16 %v3819
        %v3858 = vunpack.c.l.b16 %v3820
        %v3859 = vunpack.c.h.b16 %v3820
        %v3860 = vunpack.c.l.b16 %v3821
        %v3861 = vunpack.c.h.b16 %v3821
        %v3862 = vunpack.c.l.b16 %v3822
        %v3863 = vunpack.c.h.b16 %v3822
        %v3864 = vunpack.c.l.b16 %v3823
        %v3865 = vunpack.c.h.b16 %v3823
        %v3866 = vunpack.c.l.b16 %v3824
        %v3867 = vunpack.c.h.b16 %v3824
        %v3868 = vunpack.c.l.b16 %v3825
        %v3869 = vunpack.c.h.b16 %v3825
        %v3870 = vunpack.c.l.b16 %v3826
        %v3871 = vunpack.c.h.b16 %v3826
        %v3872 = vpack.c.b16 %v3852, %v3842
        %v3873 = vpack.c.b16 %v3853, %v3843
        %v3874 = vpack.c.b16 %v3854, %v3844
        %v3875 = vpack.c.b16 %v3855, %v3845
        %v3876 = vpack.c.b16 %v3856, %v3846
        %v3877 = vpack.c.b16 %v3857, %v3847
        %v3878 = vpack.c.b16 %v3858, %v3848
        %v3879 = vpack.c.b16 %v3859, %v3849
        %v3880 = vpack.c.b16 %v3860, %v3850
        %v3881 = vpack.c.b16 %v3861, %v3851
        %v3882 = vpack.c.b16 %v3862, %v3862
        %v3883 = vpack.c.b16 %v3863, %v3863
        %v3884 = vpack.c.b16 %v3864, %v3864
        %v3885 = vpack.c.b16 %v3865, %v3865
        %v3886 = vpack.c.b16 %v3866, %v3866
        %v3887 = vpack.c.b16 %v3867, %v3867
        %v3888 = vpack.c.b16 %v3868, %v3868
        %v3889 = vpack.c.b16 %v3869, %v3869
        %v3890 = vpack.c.b16 %v3870, %v3870
        %v3891 = vpack.c.b16 %v3871, %v3871
        %vm3910 = vcmask 195584
        %v3912 = vsel %vm3910, %v3881, 0
        %v3915 = vsel %vm3910, %v3891, 0
        %v3918 = vsel %vm442, %v3807, 0
        %v3921 = vsel %vm442, %v3808, 0
        %v3924 = vsel %vm442, %v3804, 0
        %3926 = vmatprep.subr.bf16.mxu0 %v2258
        %3927 = vmatpush1.bf16.msra.mxu0 %v2227
        %3928 = vmatprep.subr.bf16.mxu0 %v2676
        %3929 = vmatpush1.bf16.msra.mxu0 %v2673
        %3930 = vmatprep.subr.bf16.mxu0 %v2387
        %3931 = vmatpush1.bf16.msra.mxu0 %v2386
        %3932 = vmatprep.subr.bf16.mxu0 %v2404
        %3933 = vmatpush1.bf16.msra.mxu0 %v2403
        %3934 = vmatprep.subr.bf16.mxu0 %v2687
        %3935 = vmatpush1.bf16.msra.mxu0 %v2683
        %3936 = vmatprep.subr.bf16.mxu0 %v2425
        %3937 = vmatpush1.bf16.msra.mxu0 %v2424
        %3938 = vmatprep.subr.bf16.mxu0 %v2442
        %3939 = vmatpush1.bf16.msra.mxu0 %v2441
        %3940 = vmatprep.subr.bf16.mxu0 %v2699
        %3941 = vmatpush1.bf16.msra.mxu0 %v2695
        %3942 = vmatprep.subr.bf16.mxu0 %v2463
        %3943 = vmatpush1.bf16.msra.mxu0 %v2462
        %3944 = vmatprep.subr.bf16.mxu0 %v2480
        %3945 = vmatpush1.bf16.msra.mxu0 %v2479
        %3946 = vmatprep.subr.bf16.mxu0 %v2711
        %3947 = vmatpush1.bf16.msra.mxu0 %v2707
        %3948 = vmatprep.subr.bf16.mxu0 %v2501
        %3949 = vmatpush1.bf16.msra.mxu0 %v2500
        %3950 = vmatprep.subr.bf16.mxu0 %v2518
        %3951 = vmatpush1.bf16.msra.mxu0 %v2517
        %3952 = vmatprep.subr.bf16.mxu0 %v2723
        %3953 = vmatpush1.bf16.msra.mxu0 %v2719
        %3954 = vmatprep.subr.bf16.mxu0 %v2539
        %3955 = vmatpush1.bf16.msra.mxu0 %v2538
        %3956 = vmatprep.subr.bf16.mxu0 %v2556
        %3957 = vmatpush1.bf16.msra.mxu0 %v2555
        %3958 = vmatprep.mubr.bf16.mxu0 %v3873
        %3959 = vmatmul.mubr.bf16.gmra.mrb[0].mxu0 %v3872
        %v3960 = vpop.f32.mrb[0].mxu0
        %v3961 = vadd.f32 0.0, %v3960
        %v3962 = vpop.f32.mrb[0].mxu0
        %v3963 = vadd.f32 0.0, %v3962
        %v3964 = vpop.f32.mrb[0].mxu0
        %v3965 = vadd.f32 0.0, %v3964
        %v3966 = vpop.f32.mrb[0].mxu0
        %v3967 = vadd.f32 0.0, %v3966
        %3968 = vmatprep.mubr.bf16.mxu0 %v3883
        %3969 = vmatmul.mubr.bf16.gmra.mrb[0].mxu0 %v3882
        %v3970 = vpop.f32.mrb[0].mxu0
        %v3971 = vadd.f32 0.0, %v3970
        %v3972 = vpop.f32.mrb[0].mxu0
        %v3973 = vadd.f32 0.0, %v3972
        %v3974 = vpop.f32.mrb[0].mxu0
        %v3975 = vpop.f32.mrb[0].mxu0
        %3976 = vdwg.mxu0
        %3977 = vmatprep.subr.bf16.mxu0 %v2735
        %3978 = vmatpush1.bf16.msra.mxu0 %v2731
        %3979 = vmatprep.subr.bf16.mxu0 %v2577
        %3980 = vmatpush1.bf16.msra.mxu0 %v2576
        %3981 = vmatprep.subr.bf16.mxu0 %v2594
        %3982 = vmatpush1.bf16.msra.mxu0 %v2593
        %3983 = vmatprep.subr.bf16.mxu0 %v2747
        %3984 = vmatpush1.bf16.msra.mxu0 %v2743
        %3985 = vmatprep.subr.bf16.mxu0 %v2615
        %3986 = vmatpush1.bf16.msra.mxu0 %v2614
        %3987 = vmatprep.subr.bf16.mxu0 %v2636
        %3988 = vmatpush1.bf16.msra.mxu0 %v2635
        %3989 = vmatprep.subr.bf16.mxu0 %v2759
        %3990 = vmatpush1.bf16.msra.mxu0 %v2755
        %3991 = vmatprep.subr.bf16.mxu0 %v2667
        %3992 = vmatpush1.bf16.msra.mxu0 %v2666
        %3993 = vmatprep.subr.bf16.mxu0 %v3300
        %3994 = vmatpush1.bf16.msra.mxu0 %v3299
        %3995 = vmatprep.subr.bf16.mxu0 %v3303
        %3996 = vmatpush1.bf16.msra.mxu0 %v3302
        %3997 = vmatprep.subr.bf16.mxu0 %v3306
        %3998 = vmatpush1.bf16.msra.mxu0 %v3305
        %3999 = vmatprep.subr.bf16.mxu0 %v3309
        %4000 = vmatpush1.bf16.msra.mxu0 %v3308
        %4001 = vmatprep.subr.bf16.mxu0 %v3312
        %4002 = vmatpush1.bf16.msra.mxu0 %v3311
        %4003 = vmatprep.subr.bf16.mxu0 %v3315
        %4004 = vmatpush1.bf16.msra.mxu0 %v3314
        %4005 = vmatprep.subr.bf16.mxu0 %v3318
        %4006 = vmatpush1.bf16.msra.mxu0 %v3317
        %4007 = vmatprep.subr.bf16.mxu0 %v3321
        %4008 = vmatpush1.bf16.msra.mxu0 %v3320
        %4009 = vmatprep.mubr.bf16.mxu0 %v3875
        %4010 = vmatmul.mubr.bf16.gmra.mrb[0].mxu0 %v3874
        %v4011 = vpop.f32.mrb[0].mxu0
        %v4012 = vadd.f32 %v3961, %v4011
        %v4013 = vpop.f32.mrb[0].mxu0
        %v4014 = vadd.f32 %v3963, %v4013
        %v4015 = vpop.f32.mrb[0].mxu0
        %v4016 = vadd.f32 %v3965, %v4015
        %v4017 = vpop.f32.mrb[0].mxu0
        %v4018 = vadd.f32 %v3967, %v4017
        %4019 = vmatprep.mubr.bf16.mxu0 %v3885
        %4020 = vmatmul.mubr.bf16.gmra.mrb[0].mxu0 %v3884
        %v4021 = vpop.f32.mrb[0].mxu0
        %v4022 = vadd.f32 %v3971, %v4021
        %v4023 = vpop.f32.mrb[0].mxu0
        %v4024 = vadd.f32 %v3973, %v4023
        %v4025 = vpop.f32.mrb[0].mxu0
        %v4026 = vpop.f32.mrb[0].mxu0
        %4027 = vdwg.mxu0
        %4028 = vmatprep.subr.bf16.mxu0 %v3324
        %4029 = vmatpush1.bf16.msra.mxu0 %v3323
        %4030 = vmatprep.subr.bf16.mxu0 %v3327
        %4031 = vmatpush1.bf16.msra.mxu0 %v3326
        %4032 = vmatprep.subr.bf16.mxu0 %v3330
        %4033 = vmatpush1.bf16.msra.mxu0 %v3329
        %4034 = vmatprep.subr.bf16.mxu0 %v3333
        %4035 = vmatpush1.bf16.msra.mxu0 %v3332
        %4036 = vmatprep.subr.bf16.mxu0 %v3336
        %4037 = vmatpush1.bf16.msra.mxu0 %v3335
        %4038 = vmatprep.subr.bf16.mxu0 %v3339
        %4039 = vmatpush1.bf16.msra.mxu0 %v3338
        %4040 = vmatprep.subr.bf16.mxu0 %v3342
        %4041 = vmatpush1.bf16.msra.mxu0 %v3341
        %4042 = vmatprep.subr.bf16.mxu0 %v3345
        %4043 = vmatpush1.bf16.msra.mxu0 %v3344
        %4044 = vmatprep.subr.bf16.mxu0 %v3348
        %4045 = vmatpush1.bf16.msra.mxu0 %v3347
        %4046 = vmatprep.subr.bf16.mxu0 %v3351
        %4047 = vmatpush1.bf16.msra.mxu0 %v3350
        %4048 = vmatprep.subr.bf16.mxu0 %v3354
        %4049 = vmatpush1.bf16.msra.mxu0 %v3353
        %4050 = vmatprep.subr.bf16.mxu0 %v3357
        %4051 = vmatpush1.bf16.msra.mxu0 %v3356
        %4052 = vmatprep.subr.bf16.mxu0 %v3360
        %4053 = vmatpush1.bf16.msra.mxu0 %v3359
        %4054 = vmatprep.subr.bf16.mxu0 %v3363
        %4055 = vmatpush1.bf16.msra.mxu0 %v3362
        %4056 = vmatprep.subr.bf16.mxu0 %v3366
        %4057 = vmatpush1.bf16.msra.mxu0 %v3365
        %4058 = vmatprep.subr.bf16.mxu0 %v3369
        %4059 = vmatpush1.bf16.msra.mxu0 %v3368
        %4060 = vmatprep.mubr.bf16.mxu0 %v3877
        %4061 = vmatmul.mubr.bf16.gmra.mrb[0].mxu0 %v3876
        %v4062 = vpop.f32.mrb[0].mxu0
        %v4063 = vadd.f32 %v4012, %v4062
        %v4064 = vpop.f32.mrb[0].mxu0
        %v4065 = vadd.f32 %v4014, %v4064
        %v4066 = vpop.f32.mrb[0].mxu0
        %v4067 = vadd.f32 %v4016, %v4066
        %v4068 = vpop.f32.mrb[0].mxu0
        %v4069 = vadd.f32 %v4018, %v4068
        %4070 = vmatprep.mubr.bf16.mxu0 %v3887
        %4071 = vmatmul.mubr.bf16.gmra.mrb[0].mxu0 %v3886
        %v4072 = vpop.f32.mrb[0].mxu0
        %v4073 = vadd.f32 %v4022, %v4072
        %v4074 = vpop.f32.mrb[0].mxu0
        %v4075 = vadd.f32 %v4024, %v4074
        %v4076 = vpop.f32.mrb[0].mxu0
        %v4077 = vpop.f32.mrb[0].mxu0
        %4078 = vdwg.mxu0
        %4079 = vmatprep.subr.bf16.mxu0 %v3650
        %4080 = vmatpush1.bf16.msra.mxu0 %v3649
        %4081 = vmatprep.subr.bf16.mxu0 %v3653
        %4082 = vmatpush1.bf16.msra.mxu0 %v3652
        %4083 = vmatprep.subr.bf16.mxu0 %v3656
        %4084 = vmatpush1.bf16.msra.mxu0 %v3655
        %4085 = vmatprep.subr.bf16.mxu0 %v3659
        %4086 = vmatpush1.bf16.msra.mxu0 %v3658
        %4087 = vmatprep.subr.bf16.mxu0 %v3662
        %4088 = vmatpush1.bf16.msra.mxu0 %v3661
        %4089 = vmatprep.subr.bf16.mxu0 %v3665
        %4090 = vmatpush1.bf16.msra.mxu0 %v3664
        %4091 = vmatprep.subr.bf16.mxu0 %v3668
        %4092 = vmatpush1.bf16.msra.mxu0 %v3667
        %4093 = vmatprep.subr.bf16.mxu0 %v3671
        %4094 = vmatpush1.bf16.msra.mxu0 %v3670
        %4095 = vmatprep.subr.bf16.mxu0 %v3674
        %4096 = vmatpush1.bf16.msra.mxu0 %v3673
        %4097 = vmatprep.subr.bf16.mxu0 %v3677
        %4098 = vmatpush1.bf16.msra.mxu0 %v3676
        %4099 = vmatprep.subr.bf16.mxu0 %v3680
        %4100 = vmatpush1.bf16.msra.mxu0 %v3679
        %4101 = vmatprep.subr.bf16.mxu0 %v3683
        %4102 = vmatpush1.bf16.msra.mxu0 %v3682
        %4103 = vmatprep.subr.bf16.mxu0 %v3686
        %4104 = vmatpush1.bf16.msra.mxu0 %v3685
        %4105 = vmatprep.subr.bf16.mxu0 %v3689
        %4106 = vmatpush1.bf16.msra.mxu0 %v3688
        %4107 = vmatprep.subr.bf16.mxu0 %v3692
        %4108 = vmatpush1.bf16.msra.mxu0 %v3691
        %4109 = vmatprep.subr.bf16.mxu0 %v3695
        %4110 = vmatpush1.bf16.msra.mxu0 %v3694
        %4111 = vmatprep.mubr.bf16.mxu0 %v3879
        %4112 = vmatmul.mubr.bf16.gmra.mrb[0].mxu0 %v3878
        %v4113 = vpop.f32.mrb[0].mxu0
        %v4114 = vadd.f32 %v4063, %v4113
        %v4115 = vpop.f32.mrb[0].mxu0
        %v4116 = vadd.f32 %v4065, %v4115
        %v4117 = vpop.f32.mrb[0].mxu0
        %v4118 = vadd.f32 %v4067, %v4117
        %v4119 = vpop.f32.mrb[0].mxu0
        %v4120 = vadd.f32 %v4069, %v4119
        %4121 = vmatprep.mubr.bf16.mxu0 %v3889
        %4122 = vmatmul.mubr.bf16.gmra.mrb[0].mxu0 %v3888
        %v4123 = vpop.f32.mrb[0].mxu0
        %v4124 = vadd.f32 %v4073, %v4123
        %v4125 = vpop.f32.mrb[0].mxu0
        %v4126 = vadd.f32 %v4075, %v4125
        %v4127 = vpop.f32.mrb[0].mxu0
        %v4128 = vpop.f32.mrb[0].mxu0
        %4129 = vdwg.mxu0
        %4130 = vmatprep.subr.bf16.mxu0 %v3698
        %4131 = vmatpush1.bf16.msra.mxu0 %v3697
        %4132 = vmatprep.subr.bf16.mxu0 %v3701
        %4133 = vmatpush1.bf16.msra.mxu0 %v3700
        %4134 = vmatprep.subr.bf16.mxu0 %v3704
        %4135 = vmatpush1.bf16.msra.mxu0 %v3703
        %4136 = vmatprep.subr.bf16.mxu0 %v3707
        %4137 = vmatpush1.bf16.msra.mxu0 %v3706
        %4138 = vmatprep.subr.bf16.mxu0 %v3710
        %4139 = vmatpush1.bf16.msra.mxu0 %v3709
        %4140 = vmatprep.subr.bf16.mxu0 %v3713
        %4141 = vmatpush1.bf16.msra.mxu0 %v3712
        %4142 = vmatprep.subr.bf16.mxu0 %v3716
        %4143 = vmatpush1.bf16.msra.mxu0 %v3715
        %4144 = vmatprep.subr.bf16.mxu0 %v3719
        %4145 = vmatpush1.bf16.msra.mxu0 %v3718
        %4146 = vmatprep.subr.bf16.mxu0 %v3806
        %4147 = vmatpush1.bf16.msra.mxu0 %v3805
        %4148 = vmatprep.subr.bf16.mxu0 %v3921
        %4149 = vmatpush1.bf16.msra.mxu0 %v3918
        %4150 = vmatprep.subr.bf16.mxu0 0
        %4151 = vmatpush1.bf16.msra.mxu0 0
        %4152 = vmatprep.subr.bf16.mxu0 0
        %4153 = vmatpush1.bf16.msra.mxu0 0
        %4154 = vmatprep.subr.bf16.mxu0 0
        %4155 = vmatpush1.bf16.msra.mxu0 0
        %4156 = vmatprep.subr.bf16.mxu0 0
        %4157 = vmatpush1.bf16.msra.mxu0 0
        %4158 = vmatprep.subr.bf16.mxu0 0
        %4159 = vmatpush1.bf16.msra.mxu0 0
        %4160 = vmatprep.subr.bf16.mxu0 0
        %4161 = vmatpush1.bf16.msra.mxu0 0
        %4162 = vmatprep.mubr.bf16.mxu0 %v3912
        %4163 = vmatmul.mubr.bf16.gmra.mrb[0].mxu0 %v3880
        %v4164 = vpop.f32.mrb[0].mxu0
        %v4165 = vadd.f32 %v4114, %v4164
        %v4166 = vpop.f32.mrb[0].mxu0
        %v4167 = vadd.f32 %v4116, %v4166
        %v4168 = vpop.f32.mrb[0].mxu0
        %v4169 = vadd.f32 %v4118, %v4168
        %v4170 = vpop.f32.mrb[0].mxu0
        %v4171 = vadd.f32 %v4120, %v4170
        %4172 = vmatprep.mubr.bf16.mxu0 %v3915
        %4173 = vmatmul.mubr.bf16.gmra.mrb[0].mxu0 %v3890
        %v4174 = vpop.f32.mrb[0].mxu0
        %v4175 = vadd.f32 %v4124, %v4174
        %v4176 = vpop.f32.mrb[0].mxu0
        %v4177 = vadd.f32 %v4126, %v4176
        %v4178 = vpop.f32.mrb[0].mxu0
        %v4179 = vpop.f32.mrb[0].mxu0
        %4180 = vdwg.mxu0
        %4181 = vmatprep.subr.bf16.mxu0 0
        %4182 = vmatpush1.bf16.msra.mxu0 %v2352
        %4183 = vmatprep.subr.bf16.mxu0 0
        %4184 = vmatpush1.bf16.msra.mxu0 %v2679
        %4185 = vmatprep.subr.bf16.mxu0 0
        %4186 = vmatpush1.bf16.msra.mxu0 %v2383
        %4187 = vmatprep.subr.bf16.mxu0 0
        %4188 = vmatpush1.bf16.msra.mxu0 %v2396
        %4189 = vmatprep.subr.bf16.mxu0 0
        %4190 = vmatpush1.bf16.msra.mxu0 %v2691
        %4191 = vmatprep.subr.bf16.mxu0 0
        %4192 = vmatpush1.bf16.msra.mxu0 %v2421
        %4193 = vmatprep.subr.bf16.mxu0 0
        %4194 = vmatpush1.bf16.msra.mxu0 %v2434
        %4195 = vmatprep.subr.bf16.mxu0 0
        %4196 = vmatpush1.bf16.msra.mxu0 %v2703
        %4197 = vmatprep.subr.bf16.mxu0 0
        %4198 = vmatpush1.bf16.msra.mxu0 %v2459
        %4199 = vmatprep.subr.bf16.mxu0 0
        %4200 = vmatpush1.bf16.msra.mxu0 %v2472
        %4201 = vmatprep.subr.bf16.mxu0 0
        %4202 = vmatpush1.bf16.msra.mxu0 %v2715
        %4203 = vmatprep.subr.bf16.mxu0 0
        %4204 = vmatpush1.bf16.msra.mxu0 %v2497
        %4205 = vmatprep.subr.bf16.mxu0 0
        %4206 = vmatpush1.bf16.msra.mxu0 %v2510
        %4207 = vmatprep.subr.bf16.mxu0 0
        %4208 = vmatpush1.bf16.msra.mxu0 %v2727
        %4209 = vmatprep.subr.bf16.mxu0 0
        %4210 = vmatpush1.bf16.msra.mxu0 %v2535
        %4211 = vmatprep.subr.bf16.mxu0 0
        %4212 = vmatpush1.bf16.msra.mxu0 %v2548
        %4213 = vmatprep.mubr.bf16.mxu0 %v3873
        %4214 = vmatmul.mubr.bf16.gmra.mrb[0].mxu0 %v3872
        %v4215 = vpop.f32.mrb[0].mxu0
        %v4216 = vadd.f32 0.0, %v4215
        %v4217 = vpop.f32.mrb[0].mxu0
        %v4218 = vpop.f32.mrb[0].mxu0
        %v4219 = vadd.f32 0.0, %v4218
        %v4220 = vpop.f32.mrb[0].mxu0
        %4221 = vmatprep.mubr.bf16.mxu0 %v3883
        %4222 = vmatmul.mubr.bf16.gmra.mrb[0].mxu0 %v3882
        %v4223 = vpop.f32.mrb[0].mxu0
        %v4224 = vadd.f32 0.0, %v4223
        %v4225 = vpop.f32.mrb[0].mxu0
        %v4226 = vpop.f32.mrb[0].mxu0
        %v4227 = vpop.f32.mrb[0].mxu0
        %4228 = vdwg.mxu0
        %4229 = vmatprep.subr.bf16.mxu0 0
        %4230 = vmatpush1.bf16.msra.mxu0 %v2739
        %4231 = vmatprep.subr.bf16.mxu0 0
        %4232 = vmatpush1.bf16.msra.mxu0 %v2573
        %4233 = vmatprep.subr.bf16.mxu0 0
        %4234 = vmatpush1.bf16.msra.mxu0 %v2586
        %4235 = vmatprep.subr.bf16.mxu0 0
        %4236 = vmatpush1.bf16.msra.mxu0 %v2751
        %4237 = vmatprep.subr.bf16.mxu0 0
        %4238 = vmatpush1.bf16.msra.mxu0 %v2611
        %4239 = vmatprep.subr.bf16.mxu0 0
        %4240 = vmatpush1.bf16.msra.mxu0 %v2637
        %4241 = vmatprep.subr.bf16.mxu0 0
        %4242 = vmatpush1.bf16.msra.mxu0 %v2763
        %4243 = vmatprep.subr.bf16.mxu0 0
        %4244 = vmatpush1.bf16.msra.mxu0 %v2668
        %4245 = vmatprep.subr.bf16.mxu0 0
        %4246 = vmatpush1.bf16.msra.mxu0 %v3301
        %4247 = vmatprep.subr.bf16.mxu0 0
        %4248 = vmatpush1.bf16.msra.mxu0 %v3304
        %4249 = vmatprep.subr.bf16.mxu0 0
        %4250 = vmatpush1.bf16.msra.mxu0 %v3307
        %4251 = vmatprep.subr.bf16.mxu0 0
        %4252 = vmatpush1.bf16.msra.mxu0 %v3310
        %4253 = vmatprep.subr.bf16.mxu0 0
        %4254 = vmatpush1.bf16.msra.mxu0 %v3313
        %4255 = vmatprep.subr.bf16.mxu0 0
        %4256 = vmatpush1.bf16.msra.mxu0 %v3316
        %4257 = vmatprep.subr.bf16.mxu0 0
        %4258 = vmatpush1.bf16.msra.mxu0 %v3319
        %4259 = vmatprep.subr.bf16.mxu0 0
        %4260 = vmatpush1.bf16.msra.mxu0 %v3322
        %4261 = vmatprep.mubr.bf16.mxu0 %v3875
        %4262 = vmatmul.mubr.bf16.gmra.mrb[0].mxu0 %v3874
        %v4263 = vpop.f32.mrb[0].mxu0
        %v4264 = vadd.f32 %v4216, %v4263
        %v4265 = vpop.f32.mrb[0].mxu0
        %v4266 = vpop.f32.mrb[0].mxu0
        %v4267 = vadd.f32 %v4219, %v4266
        %v4268 = vpop.f32.mrb[0].mxu0
        %4269 = vmatprep.mubr.bf16.mxu0 %v3885
        %4270 = vmatmul.mubr.bf16.gmra.mrb[0].mxu0 %v3884
        %v4271 = vpop.f32.mrb[0].mxu0
        %v4272 = vadd.f32 %v4224, %v4271
        %v4273 = vpop.f32.mrb[0].mxu0
        %v4274 = vpop.f32.mrb[0].mxu0
        %v4275 = vpop.f32.mrb[0].mxu0
        %4276 = vdwg.mxu0
        %4277 = vmatprep.subr.bf16.mxu0 0
        %4278 = vmatpush1.bf16.msra.mxu0 %v3325
        %4279 = vmatprep.subr.bf16.mxu0 0
        %4280 = vmatpush1.bf16.msra.mxu0 %v3328
        %4281 = vmatprep.subr.bf16.mxu0 0
        %4282 = vmatpush1.bf16.msra.mxu0 %v3331
        %4283 = vmatprep.subr.bf16.mxu0 0
        %4284 = vmatpush1.bf16.msra.mxu0 %v3334
        %4285 = vmatprep.subr.bf16.mxu0 0
        %4286 = vmatpush1.bf16.msra.mxu0 %v3337
        %4287 = vmatprep.subr.bf16.mxu0 0
        %4288 = vmatpush1.bf16.msra.mxu0 %v3340
        %4289 = vmatprep.subr.bf16.mxu0 0
        %4290 = vmatpush1.bf16.msra.mxu0 %v3343
        %4291 = vmatprep.subr.bf16.mxu0 0
        %4292 = vmatpush1.bf16.msra.mxu0 %v3346
        %4293 = vmatprep.subr.bf16.mxu0 0
        %4294 = vmatpush1.bf16.msra.mxu0 %v3349
        %4295 = vmatprep.subr.bf16.mxu0 0
        %4296 = vmatpush1.bf16.msra.mxu0 %v3352
        %4297 = vmatprep.subr.bf16.mxu0 0
        %4298 = vmatpush1.bf16.msra.mxu0 %v3355
        %4299 = vmatprep.subr.bf16.mxu0 0
        %4300 = vmatpush1.bf16.msra.mxu0 %v3358
        %4301 = vmatprep.subr.bf16.mxu0 0
        %4302 = vmatpush1.bf16.msra.mxu0 %v3361
        %4303 = vmatprep.subr.bf16.mxu0 0
        %4304 = vmatpush1.bf16.msra.mxu0 %v3364
        %4305 = vmatprep.subr.bf16.mxu0 0
        %4306 = vmatpush1.bf16.msra.mxu0 %v3367
        %4307 = vmatprep.subr.bf16.mxu0 0
        %4308 = vmatpush1.bf16.msra.mxu0 %v3370
        %4309 = vmatprep.mubr.bf16.mxu0 %v3877
        %4310 = vmatmul.mubr.bf16.gmra.mrb[0].mxu0 %v3876
        %v4311 = vpop.f32.mrb[0].mxu0
        %v4312 = vadd.f32 %v4264, %v4311
        %v4313 = vpop.f32.mrb[0].mxu0
        %v4314 = vpop.f32.mrb[0].mxu0
        %v4315 = vadd.f32 %v4267, %v4314
        %v4316 = vpop.f32.mrb[0].mxu0
        %4317 = vmatprep.mubr.bf16.mxu0 %v3887
        %4318 = vmatmul.mubr.bf16.gmra.mrb[0].mxu0 %v3886
        %v4319 = vpop.f32.mrb[0].mxu0
        %v4320 = vadd.f32 %v4272, %v4319
        %v4321 = vpop.f32.mrb[0].mxu0
        %v4322 = vpop.f32.mrb[0].mxu0
        %v4323 = vpop.f32.mrb[0].mxu0
        %4324 = vdwg.mxu0
        %4325 = vmatprep.subr.bf16.mxu0 0
        %4326 = vmatpush1.bf16.msra.mxu0 %v3651
        %4327 = vmatprep.subr.bf16.mxu0 0
        %4328 = vmatpush1.bf16.msra.mxu0 %v3654
        %4329 = vmatprep.subr.bf16.mxu0 0
        %4330 = vmatpush1.bf16.msra.mxu0 %v3657
        %4331 = vmatprep.subr.bf16.mxu0 0
        %4332 = vmatpush1.bf16.msra.mxu0 %v3660
        %4333 = vmatprep.subr.bf16.mxu0 0
        %4334 = vmatpush1.bf16.msra.mxu0 %v3663
        %4335 = vmatprep.subr.bf16.mxu0 0
        %4336 = vmatpush1.bf16.msra.mxu0 %v3666
        %4337 = vmatprep.subr.bf16.mxu0 0
        %4338 = vmatpush1.bf16.msra.mxu0 %v3669
        %4339 = vmatprep.subr.bf16.mxu0 0
        %4340 = vmatpush1.bf16.msra.mxu0 %v3672
        %4341 = vmatprep.subr.bf16.mxu0 0
        %4342 = vmatpush1.bf16.msra.mxu0 %v3675
        %4343 = vmatprep.subr.bf16.mxu0 0
        %4344 = vmatpush1.bf16.msra.mxu0 %v3678
        %4345 = vmatprep.subr.bf16.mxu0 0
        %4346 = vmatpush1.bf16.msra.mxu0 %v3681
        %4347 = vmatprep.subr.bf16.mxu0 0
        %4348 = vmatpush1.bf16.msra.mxu0 %v3684
        %4349 = vmatprep.subr.bf16.mxu0 0
        %4350 = vmatpush1.bf16.msra.mxu0 %v3687
        %4351 = vmatprep.subr.bf16.mxu0 0
        %4352 = vmatpush1.bf16.msra.mxu0 %v3690
        %4353 = vmatprep.subr.bf16.mxu0 0
        %4354 = vmatpush1.bf16.msra.mxu0 %v3693
        %4355 = vmatprep.subr.bf16.mxu0 0
        %4356 = vmatpush1.bf16.msra.mxu0 %v3696
        %4357 = vmatprep.mubr.bf16.mxu0 %v3879
        %4358 = vmatmul.mubr.bf16.gmra.mrb[0].mxu0 %v3878
        %v4359 = vpop.f32.mrb[0].mxu0
        %v4360 = vadd.f32 %v4312, %v4359
        %v4361 = vpop.f32.mrb[0].mxu0
        %v4362 = vpop.f32.mrb[0].mxu0
        %v4363 = vadd.f32 %v4315, %v4362
        %v4364 = vpop.f32.mrb[0].mxu0
        %4365 = vmatprep.mubr.bf16.mxu0 %v3889
        %4366 = vmatmul.mubr.bf16.gmra.mrb[0].mxu0 %v3888
        %v4367 = vpop.f32.mrb[0].mxu0
        %v4368 = vadd.f32 %v4320, %v4367
        %v4369 = vpop.f32.mrb[0].mxu0
        %v4370 = vpop.f32.mrb[0].mxu0
        %v4371 = vpop.f32.mrb[0].mxu0
        %4372 = vdwg.mxu0
        %4373 = vmatprep.subr.bf16.mxu0 0
        %4374 = vmatpush1.bf16.msra.mxu0 %v3699
        %4375 = vmatprep.subr.bf16.mxu0 0
        %4376 = vmatpush1.bf16.msra.mxu0 %v3702
        %4377 = vmatprep.subr.bf16.mxu0 0
        %4378 = vmatpush1.bf16.msra.mxu0 %v3705
        %4379 = vmatprep.subr.bf16.mxu0 0
        %4380 = vmatpush1.bf16.msra.mxu0 %v3708
        %4381 = vmatprep.subr.bf16.mxu0 0
        %4382 = vmatpush1.bf16.msra.mxu0 %v3711
        %4383 = vmatprep.subr.bf16.mxu0 0
        %4384 = vmatpush1.bf16.msra.mxu0 %v3714
        %4385 = vmatprep.subr.bf16.mxu0 0
        %4386 = vmatpush1.bf16.msra.mxu0 %v3717
        %4387 = vmatprep.subr.bf16.mxu0 0
        %4388 = vmatpush1.bf16.msra.mxu0 %v3720
        %4389 = vmatprep.subr.bf16.mxu0 0
        %4390 = vmatpush1.bf16.msra.mxu0 %v3798
        %4391 = vmatprep.subr.bf16.mxu0 0
        %4392 = vmatpush1.bf16.msra.mxu0 %v3924
        %4393 = vmatprep.subr.bf16.mxu0 0
        %4394 = vmatpush1.bf16.msra.mxu0 0
        %4395 = vmatprep.subr.bf16.mxu0 0
        %4396 = vmatpush1.bf16.msra.mxu0 0
        %4397 = vmatprep.subr.bf16.mxu0 0
        %4398 = vmatpush1.bf16.msra.mxu0 0
        %4399 = vmatprep.subr.bf16.mxu0 0
        %4400 = vmatpush1.bf16.msra.mxu0 0
        %4401 = vmatprep.subr.bf16.mxu0 0
        %4402 = vmatpush1.bf16.msra.mxu0 0
        %4403 = vmatprep.subr.bf16.mxu0 0
        %4404 = vmatpush1.bf16.msra.mxu0 0
        %4405 = vmatprep.mubr.bf16.mxu0 %v3912
        %4406 = vmatmul.mubr.bf16.gmra.mrb[0].mxu0 %v3880
        %v4407 = vpop.f32.mrb[0].mxu0
        %v4408 = vadd.f32 %v4360, %v4407
        %v4409 = vpop.f32.mrb[0].mxu0
        %v4410 = vpop.f32.mrb[0].mxu0
        %v4411 = vadd.f32 %v4363, %v4410
        %v4412 = vpop.f32.mrb[0].mxu0
        %4413 = vmatprep.mubr.bf16.mxu0 %v3915
        %4414 = vmatmul.mubr.bf16.gmra.mrb[0].mxu0 %v3890
        %v4415 = vpop.f32.mrb[0].mxu0
        %v4416 = vadd.f32 %v4368, %v4415
        %v4417 = vpop.f32.mrb[0].mxu0
        %v4418 = vpop.f32.mrb[0].mxu0
        %v4419 = vpop.f32.mrb[0].mxu0
        %4420 = vdwg.mxu0
        %v4421 = vmul.f32 %v4165, %v1058
        %v4422 = vmul.f32 %v4167, %v1062
        %v4423 = vmul.f32 %v4408, %v1066
        %v4424 = vmul.f32 %v4169, %v1058
        %v4425 = vmul.f32 %v4171, %v1062
        %v4426 = vmul.f32 %v4411, %v1066
        %v4427 = vmul.f32 %v4175, %v1058
        %v4428 = vmul.f32 %v4177, %v1062
        %v4429 = vmul.f32 %v4416, %v1066
        %v4430 = vadd.f32 %v4421, %v4422
        %v4431 = vsel %vm1080, %v4423, 0.0
        %v4432 = vadd.f32 %v4430, %v4431
        %4433 = vadd.xlane.f32.xlu0 %v4432
        %v4434 = vpop.xlane.xlu0 %4433
        %v4435 = vadd.f32 %v4424, %v4425
        %v4436 = vsel %vm1080, %v4426, 0.0
        %v4437 = vadd.f32 %v4435, %v4436
        %4438 = vadd.xlane.f32.xlu0 %v4437
        %v4439 = vpop.xlane.xlu0 %4438
        %v4440 = vadd.f32 %v4427, %v4428
        %v4441 = vsel %vm1080, %v4429, 0.0
        %v4442 = vadd.f32 %v4440, %v4441
        %4443 = vadd.xlane.f32.xlu0 %v4442
        %v4444 = vpop.xlane.xlu0 %4443
        %v4445 = vmul.f32 %v4434, 0.00390625
        %v4446 = vmul.f32 %v4439, 0.00390625
        %v4447 = vmul.f32 %v4444, 0.00390625
        %v4448 = vmul.f32 %v4421, %v4165
        %v4449 = vmul.f32 %v4422, %v4167
        %v4450 = vmul.f32 %v4423, %v4408
        %v4451 = vmul.f32 %v4424, %v4169
        %v4452 = vmul.f32 %v4425, %v4171
        %v4453 = vmul.f32 %v4426, %v4411
        %v4454 = vmul.f32 %v4427, %v4175
        %v4455 = vmul.f32 %v4428, %v4177
        %v4456 = vmul.f32 %v4429, %v4416
        %v4457 = vadd.f32 %v4448, %v4449
        %v4458 = vsel %vm1080, %v4450, 0.0
        %v4459 = vadd.f32 %v4457, %v4458
        %4460 = vadd.xlane.f32.xlu0 %v4459
        %v4461 = vpop.xlane.xlu0 %4460
        %v4462 = vadd.f32 %v4451, %v4452
        %v4463 = vsel %vm1080, %v4453, 0.0
        %v4464 = vadd.f32 %v4462, %v4463
        %4465 = vadd.xlane.f32.xlu0 %v4464
        %v4466 = vpop.xlane.xlu0 %4465
        %v4467 = vadd.f32 %v4454, %v4455
        %v4468 = vsel %vm1080, %v4456, 0.0
        %v4469 = vadd.f32 %v4467, %v4468
        %4470 = vadd.xlane.f32.xlu0 %v4469
        %v4471 = vpop.xlane.xlu0 %4470
        %v4472 = vmul.f32 %v4461, 0.00390625
        %v4473 = vmul.f32 %v4466, 0.00390625
        %v4474 = vmul.f32 %v4471, 0.00390625
        %v4475 = vmul.f32 %v4445, %v4445
        %v4476 = vmul.f32 %v4446, %v4446
        %v4477 = vmul.f32 %v4447, %v4447
        %v4478 = vsub.f32 %v4472, %v4475
        %v4479 = vsub.f32 %v4473, %v4476
        %v4480 = vsub.f32 %v4474, %v4477
        %v4481 = vmax.f32 %v4478, 0.0
        %v4482 = vmax.f32 %v4479, 0.0
        %v4483 = vmax.f32 %v4480, 0.0
        %v4484 = vsub.f32 %v4165, %v4445
        %v4485 = vsub.f32 %v4167, %v4445
        %v4486 = vsub.f32 %v4408, %v4445
        %v4487 = vsub.f32 %v4169, %v4446
        %v4488 = vsub.f32 %v4171, %v4446
        %v4489 = vsub.f32 %v4411, %v4446
        %v4490 = vsub.f32 %v4175, %v4447
        %v4491 = vsub.f32 %v4177, %v4447
        %v4492 = vsub.f32 %v4416, %v4447
        %v4493 = vadd.f32 %v4481, 1e-05
        %v4494 = vadd.f32 %v4482, 1e-05
        %v4495 = vadd.f32 %v4483, 1e-05
        %v4496 = vrsqrt.pop %v4493
        %v4497 = vrsqrt.pop %v4494
        %v4498 = vrsqrt.pop %v4495
        %v4499 = vmul.f32 %v4484, %v4496
        %v4500 = vmul.f32 %v4485, %v4496
        %v4501 = vmul.f32 %v4486, %v4496
        %v4502 = vmul.f32 %v4487, %v4497
        %v4503 = vmul.f32 %v4488, %v4497
        %v4504 = vmul.f32 %v4489, %v4497
        %v4505 = vmul.f32 %v4490, %v4498
        %v4506 = vmul.f32 %v4491, %v4498
        %v4507 = vmul.f32 %v4492, %v4498
        %4508 = vset.pattern.permute.xlu0 2
        %4509 = vperm.xlu0 %4508, %v258
        %v4510 = vpop.permute.xlu0 %4509
        %4512 = vset.pattern.permute.xlu0 2
        %4513 = vperm.xlu0 %4512, %v259
        %v4514 = vpop.permute.xlu0 %4513
        %4516 = vset.pattern.permute.xlu0 2
        %4517 = vperm.xlu0 %4516, %v260
        %v4518 = vpop.permute.xlu0 %4517
        %v4520 = vmul.f32 %v4499, %v4510
        %v4521 = vmul.f32 %v4500, %v4510
        %v4522 = vmul.f32 %v4501, %v4510
        %v4523 = vmul.f32 %v4502, %v4514
        %v4524 = vmul.f32 %v4503, %v4514
        %v4525 = vmul.f32 %v4504, %v4514
        %v4526 = vmul.f32 %v4505, %v4518
        %v4527 = vmul.f32 %v4506, %v4518
        %v4528 = vmul.f32 %v4507, %v4518
        %4529 = vset.pattern.permute.xlu0 3
        %4530 = vperm.xlu0 %4529, %v258
        %v4531 = vpop.permute.xlu0 %4530
        %4533 = vset.pattern.permute.xlu0 3
        %4534 = vperm.xlu0 %4533, %v259
        %v4535 = vpop.permute.xlu0 %4534
        %4537 = vset.pattern.permute.xlu0 3
        %4538 = vperm.xlu0 %4537, %v260
        %v4539 = vpop.permute.xlu0 %4538
        %v4541 = vadd.f32 %v4520, %v4531
        %v4542 = vadd.f32 %v4521, %v4531
        %v4543 = vadd.f32 %v4522, %v4531
        %v4544 = vadd.f32 %v4523, %v4535
        %v4545 = vadd.f32 %v4524, %v4535
        %v4546 = vadd.f32 %v4525, %v4535
        %v4547 = vadd.f32 %v4526, %v4539
        %v4548 = vadd.f32 %v4527, %v4539
        %v4549 = vadd.f32 %v4528, %v4539
        %vm4550 = vcmp.ge.f32.partialorder %v4541, 0.0
        %vm4551 = vcmp.ge.f32.partialorder %v4542, 0.0
        %vm4552 = vcmp.ge.f32.partialorder %v4543, 0.0
        %vm4553 = vcmp.ge.f32.partialorder %v4544, 0.0
        %vm4554 = vcmp.ge.f32.partialorder %v4545, 0.0
        %vm4555 = vcmp.ge.f32.partialorder %v4546, 0.0
        %vm4556 = vcmp.ge.f32.partialorder %v4547, 0.0
        %vm4557 = vcmp.ge.f32.partialorder %v4548, 0.0
        %vm4558 = vcmp.ge.f32.partialorder %v4549, 0.0
        %v4559 = vmul.f32 %v4541, 0.2
        %v4560 = vmul.f32 %v4542, 0.2
        %v4561 = vmul.f32 %v4543, 0.2
        %v4562 = vmul.f32 %v4544, 0.2
        %v4563 = vmul.f32 %v4545, 0.2
        %v4564 = vmul.f32 %v4546, 0.2
        %v4565 = vmul.f32 %v4547, 0.2
        %v4566 = vmul.f32 %v4548, 0.2
        %v4567 = vmul.f32 %v4549, 0.2
        %v4568 = vsel %vm4550, %v4541, %v4559
        %v4569 = vsel %vm4551, %v4542, %v4560
        %v4570 = vsel %vm4552, %v4543, %v4561
        %v4571 = vsel %vm4553, %v4544, %v4562
        %v4572 = vsel %vm4554, %v4545, %v4563
        %v4573 = vsel %vm4555, %v4546, %v4564
        %v4574 = vsel %vm4556, %v4547, %v4565
        %v4575 = vsel %vm4557, %v4548, %v4566
        %v4576 = vsel %vm4558, %v4549, %v4567
        %4577 = vst [vmem:[%s255] sm:$0xff] %v4568
        %4578 = vst [vmem:[%s255 + $0x8] sm:$0xff] %v4569
        %4579 = vst.msk [vmem:[%s255 + $0x10] sm:$0xff] %vm1080, %v4570
        %4580 = vst [vmem:[%s255 + $0x18] sm:$0xff] %v4571
        %4581 = vst [vmem:[%s255 + $0x20] sm:$0xff] %v4572
        %4582 = vst.msk [vmem:[%s255 + $0x28] sm:$0xff] %vm1080, %v4573
        %4583 = vst [vmem:[%s255 + $0x30] sm:$0xff] %v4574
        %4584 = vst [vmem:[%s255 + $0x38] sm:$0xff] %v4575
        %4585 = vst.msk [vmem:[%s255 + $0x40] sm:$0xff] %vm1080, %v4576
        %s4586 = sand.u32 %s141, 1
        %s4587 = scalar_lea.sflag [#allocation4], %s4586
        %s4588 = sand.u32 %s141, 1
        %s4589 = smul.addr %s4588, 72
        %s4590 = scalar_lea.vmem [#allocation7], %s4589
        // Predicated region
        $region49: #{tpu_custom_call.1} parent=39 // pred_check
          %p4591 = pneg %p151
        $region50: #{tpu_custom_call.1} parent=39 // pred_check_branch
          %4593 = sbr.rel (%p4591) target = $region52
        $region51: #{tpu_custom_call.1} parent=39 // pred_region
          %s4595 = ssub.s32 1152, 1152
          %4596 = vsyncadd %s4587, %s4595
          %s4597 = smul.addr %s23, 9
          %s4598 = smul.addr %s4597, 128
          %s4599 = scalar_lea.hbm %s5, %s4598
          %s4600 = sshll.u32 %s4590, 4
          %s4601 = int_to_ptr.vmem [resolvable:$true] %s4600
          %4606 = dma.vmem_to_hbm [thread:$0]  %s4601, 1152, %s4599, %s4587, 384, 384, 24
        $region52: #{tpu_custom_call.1} parent=39 // pred_fallthru
          _
      $region40: #{tpu_custom_call.1} parent=5 // pred_fallthru
        _
      %p4607 = scmp.le.s32.totalorder 2, %s18
      // Predicated region
      $region53: #{tpu_custom_call.1} parent=5 // pred_check
        %p4608 = pneg %p4607
      $region54: #{tpu_custom_call.1} parent=5 // pred_check_branch
        %4610 = sbr.rel (%p4608) target = $region56
      $region55: #{tpu_custom_call.1} parent=5 // pred_region
        %s4611 = ssub.s32 %s18, 2
        // Predicated region
        $region57: #{tpu_custom_call.1} parent=55 // pred_check
          %p4612 = pneg %p157
        $region58: #{tpu_custom_call.1} parent=55 // pred_check_branch
          %4614 = sbr.rel (%p4612) target = $region60
        $region59: #{tpu_custom_call.1} parent=55 // pred_region
          %s4615 = sand.u32 %s142, 1
          %s4616 = scalar_lea.sflag [#allocation4], %s4615
          %s4617 = sand.u32 %s142, 1
          %s4618 = smul.addr %s4617, 72
          %s4619 = scalar_lea.vmem [#allocation7], %s4618
          %4620 = dma.done %s4616, 1152
        $region60: #{tpu_custom_call.1} parent=55 // pred_fallthru
          _
      $region56: #{tpu_custom_call.1} parent=5 // pred_fallthru
        _
    $region6: #{tpu_custom_call.1} parent=1 // loop_footer
      %s22 = sadd.s32 1, %s18
    $region7: #{tpu_custom_call.1} parent=1 // loop_footer_branch
      %17 = sbr.rel target = $region3
    $region8: #{tpu_custom_call.1} parent=1 // loop_exit
      _
    %4621 = vsyncpa [#allocation3], 1
    %s4622 = scalar_lea.sflag [#allocation3], 1
    %4623 = vsyncpa %s4622, 1
    %4624 = vsyncpa [#allocation6], 1
    %4625 = vsyncpa [#allocation4], 1
    %s4626 = scalar_lea.sflag [#allocation4], 1
    %4627 = vsyncpa %s4626, 1

</llo_original>
